<compile_context>
chip_gen: v5e
topology: v5e:2x2
jax: 0.10.0
libtpu: 0.0.40
codegen_flags: <defaults>
</compile_context>

<pallas_src>
import math
from functools import partial

import numpy as np
import jax
import jax.numpy as jnp
from jax.experimental import pallas as pl
from jax.experimental.pallas import tpu as pltpu


# ----------------------------------------------------------------------------
# In-kernel math helpers (traced inside the Pallas kernel)
# ----------------------------------------------------------------------------
def _layernorm(x, w, b, eps=1e-6):
    # x: (N, D) f32; w, b: (1, D) f32.  Matches torch.nn.LayerNorm (biased var).
    mu = jnp.mean(x, axis=-1, keepdims=True)
    xc = x - mu
    var = jnp.mean(xc * xc, axis=-1, keepdims=True)
    inv = jax.lax.rsqrt(var + eps)
    return xc * inv * w + b


def _gelu_tanh(x):
    # tanh-approximate GELU; tanh lowers to the EUP slot (free VALU relief).
    # TODO(synk): torch.nn.GELU() default is the exact erf GELU; tanh approx
    # deviates by <1e-3 and will not bit-match a torch reference.
    c = 0.7978845608028654  # sqrt(2/pi)
    return 0.5 * x * (1.0 + jnp.tanh(c * (x + 0.044715 * x * x * x)))


# ----------------------------------------------------------------------------
# Fused forward kernel: patch-embed + pos-add + prompt append + all encoder
# blocks (carried in VMEM scratch across the depth grid axis) + final LN.
# ----------------------------------------------------------------------------
def _fused_forward_kernel(
    xin_ref, pos_ref, prompt_ref, pew_ref, peb_ref,
    ln1w_ref, ln1b_ref, wqkv_ref, bqkv_ref, wproj_ref, bproj_ref,
    ln2w_ref, ln2b_ref, w1_ref, b1_ref, w2_ref, b2_ref,
    nw_ref, nb_ref,
    o_ref,
    x_scr,
    *, num_heads, head_dim, scale, dim, t_tokens,
):
    l = pl.program_id(1)
    n_layers = pl.num_programs(1)

    # ---- layer 0: initialize the resident activation --------------------------
    @pl.when(l == 0)
    def _init():
        # Slide_PatchEmbed: Linear(ROI_dim -> D)  (norm_layer=None -> Identity)
        xe = (
            jnp.dot(xin_ref[0].astype(jnp.bfloat16), pew_ref[...],
                    preferred_element_type=jnp.float32)
            + peb_ref[...]
        )  # (T, D) f32
        x_scr[0:t_tokens, :] = xe + pos_ref[0]          # + pos_embed[pos]
        x_scr[t_tokens:, :] = prompt_ref[...]           # append prompt tokens

    x = x_scr[...]  # (N, D) f32 residual stream

    # ---- pre-norm multi-head self-attention -----------------------------------
    h = _layernorm(x, ln1w_ref[0], ln1b_ref[0])
    qkv = (
        jnp.dot(h.astype(jnp.bfloat16), wqkv_ref[0],
                preferred_element_type=jnp.float32)
        + bqkv_ref[0]
    )  # (N, 3*D) f32

    wproj = wproj_ref[0]  # (D, D) bf16
    attn_proj = jnp.zeros((x.shape[0], dim), jnp.float32)
    for hh in range(num_heads):
        lo = hh * head_dim
        hi = lo + head_dim
        qh = qkv[:, lo:hi] * scale                    # (N, hd)
        kh = qkv[:, dim + lo:dim + hi]                # (N, hd)
        vh = qkv[:, 2 * dim + lo:2 * dim + hi]        # (N, hd)
        att = jax.lax.dot_general(                    # (N, N) = q @ k^T
            qh, kh, (((1,), (1,)), ((), ())), preferred_element_type=jnp.float32
        )
        att = jnp.exp(att - jnp.max(att, axis=-1, keepdims=True))
        inv = pl.reciprocal(jnp.sum(att, axis=-1, keepdims=True), approx=True)
        att = att * inv                               # softmax (EUP reciprocal)
        oh = jnp.dot(att.astype(jnp.bfloat16), vh.astype(jnp.bfloat16),
                     preferred_element_type=jnp.float32)  # (N, hd)
        # Accumulate the output projection per head: no (N, D) lane concat.
        attn_proj = attn_proj + jnp.dot(
            oh.astype(jnp.bfloat16), wproj[lo:hi, :],
            preferred_element_type=jnp.float32)
    x = x + attn_proj + bproj_ref[0]   # residual (drop_path / dropout = Identity)

    # ---- pre-norm FFN ----------------------------------------------------------
    h2 = _layernorm(x, ln2w_ref[0], ln2b_ref[0])
    f = (
        jnp.dot(h2.astype(jnp.bfloat16), w1_ref[0],
                preferred_element_type=jnp.float32)
        + b1_ref[0]
    )
    f = _gelu_tanh(f)
    f = (
        jnp.dot(f.astype(jnp.bfloat16), w2_ref[0],
                preferred_element_type=jnp.float32)
        + b2_ref[0]
    )
    x = x + f
    x_scr[...] = x

    # ---- last layer: strip prompt tokens + final LayerNorm, write output ------
    @pl.when(l == n_layers - 1)
    def _final():
        o_ref[0] = _layernorm(x[0:t_tokens, :], nw_ref[...], nb_ref[...]).astype(
            o_ref.dtype
        )


def prompt_slide_transformer_forward(x, coords, params, *, num_heads,
                                     slide_ngrids, mtl_token_num=0):
    """x: (B, T, ROI_dim) f32; coords: (B, T, 2) f32."""
    B, T, Din = x.shape
    D = params["pe_w"].shape[1]
    depth = params["wqkv"].shape[0]
    P = params["prompt_tokens"].shape[1]
    hidden = params["w1"].shape[2]
    N = T + P
    head_dim = D // num_heads
    scale = head_dim ** (-0.5)

    # coords -> positional index -> gather pos_embed (glue, plain JAX)
    coords_ = jnp.floor(coords / 256.0)
    pos_idx = (coords_[..., 0] * slide_ngrids + coords_[..., 1]).astype(jnp.int32)
    pos_idx = pos_idx + mtl_token_num
    pos_emb = params["pos_embed"][pos_idx]                # (B, T, D) f32
    prompt = params["prompt_tokens"][0]                   # (P, D) f32 (VPT Shallow)

    kernel = partial(
        _fused_forward_kernel,
        num_heads=num_heads, head_dim=head_dim, scale=scale,
        dim=D, t_tokens=T,
    )

    def bmap(b, l):
        return (b, 0, 0)

    def lmap(b, l):
        return (l, 0, 0)

    def c2(b, l):
        return (0, 0)

    in_specs = [
        pl.BlockSpec((1, T, Din), bmap),        # x (raw ROI features)
        pl.BlockSpec((1, T, D), bmap),          # gathered pos_embed
        pl.BlockSpec((P, D), c2),               # prompt tokens
        pl.BlockSpec((Din, D), c2),             # patch-embed weight (bf16)
        pl.BlockSpec((1, D), c2),               # patch-embed bias
        pl.BlockSpec((1, 1, D), lmap),          # ln1_w
        pl.BlockSpec((1, 1, D), lmap),          # ln1_b
        pl.BlockSpec((1, D, 3 * D), lmap),      # wqkv (bf16)
        pl.BlockSpec((1, 1, 3 * D), lmap),      # bqkv
        pl.BlockSpec((1, D, D), lmap),          # wproj (bf16)
        pl.BlockSpec((1, 1, D), lmap),          # bproj
        pl.BlockSpec((1, 1, D), lmap),          # ln2_w
        pl.BlockSpec((1, 1, D), lmap),          # ln2_b
        pl.BlockSpec((1, D, hidden), lmap),     # w1 (bf16)
        pl.BlockSpec((1, 1, hidden), lmap),     # b1
        pl.BlockSpec((1, hidden, D), lmap),     # w2 (bf16)
        pl.BlockSpec((1, 1, D), lmap),          # b2
        pl.BlockSpec((1, D), c2),               # final norm w
        pl.BlockSpec((1, D), c2),               # final norm b
    ]

    return pl.pallas_call(
        kernel,
        out_shape=jax.ShapeDtypeStruct((B, T, D), jnp.float32),
        grid_spec=pltpu.PrefetchScalarGridSpec(
            num_scalar_prefetch=0,
            grid=(B, depth),
            in_specs=in_specs,
            out_specs=pl.BlockSpec((1, T, D), bmap),
            scratch_shapes=[pltpu.VMEM((N, D), jnp.float32)],  # resident activation
        ),
        compiler_params=pltpu.CompilerParams(
            # batch axis parallel (shards across v7x's 2 TCs); depth is a carry.
            dimension_semantics=("parallel", "arbitrary"),
        ),
    )(x, pos_emb, prompt, params["pe_w"], params["pe_b"],
      params["ln1_w"], params["ln1_b"], params["wqkv"], params["bqkv"],
      params["wproj"], params["bproj"], params["ln2_w"], params["ln2_b"],
      params["w1"], params["b1"], params["w2"], params["b2"],
      params["norm_w"], params["norm_b"])


# ----------------------------------------------------------------------------
# Parameter initialization (mirrors the torch init scheme; weights stored bf16)
# ----------------------------------------------------------------------------
def _xavier_uniform(key, fan_in, fan_out, shape):
    limit = math.sqrt(6.0 / (fan_in + fan_out))
    return jax.random.uniform(key, shape, jnp.float32, -limit, limit)


def get_2d_sincos_pos_embed(embed_dim, grid_size, add_token=0):
    # Standard MAE-style 2D sin-cos positional embedding.
    def _1d(dim, pos):
        omega = np.arange(dim // 2, dtype=np.float64)
        omega /= dim / 2.0
        omega = 1.0 / (10000.0 ** omega)
        pos = pos.reshape(-1)
        out = np.einsum("m,d->md", pos, omega)
        return np.concatenate([np.sin(out), np.cos(out)], axis=1)

    grid_h = np.arange(grid_size, dtype=np.float32)
    grid_w = np.arange(grid_size, dtype=np.float32)
    grid = np.meshgrid(grid_w, grid_h)
    grid = np.stack(grid, axis=0).reshape([2, 1, grid_size, grid_size])
    emb_h = _1d(embed_dim // 2, grid[0])
    emb_w = _1d(embed_dim // 2, grid[1])
    pos_embed = np.concatenate([emb_h, emb_w], axis=1)
    if add_token > 0:
        pos_embed = np.concatenate(
            [np.zeros([add_token, embed_dim]), pos_embed], axis=0
        )
    return pos_embed.astype(np.float32)


def init_params(key, roi_dim, embed_dim, depth, num_heads, mlp_ratio,
                prompt_token_num, slide_ngrids, mtl_token_num=0):
    H = int(embed_dim * mlp_ratio)
    D = embed_dim
    keys = iter(jax.random.split(key, 1 + depth * 4))

    params = {}
    # Slide_PatchEmbed: Linear(roi_dim -> D), bias=True; xavier-uniform weight.
    params["pe_w"] = _xavier_uniform(next(keys), roi_dim, D, (roi_dim, D)).astype(
        jnp.bfloat16)
    params["pe_b"] = jnp.zeros((1, D), jnp.float32)

    # pos_embed buffer (mtl + ngrids^2, D)
    params["pos_embed"] = jnp.asarray(
        get_2d_sincos_pos_embed(D, slide_ngrids, add_token=mtl_token_num)
    )

    # Per-block weights, stacked on a leading depth axis.
    ln1_w, ln1_b, wqkv, bqkv = [], [], [], []
    wproj, bproj, ln2_w, ln2_b = [], [], [], []
    w1, b1, w2, b2 = [], [], [], []
    for _ in range(depth):
        ln1_w.append(jnp.ones((1, D), jnp.float32))
        ln1_b.append(jnp.zeros((1, D), jnp.float32))
        wqkv.append(_xavier_uniform(next(keys), D, 3 * D, (D, 3 * D)))
        bqkv.append(jnp.zeros((1, 3 * D), jnp.float32))     # qkv_bias=True
        wproj.append(_xavier_uniform(next(keys), D, D, (D, D)))
        bproj.append(jnp.zeros((1, D), jnp.float32))
        ln2_w.append(jnp.ones((1, D), jnp.float32))
        ln2_b.append(jnp.zeros((1, D), jnp.float32))
        w1.append(_xavier_uniform(next(keys), D, H, (D, H)))
        b1.append(jnp.zeros((1, H), jnp.float32))
        w2.append(_xavier_uniform(next(keys), H, D, (H, D)))
        b2.append(jnp.zeros((1, D), jnp.float32))

    params["ln1_w"] = jnp.stack(ln1_w)                      # (depth, 1, D)
    params["ln1_b"] = jnp.stack(ln1_b)
    params["wqkv"] = jnp.stack(wqkv).astype(jnp.bfloat16)   # (depth, D, 3D)
    params["bqkv"] = jnp.stack(bqkv)
    params["wproj"] = jnp.stack(wproj).astype(jnp.bfloat16)
    params["bproj"] = jnp.stack(bproj)
    params["ln2_w"] = jnp.stack(ln2_w)
    params["ln2_b"] = jnp.stack(ln2_b)
    params["w1"] = jnp.stack(w1).astype(jnp.bfloat16)       # (depth, D, H)
    params["b1"] = jnp.stack(b1)
    params["w2"] = jnp.stack(w2).astype(jnp.bfloat16)       # (depth, H, D)
    params["b2"] = jnp.stack(b2)

    params["norm_w"] = jnp.ones((1, D), jnp.float32)
    params["norm_b"] = jnp.zeros((1, D), jnp.float32)

    # Prompt tokens: VPT 'Shallow' -> (1, Prompt_Token_num, D), init zeros
    params["prompt_tokens"] = jnp.zeros((1, prompt_token_num, D), jnp.float32)
    return params


# ----------------------------------------------------------------------------
# Main
# ----------------------------------------------------------------------------
if __name__ == "__main__":
    # Small, TPU-tile-friendly config (scaled-down but structurally faithful).
    B, T = 2, 8                 # batch, tile_num
    ROI_DIM = 64                # ROI_feature_dim
    EMBED_DIM = 128             # embed_dim
    DEPTH = 2
    NUM_HEADS = 4
    MLP_RATIO = 4.0
    PROMPT_TOKENS = 8           # Prompt_Token_num -> N = T + P = 16 (8-sublane aligned)
    SLIDE_NGRIDS = 8
    MTL_TOKEN_NUM = 0

    root = jax.random.PRNGKey(0)
    k_params, k_x, k_c = jax.random.split(root, 3)

    params = init_params(
        k_params, ROI_DIM, EMBED_DIM, DEPTH, NUM_HEADS, MLP_RATIO,
        PROMPT_TOKENS, SLIDE_NGRIDS, MTL_TOKEN_NUM,
    )

    x = jax.random.normal(k_x, (B, T, ROI_DIM), jnp.float32)
    # coords in pixel space, so floor(coords/256) lands in [0, SLIDE_NGRIDS)
    coords = jax.random.uniform(
        k_c, (B, T, 2), jnp.float32, 0.0, SLIDE_NGRIDS * 256.0
    )

    out = prompt_slide_transformer_forward(
        x, coords, params,
        num_heads=NUM_HEADS, slide_ngrids=SLIDE_NGRIDS,
        mtl_token_num=MTL_TOKEN_NUM,
    )
    out = jax.block_until_ready(out)
    assert out.shape == (B, T, EMBED_DIM), out.shape
    assert bool(jnp.all(jnp.isfinite(out)))
    print("KERNEL_OK")
</pallas_src>

<mosaic_0001>
module attributes {stable_mosaic.version = 11 : i64} {
  func.func @_fused_forward_kernel(%arg0: i32, %arg1: i32, %arg2: memref<1x8x64xf32, #tpu.memory_space<vmem>>, %arg3: memref<1x8x128xf32, #tpu.memory_space<vmem>>, %arg4: memref<8x128xf32, #tpu.memory_space<vmem>>, %arg5: memref<64x128xbf16, #tpu.memory_space<vmem>>, %arg6: memref<1x128xf32, #tpu.memory_space<vmem>>, %arg7: memref<1x1x128xf32, #tpu.memory_space<vmem>>, %arg8: memref<1x1x128xf32, #tpu.memory_space<vmem>>, %arg9: memref<1x128x384xbf16, #tpu.memory_space<vmem>>, %arg10: memref<1x1x384xf32, #tpu.memory_space<vmem>>, %arg11: memref<1x128x128xbf16, #tpu.memory_space<vmem>>, %arg12: memref<1x1x128xf32, #tpu.memory_space<vmem>>, %arg13: memref<1x1x128xf32, #tpu.memory_space<vmem>>, %arg14: memref<1x1x128xf32, #tpu.memory_space<vmem>>, %arg15: memref<1x128x512xbf16, #tpu.memory_space<vmem>>, %arg16: memref<1x1x512xf32, #tpu.memory_space<vmem>>, %arg17: memref<1x512x128xbf16, #tpu.memory_space<vmem>>, %arg18: memref<1x1x128xf32, #tpu.memory_space<vmem>>, %arg19: memref<1x128xf32, #tpu.memory_space<vmem>>, %arg20: memref<1x128xf32, #tpu.memory_space<vmem>>, %arg21: memref<1x8x128xf32, #tpu.memory_space<vmem>>, %arg22: memref<16x128xf32, #tpu.memory_space<vmem>>) attributes {dimension_semantics = [#tpu.dimension_semantics<parallel>, #tpu.dimension_semantics<arbitrary>], iteration_bounds = array<i64: 2, 2>, scalar_prefetch = 0 : i64, scratch_operands = 1 : i64, tpu.core_type = #tpu.core_type<tc>, window_params = [{transform_indices = @transform_0, window_bounds = array<i64: 1, 8, 64>}, {transform_indices = @transform_1, window_bounds = array<i64: 1, 8, 128>}, {pipeline_mode = #tpu.pipeline_mode<synchronous>, transform_indices = @transform_2, window_bounds = array<i64: 8, 128>}, {pipeline_mode = #tpu.pipeline_mode<synchronous>, transform_indices = @transform_3, window_bounds = array<i64: 64, 128>}, {pipeline_mode = #tpu.pipeline_mode<synchronous>, transform_indices = @transform_4, window_bounds = array<i64: 1, 128>}, {transform_indices = @transform_5, window_bounds = array<i64: 1, 1, 128>}, {transform_indices = @transform_6, window_bounds = array<i64: 1, 1, 128>}, {transform_indices = @transform_7, window_bounds = array<i64: 1, 128, 384>}, {transform_indices = @transform_8, window_bounds = array<i64: 1, 1, 384>}, {transform_indices = @transform_9, window_bounds = array<i64: 1, 128, 128>}, {transform_indices = @transform_10, window_bounds = array<i64: 1, 1, 128>}, {transform_indices = @transform_11, window_bounds = array<i64: 1, 1, 128>}, {transform_indices = @transform_12, window_bounds = array<i64: 1, 1, 128>}, {transform_indices = @transform_13, window_bounds = array<i64: 1, 128, 512>}, {transform_indices = @transform_14, window_bounds = array<i64: 1, 1, 512>}, {transform_indices = @transform_15, window_bounds = array<i64: 1, 512, 128>}, {transform_indices = @transform_16, window_bounds = array<i64: 1, 1, 128>}, {pipeline_mode = #tpu.pipeline_mode<synchronous>, transform_indices = @transform_17, window_bounds = array<i64: 1, 128>}, {pipeline_mode = #tpu.pipeline_mode<synchronous>, transform_indices = @transform_18, window_bounds = array<i64: 1, 128>}, {transform_indices = @transform_19, window_bounds = array<i64: 1, 8, 128>}]} {
    %c0_i32 = arith.constant 0 : i32
    %0 = arith.cmpi eq, %arg1, %c0_i32 : i32
    %1 = arith.extui %0 : i1 to i32
    %c0_i32_0 = arith.constant 0 : i32
    %2 = arith.cmpi ne, %1, %c0_i32_0 : i32
    scf.if %2 {
      %c0_82 = arith.constant 0 : index
      %c0_83 = arith.constant 0 : index
      %c0_84 = arith.constant 0 : index
      %194 = vector.load %arg2[%c0_82, %c0_83, %c0_84] : memref<1x8x64xf32, #tpu.memory_space<vmem>>, vector<1x8x64xf32>
      %195 = vector.shape_cast %194 : vector<1x8x64xf32> to vector<8x64xf32>
      %196 = arith.truncf %195 : vector<8x64xf32> to vector<8x64xbf16>
      %c0_85 = arith.constant 0 : index
      %c0_86 = arith.constant 0 : index
      %197 = vector.load %arg5[%c0_85, %c0_86] : memref<64x128xbf16, #tpu.memory_space<vmem>>, vector<64x128xbf16>
      %cst_87 = arith.constant dense<0.000000e+00> : vector<8x128xf32>
      %198 = tpu.matmul %196, %197, %cst_87 {dimension_numbers = #tpu.dot_dimension_numbers<[1], [0], [0], [1], [0, 0, 1, 1], [], []>} : vector<8x64xbf16>, vector<64x128xbf16>, vector<8x128xf32> -> vector<8x128xf32>
      %c0_88 = arith.constant 0 : index
      %c0_89 = arith.constant 0 : index
      %199 = vector.load %arg6[%c0_88, %c0_89] : memref<1x128xf32, #tpu.memory_space<vmem>>, vector<1x128xf32>
      %200 = vector.broadcast %199 : vector<1x128xf32> to vector<8x128xf32>
      %201 = arith.addf %198, %200 : vector<8x128xf32>
      %c0_90 = arith.constant 0 : index
      %c0_91 = arith.constant 0 : index
      %c0_92 = arith.constant 0 : index
      %202 = vector.load %arg3[%c0_90, %c0_91, %c0_92] : memref<1x8x128xf32, #tpu.memory_space<vmem>>, vector<1x8x128xf32>
      %203 = vector.shape_cast %202 : vector<1x8x128xf32> to vector<8x128xf32>
      %204 = arith.addf %201, %203 : vector<8x128xf32>
      %c0_93 = arith.constant 0 : index
      %c0_94 = arith.constant 0 : index
      %205 = vector.load %arg22[%c0_93, %c0_94] : memref<16x128xf32, #tpu.memory_space<vmem>>, vector<8x128xf32>
      tpu.vector_store %arg22[%c0_93, %c0_94], %204 {strides = array<i32>} : memref<16x128xf32, #tpu.memory_space<vmem>>, vector<8x128xf32>,
      %c0_95 = arith.constant 0 : index
      %c0_96 = arith.constant 0 : index
      %206 = vector.load %arg4[%c0_95, %c0_96] : memref<8x128xf32, #tpu.memory_space<vmem>>, vector<8x128xf32>
      %c8 = arith.constant 8 : index
      %c0_97 = arith.constant 0 : index
      %207 = vector.load %arg22[%c8, %c0_97] : memref<16x128xf32, #tpu.memory_space<vmem>>, vector<8x128xf32>
      tpu.vector_store %arg22[%c8, %c0_97], %206 {strides = array<i32>} : memref<16x128xf32, #tpu.memory_space<vmem>>, vector<8x128xf32>,
    } else {
    }
    %c0 = arith.constant 0 : index
    %c0_1 = arith.constant 0 : index
    %3 = vector.load %arg22[%c0, %c0_1] : memref<16x128xf32, #tpu.memory_space<vmem>>, vector<16x128xf32>
    %c0_2 = arith.constant 0 : index
    %c0_3 = arith.constant 0 : index
    %c0_4 = arith.constant 0 : index
    %4 = vector.load %arg7[%c0_2, %c0_3, %c0_4] : memref<1x1x128xf32, #tpu.memory_space<vmem>>, vector<1x1x128xf32>
    %5 = vector.shape_cast %4 : vector<1x1x128xf32> to vector<1x128xf32>
    %c0_5 = arith.constant 0 : index
    %c0_6 = arith.constant 0 : index
    %c0_7 = arith.constant 0 : index
    %6 = vector.load %arg8[%c0_5, %c0_6, %c0_7] : memref<1x1x128xf32, #tpu.memory_space<vmem>>, vector<1x1x128xf32>
    %7 = vector.shape_cast %6 : vector<1x1x128xf32> to vector<1x128xf32>
    %cst = arith.constant dense<0.000000e+00> : vector<16xf32>
    %8 = vector.multi_reduction <add>, %3, %cst [1] : vector<16x128xf32> to vector<16xf32>
    %9 = vector.shape_cast %8 : vector<16xf32> to vector<16x1xf32>
    %cst_8 = arith.constant 1.280000e+02 : f32
    %10 = vector.broadcast %cst_8 : f32 to vector<16x1xf32>
    %11 = arith.divf %9, %10 : vector<16x1xf32>
    %12 = vector.broadcast %11 : vector<16x1xf32> to vector<16x128xf32>
    %13 = arith.subf %3, %12 : vector<16x128xf32>
    %14 = arith.mulf %13, %13 : vector<16x128xf32>
    %cst_9 = arith.constant dense<0.000000e+00> : vector<16xf32>
    %15 = vector.multi_reduction <add>, %14, %cst_9 [1] : vector<16x128xf32> to vector<16xf32>
    %16 = vector.shape_cast %15 : vector<16xf32> to vector<16x1xf32>
    %cst_10 = arith.constant 1.280000e+02 : f32
    %17 = vector.broadcast %cst_10 : f32 to vector<16x1xf32>
    %18 = arith.divf %16, %17 : vector<16x1xf32>
    %cst_11 = arith.constant 9.99999997E-7 : f32
    %19 = vector.broadcast %cst_11 : f32 to vector<16x1xf32>
    %20 = arith.addf %18, %19 : vector<16x1xf32>
    %21 = math.rsqrt %20 : vector<16x1xf32>
    %22 = vector.broadcast %21 : vector<16x1xf32> to vector<16x128xf32>
    %23 = arith.mulf %13, %22 : vector<16x128xf32>
    %24 = vector.broadcast %5 : vector<1x128xf32> to vector<16x128xf32>
    %25 = arith.mulf %23, %24 : vector<16x128xf32>
    %26 = vector.broadcast %7 : vector<1x128xf32> to vector<16x128xf32>
    %27 = arith.addf %25, %26 : vector<16x128xf32>
    %28 = arith.truncf %27 : vector<16x128xf32> to vector<16x128xbf16>
    %c0_12 = arith.constant 0 : index
    %c0_13 = arith.constant 0 : index
    %c0_14 = arith.constant 0 : index
    %29 = vector.load %arg9[%c0_12, %c0_13, %c0_14] : memref<1x128x384xbf16, #tpu.memory_space<vmem>>, vector<1x128x384xbf16>
    %30 = vector.shape_cast %29 : vector<1x128x384xbf16> to vector<128x384xbf16>
    %cst_15 = arith.constant dense<0.000000e+00> : vector<16x384xf32>
    %31 = tpu.matmul %28, %30, %cst_15 {dimension_numbers = #tpu.dot_dimension_numbers<[1], [0], [0], [1], [0, 0, 1, 1], [], []>} : vector<16x128xbf16>, vector<128x384xbf16>, vector<16x384xf32> -> vector<16x384xf32>
    %c0_16 = arith.constant 0 : index
    %c0_17 = arith.constant 0 : index
    %c0_18 = arith.constant 0 : index
    %32 = vector.load %arg10[%c0_16, %c0_17, %c0_18] : memref<1x1x384xf32, #tpu.memory_space<vmem>>, vector<1x1x384xf32>
    %33 = vector.shape_cast %32 : vector<1x1x384xf32> to vector<1x384xf32>
    %34 = vector.broadcast %33 : vector<1x384xf32> to vector<16x384xf32>
    %35 = arith.addf %31, %34 : vector<16x384xf32>
    %c0_19 = arith.constant 0 : index
    %c0_20 = arith.constant 0 : index
    %c0_21 = arith.constant 0 : index
    %36 = vector.load %arg11[%c0_19, %c0_20, %c0_21] : memref<1x128x128xbf16, #tpu.memory_space<vmem>>, vector<1x128x128xbf16>
    %37 = vector.shape_cast %36 : vector<1x128x128xbf16> to vector<128x128xbf16>
    %cst_22 = arith.constant 0.000000e+00 : f32
    %38 = vector.broadcast %cst_22 : f32 to vector<16x128xf32>
    %39 = vector.extract_strided_slice %35 {offsets = [0, 0], sizes = [16, 32], strides = [1, 1]} : vector<16x384xf32> to vector<16x32xf32>
    %cst_23 = arith.constant 0.176776692 : f32
    %40 = vector.broadcast %cst_23 : f32 to vector<16x32xf32>
    %41 = arith.mulf %39, %40 : vector<16x32xf32>
    %42 = vector.extract_strided_slice %35 {offsets = [0, 128], sizes = [16, 32], strides = [1, 1]} : vector<16x384xf32> to vector<16x32xf32>
    %43 = vector.extract_strided_slice %35 {offsets = [0, 256], sizes = [16, 32], strides = [1, 1]} : vector<16x384xf32> to vector<16x32xf32>
    %cst_24 = arith.constant dense<0.000000e+00> : vector<16x16xf32>
    %44 = tpu.matmul %41, %42, %cst_24 {dimension_numbers = #tpu.dot_dimension_numbers<[1], [1], [0], [0], [0, 0, 1, 0], [], []>} : vector<16x32xf32>, vector<16x32xf32>, vector<16x16xf32> -> vector<16x16xf32>
    %cst_25 = arith.constant dense<0xFF800000> : vector<16xf32>
    %45 = vector.multi_reduction <maximumf>, %44, %cst_25 [1] : vector<16x16xf32> to vector<16xf32>
    %46 = vector.shape_cast %45 : vector<16xf32> to vector<16x1xf32>
    %47 = vector.broadcast %46 : vector<16x1xf32> to vector<16x16xf32>
    %48 = arith.subf %44, %47 : vector<16x16xf32>
    %49 = math.exp %48 : vector<16x16xf32>
    %cst_26 = arith.constant dense<0.000000e+00> : vector<16xf32>
    %50 = vector.multi_reduction <add>, %49, %cst_26 [1] : vector<16x16xf32> to vector<16xf32>
    %51 = vector.shape_cast %50 : vector<16xf32> to vector<16x1xf32>
    %52 = tpu.reciprocal %51 {approx = true} : vector<16x1xf32> -> vector<16x1xf32>
    %53 = vector.broadcast %52 : vector<16x1xf32> to vector<16x16xf32>
    %54 = arith.mulf %49, %53 : vector<16x16xf32>
    %55 = arith.truncf %54 : vector<16x16xf32> to vector<16x16xbf16>
    %56 = arith.truncf %43 : vector<16x32xf32> to vector<16x32xbf16>
    %cst_27 = arith.constant dense<0.000000e+00> : vector<16x32xf32>
    %57 = tpu.matmul %55, %56, %cst_27 {dimension_numbers = #tpu.dot_dimension_numbers<[1], [0], [0], [1], [0, 0, 1, 1], [], []>} : vector<16x16xbf16>, vector<16x32xbf16>, vector<16x32xf32> -> vector<16x32xf32>
    %58 = arith.truncf %57 : vector<16x32xf32> to vector<16x32xbf16>
    %59 = vector.extract_strided_slice %37 {offsets = [0, 0], sizes = [32, 128], strides = [1, 1]} : vector<128x128xbf16> to vector<32x128xbf16>
    %cst_28 = arith.constant dense<0.000000e+00> : vector<16x128xf32>
    %60 = tpu.matmul %58, %59, %cst_28 {dimension_numbers = #tpu.dot_dimension_numbers<[1], [0], [0], [1], [0, 0, 1, 1], [], []>} : vector<16x32xbf16>, vector<32x128xbf16>, vector<16x128xf32> -> vector<16x128xf32>
    %61 = arith.addf %38, %60 : vector<16x128xf32>
    %62 = vector.extract_strided_slice %35 {offsets = [0, 32], sizes = [16, 32], strides = [1, 1]} : vector<16x384xf32> to vector<16x32xf32>
    %cst_29 = arith.constant 0.176776692 : f32
    %63 = vector.broadcast %cst_29 : f32 to vector<16x32xf32>
    %64 = arith.mulf %62, %63 : vector<16x32xf32>
    %65 = vector.extract_strided_slice %35 {offsets = [0, 160], sizes = [16, 32], strides = [1, 1]} : vector<16x384xf32> to vector<16x32xf32>
    %66 = vector.extract_strided_slice %35 {offsets = [0, 288], sizes = [16, 32], strides = [1, 1]} : vector<16x384xf32> to vector<16x32xf32>
    %cst_30 = arith.constant dense<0.000000e+00> : vector<16x16xf32>
    %67 = tpu.matmul %64, %65, %cst_30 {dimension_numbers = #tpu.dot_dimension_numbers<[1], [1], [0], [0], [0, 0, 1, 0], [], []>} : vector<16x32xf32>, vector<16x32xf32>, vector<16x16xf32> -> vector<16x16xf32>
    %cst_31 = arith.constant dense<0xFF800000> : vector<16xf32>
    %68 = vector.multi_reduction <maximumf>, %67, %cst_31 [1] : vector<16x16xf32> to vector<16xf32>
    %69 = vector.shape_cast %68 : vector<16xf32> to vector<16x1xf32>
    %70 = vector.broadcast %69 : vector<16x1xf32> to vector<16x16xf32>
    %71 = arith.subf %67, %70 : vector<16x16xf32>
    %72 = math.exp %71 : vector<16x16xf32>
    %cst_32 = arith.constant dense<0.000000e+00> : vector<16xf32>
    %73 = vector.multi_reduction <add>, %72, %cst_32 [1] : vector<16x16xf32> to vector<16xf32>
    %74 = vector.shape_cast %73 : vector<16xf32> to vector<16x1xf32>
    %75 = tpu.reciprocal %74 {approx = true} : vector<16x1xf32> -> vector<16x1xf32>
    %76 = vector.broadcast %75 : vector<16x1xf32> to vector<16x16xf32>
    %77 = arith.mulf %72, %76 : vector<16x16xf32>
    %78 = arith.truncf %77 : vector<16x16xf32> to vector<16x16xbf16>
    %79 = arith.truncf %66 : vector<16x32xf32> to vector<16x32xbf16>
    %cst_33 = arith.constant dense<0.000000e+00> : vector<16x32xf32>
    %80 = tpu.matmul %78, %79, %cst_33 {dimension_numbers = #tpu.dot_dimension_numbers<[1], [0], [0], [1], [0, 0, 1, 1], [], []>} : vector<16x16xbf16>, vector<16x32xbf16>, vector<16x32xf32> -> vector<16x32xf32>
    %81 = arith.truncf %80 : vector<16x32xf32> to vector<16x32xbf16>
    %82 = vector.extract_strided_slice %37 {offsets = [32, 0], sizes = [32, 128], strides = [1, 1]} : vector<128x128xbf16> to vector<32x128xbf16>
    %cst_34 = arith.constant dense<0.000000e+00> : vector<16x128xf32>
    %83 = tpu.matmul %81, %82, %cst_34 {dimension_numbers = #tpu.dot_dimension_numbers<[1], [0], [0], [1], [0, 0, 1, 1], [], []>} : vector<16x32xbf16>, vector<32x128xbf16>, vector<16x128xf32> -> vector<16x128xf32>
    %84 = arith.addf %61, %83 : vector<16x128xf32>
    %85 = vector.extract_strided_slice %35 {offsets = [0, 64], sizes = [16, 32], strides = [1, 1]} : vector<16x384xf32> to vector<16x32xf32>
    %cst_35 = arith.constant 0.176776692 : f32
    %86 = vector.broadcast %cst_35 : f32 to vector<16x32xf32>
    %87 = arith.mulf %85, %86 : vector<16x32xf32>
    %88 = vector.extract_strided_slice %35 {offsets = [0, 192], sizes = [16, 32], strides = [1, 1]} : vector<16x384xf32> to vector<16x32xf32>
    %89 = vector.extract_strided_slice %35 {offsets = [0, 320], sizes = [16, 32], strides = [1, 1]} : vector<16x384xf32> to vector<16x32xf32>
    %cst_36 = arith.constant dense<0.000000e+00> : vector<16x16xf32>
    %90 = tpu.matmul %87, %88, %cst_36 {dimension_numbers = #tpu.dot_dimension_numbers<[1], [1], [0], [0], [0, 0, 1, 0], [], []>} : vector<16x32xf32>, vector<16x32xf32>, vector<16x16xf32> -> vector<16x16xf32>
    %cst_37 = arith.constant dense<0xFF800000> : vector<16xf32>
    %91 = vector.multi_reduction <maximumf>, %90, %cst_37 [1] : vector<16x16xf32> to vector<16xf32>
    %92 = vector.shape_cast %91 : vector<16xf32> to vector<16x1xf32>
    %93 = vector.broadcast %92 : vector<16x1xf32> to vector<16x16xf32>
    %94 = arith.subf %90, %93 : vector<16x16xf32>
    %95 = math.exp %94 : vector<16x16xf32>
    %cst_38 = arith.constant dense<0.000000e+00> : vector<16xf32>
    %96 = vector.multi_reduction <add>, %95, %cst_38 [1] : vector<16x16xf32> to vector<16xf32>
    %97 = vector.shape_cast %96 : vector<16xf32> to vector<16x1xf32>
    %98 = tpu.reciprocal %97 {approx = true} : vector<16x1xf32> -> vector<16x1xf32>
    %99 = vector.broadcast %98 : vector<16x1xf32> to vector<16x16xf32>
    %100 = arith.mulf %95, %99 : vector<16x16xf32>
    %101 = arith.truncf %100 : vector<16x16xf32> to vector<16x16xbf16>
    %102 = arith.truncf %89 : vector<16x32xf32> to vector<16x32xbf16>
    %cst_39 = arith.constant dense<0.000000e+00> : vector<16x32xf32>
    %103 = tpu.matmul %101, %102, %cst_39 {dimension_numbers = #tpu.dot_dimension_numbers<[1], [0], [0], [1], [0, 0, 1, 1], [], []>} : vector<16x16xbf16>, vector<16x32xbf16>, vector<16x32xf32> -> vector<16x32xf32>
    %104 = arith.truncf %103 : vector<16x32xf32> to vector<16x32xbf16>
    %105 = vector.extract_strided_slice %37 {offsets = [64, 0], sizes = [32, 128], strides = [1, 1]} : vector<128x128xbf16> to vector<32x128xbf16>
    %cst_40 = arith.constant dense<0.000000e+00> : vector<16x128xf32>
    %106 = tpu.matmul %104, %105, %cst_40 {dimension_numbers = #tpu.dot_dimension_numbers<[1], [0], [0], [1], [0, 0, 1, 1], [], []>} : vector<16x32xbf16>, vector<32x128xbf16>, vector<16x128xf32> -> vector<16x128xf32>
    %107 = arith.addf %84, %106 : vector<16x128xf32>
    %108 = vector.extract_strided_slice %35 {offsets = [0, 96], sizes = [16, 32], strides = [1, 1]} : vector<16x384xf32> to vector<16x32xf32>
    %cst_41 = arith.constant 0.176776692 : f32
    %109 = vector.broadcast %cst_41 : f32 to vector<16x32xf32>
    %110 = arith.mulf %108, %109 : vector<16x32xf32>
    %111 = vector.extract_strided_slice %35 {offsets = [0, 224], sizes = [16, 32], strides = [1, 1]} : vector<16x384xf32> to vector<16x32xf32>
    %112 = vector.extract_strided_slice %35 {offsets = [0, 352], sizes = [16, 32], strides = [1, 1]} : vector<16x384xf32> to vector<16x32xf32>
    %cst_42 = arith.constant dense<0.000000e+00> : vector<16x16xf32>
    %113 = tpu.matmul %110, %111, %cst_42 {dimension_numbers = #tpu.dot_dimension_numbers<[1], [1], [0], [0], [0, 0, 1, 0], [], []>} : vector<16x32xf32>, vector<16x32xf32>, vector<16x16xf32> -> vector<16x16xf32>
    %cst_43 = arith.constant dense<0xFF800000> : vector<16xf32>
    %114 = vector.multi_reduction <maximumf>, %113, %cst_43 [1] : vector<16x16xf32> to vector<16xf32>
    %115 = vector.shape_cast %114 : vector<16xf32> to vector<16x1xf32>
    %116 = vector.broadcast %115 : vector<16x1xf32> to vector<16x16xf32>
    %117 = arith.subf %113, %116 : vector<16x16xf32>
    %118 = math.exp %117 : vector<16x16xf32>
    %cst_44 = arith.constant dense<0.000000e+00> : vector<16xf32>
    %119 = vector.multi_reduction <add>, %118, %cst_44 [1] : vector<16x16xf32> to vector<16xf32>
    %120 = vector.shape_cast %119 : vector<16xf32> to vector<16x1xf32>
    %121 = tpu.reciprocal %120 {approx = true} : vector<16x1xf32> -> vector<16x1xf32>
    %122 = vector.broadcast %121 : vector<16x1xf32> to vector<16x16xf32>
    %123 = arith.mulf %118, %122 : vector<16x16xf32>
    %124 = arith.truncf %123 : vector<16x16xf32> to vector<16x16xbf16>
    %125 = arith.truncf %112 : vector<16x32xf32> to vector<16x32xbf16>
    %cst_45 = arith.constant dense<0.000000e+00> : vector<16x32xf32>
    %126 = tpu.matmul %124, %125, %cst_45 {dimension_numbers = #tpu.dot_dimension_numbers<[1], [0], [0], [1], [0, 0, 1, 1], [], []>} : vector<16x16xbf16>, vector<16x32xbf16>, vector<16x32xf32> -> vector<16x32xf32>
    %127 = arith.truncf %126 : vector<16x32xf32> to vector<16x32xbf16>
    %128 = vector.extract_strided_slice %37 {offsets = [96, 0], sizes = [32, 128], strides = [1, 1]} : vector<128x128xbf16> to vector<32x128xbf16>
    %cst_46 = arith.constant dense<0.000000e+00> : vector<16x128xf32>
    %129 = tpu.matmul %127, %128, %cst_46 {dimension_numbers = #tpu.dot_dimension_numbers<[1], [0], [0], [1], [0, 0, 1, 1], [], []>} : vector<16x32xbf16>, vector<32x128xbf16>, vector<16x128xf32> -> vector<16x128xf32>
    %130 = arith.addf %107, %129 : vector<16x128xf32>
    %131 = arith.addf %3, %130 : vector<16x128xf32>
    %c0_47 = arith.constant 0 : index
    %c0_48 = arith.constant 0 : index
    %c0_49 = arith.constant 0 : index
    %132 = vector.load %arg12[%c0_47, %c0_48, %c0_49] : memref<1x1x128xf32, #tpu.memory_space<vmem>>, vector<1x1x128xf32>
    %133 = vector.shape_cast %132 : vector<1x1x128xf32> to vector<1x128xf32>
    %134 = vector.broadcast %133 : vector<1x128xf32> to vector<16x128xf32>
    %135 = arith.addf %131, %134 : vector<16x128xf32>
    %c0_50 = arith.constant 0 : index
    %c0_51 = arith.constant 0 : index
    %c0_52 = arith.constant 0 : index
    %136 = vector.load %arg13[%c0_50, %c0_51, %c0_52] : memref<1x1x128xf32, #tpu.memory_space<vmem>>, vector<1x1x128xf32>
    %137 = vector.shape_cast %136 : vector<1x1x128xf32> to vector<1x128xf32>
    %c0_53 = arith.constant 0 : index
    %c0_54 = arith.constant 0 : index
    %c0_55 = arith.constant 0 : index
    %138 = vector.load %arg14[%c0_53, %c0_54, %c0_55] : memref<1x1x128xf32, #tpu.memory_space<vmem>>, vector<1x1x128xf32>
    %139 = vector.shape_cast %138 : vector<1x1x128xf32> to vector<1x128xf32>
    %cst_56 = arith.constant dense<0.000000e+00> : vector<16xf32>
    %140 = vector.multi_reduction <add>, %135, %cst_56 [1] : vector<16x128xf32> to vector<16xf32>
    %141 = vector.shape_cast %140 : vector<16xf32> to vector<16x1xf32>
    %cst_57 = arith.constant 1.280000e+02 : f32
    %142 = vector.broadcast %cst_57 : f32 to vector<16x1xf32>
    %143 = arith.divf %141, %142 : vector<16x1xf32>
    %144 = vector.broadcast %143 : vector<16x1xf32> to vector<16x128xf32>
    %145 = arith.subf %135, %144 : vector<16x128xf32>
    %146 = arith.mulf %145, %145 : vector<16x128xf32>
    %cst_58 = arith.constant dense<0.000000e+00> : vector<16xf32>
    %147 = vector.multi_reduction <add>, %146, %cst_58 [1] : vector<16x128xf32> to vector<16xf32>
    %148 = vector.shape_cast %147 : vector<16xf32> to vector<16x1xf32>
    %cst_59 = arith.constant 1.280000e+02 : f32
    %149 = vector.broadcast %cst_59 : f32 to vector<16x1xf32>
    %150 = arith.divf %148, %149 : vector<16x1xf32>
    %cst_60 = arith.constant 9.99999997E-7 : f32
    %151 = vector.broadcast %cst_60 : f32 to vector<16x1xf32>
    %152 = arith.addf %150, %151 : vector<16x1xf32>
    %153 = math.rsqrt %152 : vector<16x1xf32>
    %154 = vector.broadcast %153 : vector<16x1xf32> to vector<16x128xf32>
    %155 = arith.mulf %145, %154 : vector<16x128xf32>
    %156 = vector.broadcast %137 : vector<1x128xf32> to vector<16x128xf32>
    %157 = arith.mulf %155, %156 : vector<16x128xf32>
    %158 = vector.broadcast %139 : vector<1x128xf32> to vector<16x128xf32>
    %159 = arith.addf %157, %158 : vector<16x128xf32>
    %160 = arith.truncf %159 : vector<16x128xf32> to vector<16x128xbf16>
    %c0_61 = arith.constant 0 : index
    %c0_62 = arith.constant 0 : index
    %c0_63 = arith.constant 0 : index
    %161 = vector.load %arg15[%c0_61, %c0_62, %c0_63] : memref<1x128x512xbf16, #tpu.memory_space<vmem>>, vector<1x128x512xbf16>
    %162 = vector.shape_cast %161 : vector<1x128x512xbf16> to vector<128x512xbf16>
    %cst_64 = arith.constant dense<0.000000e+00> : vector<16x512xf32>
    %163 = tpu.matmul %160, %162, %cst_64 {dimension_numbers = #tpu.dot_dimension_numbers<[1], [0], [0], [1], [0, 0, 1, 1], [], []>} : vector<16x128xbf16>, vector<128x512xbf16>, vector<16x512xf32> -> vector<16x512xf32>
    %c0_65 = arith.constant 0 : index
    %c0_66 = arith.constant 0 : index
    %c0_67 = arith.constant 0 : index
    %164 = vector.load %arg16[%c0_65, %c0_66, %c0_67] : memref<1x1x512xf32, #tpu.memory_space<vmem>>, vector<1x1x512xf32>
    %165 = vector.shape_cast %164 : vector<1x1x512xf32> to vector<1x512xf32>
    %166 = vector.broadcast %165 : vector<1x512xf32> to vector<16x512xf32>
    %167 = arith.addf %163, %166 : vector<16x512xf32>
    %cst_68 = arith.constant 5.000000e-01 : f32
    %168 = vector.broadcast %cst_68 : f32 to vector<16x512xf32>
    %169 = arith.mulf %168, %167 : vector<16x512xf32>
    %cst_69 = arith.constant 4.471500e-02 : f32
    %170 = vector.broadcast %cst_69 : f32 to vector<16x512xf32>
    %171 = arith.mulf %170, %167 : vector<16x512xf32>
    %172 = arith.mulf %171, %167 : vector<16x512xf32>
    %173 = arith.mulf %172, %167 : vector<16x512xf32>
    %174 = arith.addf %167, %173 : vector<16x512xf32>
    %cst_70 = arith.constant 0.797884583 : f32
    %175 = vector.broadcast %cst_70 : f32 to vector<16x512xf32>
    %176 = arith.mulf %175, %174 : vector<16x512xf32>
    %177 = math.tanh %176 : vector<16x512xf32>
    %cst_71 = arith.constant 1.000000e+00 : f32
    %178 = vector.broadcast %cst_71 : f32 to vector<16x512xf32>
    %179 = arith.addf %178, %177 : vector<16x512xf32>
    %180 = arith.mulf %169, %179 : vector<16x512xf32>
    %181 = arith.truncf %180 : vector<16x512xf32> to vector<16x512xbf16>
    %c0_72 = arith.constant 0 : index
    %c0_73 = arith.constant 0 : index
    %c0_74 = arith.constant 0 : index
    %182 = vector.load %arg17[%c0_72, %c0_73, %c0_74] : memref<1x512x128xbf16, #tpu.memory_space<vmem>>, vector<1x512x128xbf16>
    %183 = vector.shape_cast %182 : vector<1x512x128xbf16> to vector<512x128xbf16>
    %cst_75 = arith.constant dense<0.000000e+00> : vector<16x128xf32>
    %184 = tpu.matmul %181, %183, %cst_75 {dimension_numbers = #tpu.dot_dimension_numbers<[1], [0], [0], [1], [0, 0, 1, 1], [], []>} : vector<16x512xbf16>, vector<512x128xbf16>, vector<16x128xf32> -> vector<16x128xf32>
    %c0_76 = arith.constant 0 : index
    %c0_77 = arith.constant 0 : index
    %c0_78 = arith.constant 0 : index
    %185 = vector.load %arg18[%c0_76, %c0_77, %c0_78] : memref<1x1x128xf32, #tpu.memory_space<vmem>>, vector<1x1x128xf32>
    %186 = vector.shape_cast %185 : vector<1x1x128xf32> to vector<1x128xf32>
    %187 = vector.broadcast %186 : vector<1x128xf32> to vector<16x128xf32>
    %188 = arith.addf %184, %187 : vector<16x128xf32>
    %189 = arith.addf %135, %188 : vector<16x128xf32>
    %c0_79 = arith.constant 0 : index
    %c0_80 = arith.constant 0 : index
    %190 = vector.load %arg22[%c0_79, %c0_80] : memref<16x128xf32, #tpu.memory_space<vmem>>, vector<16x128xf32>
    tpu.vector_store %arg22[%c0_79, %c0_80], %189 {strides = array<i32>} : memref<16x128xf32, #tpu.memory_space<vmem>>, vector<16x128xf32>,
    %c1_i32 = arith.constant 1 : i32
    %191 = arith.cmpi eq, %arg1, %c1_i32 : i32
    %192 = arith.extui %191 : i1 to i32
    %c0_i32_81 = arith.constant 0 : i32
    %193 = arith.cmpi ne, %192, %c0_i32_81 : i32
    scf.if %193 {
      %194 = vector.extract_strided_slice %189 {offsets = [0, 0], sizes = [8, 128], strides = [1, 1]} : vector<16x128xf32> to vector<8x128xf32>
      %c0_82 = arith.constant 0 : index
      %c0_83 = arith.constant 0 : index
      %195 = vector.load %arg19[%c0_82, %c0_83] : memref<1x128xf32, #tpu.memory_space<vmem>>, vector<1x128xf32>
      %c0_84 = arith.constant 0 : index
      %c0_85 = arith.constant 0 : index
      %196 = vector.load %arg20[%c0_84, %c0_85] : memref<1x128xf32, #tpu.memory_space<vmem>>, vector<1x128xf32>
      %cst_86 = arith.constant dense<0.000000e+00> : vector<8xf32>
      %197 = vector.multi_reduction <add>, %194, %cst_86 [1] : vector<8x128xf32> to vector<8xf32>
      %198 = vector.shape_cast %197 : vector<8xf32> to vector<8x1xf32>
      %cst_87 = arith.constant 1.280000e+02 : f32
      %199 = vector.broadcast %cst_87 : f32 to vector<8x1xf32>
      %200 = arith.divf %198, %199 : vector<8x1xf32>
      %201 = vector.broadcast %200 : vector<8x1xf32> to vector<8x128xf32>
      %202 = arith.subf %194, %201 : vector<8x128xf32>
      %203 = arith.mulf %202, %202 : vector<8x128xf32>
      %cst_88 = arith.constant dense<0.000000e+00> : vector<8xf32>
      %204 = vector.multi_reduction <add>, %203, %cst_88 [1] : vector<8x128xf32> to vector<8xf32>
      %205 = vector.shape_cast %204 : vector<8xf32> to vector<8x1xf32>
      %cst_89 = arith.constant 1.280000e+02 : f32
      %206 = vector.broadcast %cst_89 : f32 to vector<8x1xf32>
      %207 = arith.divf %205, %206 : vector<8x1xf32>
      %cst_90 = arith.constant 9.99999997E-7 : f32
      %208 = vector.broadcast %cst_90 : f32 to vector<8x1xf32>
      %209 = arith.addf %207, %208 : vector<8x1xf32>
      %210 = math.rsqrt %209 : vector<8x1xf32>
      %211 = vector.broadcast %210 : vector<8x1xf32> to vector<8x128xf32>
      %212 = arith.mulf %202, %211 : vector<8x128xf32>
      %213 = vector.broadcast %195 : vector<1x128xf32> to vector<8x128xf32>
      %214 = arith.mulf %212, %213 : vector<8x128xf32>
      %215 = vector.broadcast %196 : vector<1x128xf32> to vector<8x128xf32>
      %216 = arith.addf %214, %215 : vector<8x128xf32>
      %c0_91 = arith.constant 0 : index
      %c0_92 = arith.constant 0 : index
      %c0_93 = arith.constant 0 : index
      %217 = vector.load %arg21[%c0_91, %c0_92, %c0_93] : memref<1x8x128xf32, #tpu.memory_space<vmem>>, vector<1x8x128xf32>
      %218 = vector.shape_cast %217 : vector<1x8x128xf32> to vector<8x128xf32>
      %219 = vector.shape_cast %216 : vector<8x128xf32> to vector<1x8x128xf32>
      tpu.vector_store %arg21[%c0_91, %c0_92, %c0_93], %219 {strides = array<i32>} : memref<1x8x128xf32, #tpu.memory_space<vmem>>, vector<1x8x128xf32>,
    } else {
    }
    return
  }
  func.func @transform_0(%arg0: i32, %arg1: i32) -> (i32, i32, i32) {
    %c0_i32 = arith.constant 0 : i32
    %c0_i32_0 = arith.constant 0 : i32
    %c0_i32_1 = arith.constant 0 : i32
    return %arg0, %c0_i32, %c0_i32_0 : i32, i32, i32
  }
  func.func @transform_1(%arg0: i32, %arg1: i32) -> (i32, i32, i32) {
    %c0_i32 = arith.constant 0 : i32
    %c0_i32_0 = arith.constant 0 : i32
    %c0_i32_1 = arith.constant 0 : i32
    return %arg0, %c0_i32, %c0_i32_0 : i32, i32, i32
  }
  func.func @transform_2(%arg0: i32, %arg1: i32) -> (i32, i32) {
    %c0_i32 = arith.constant 0 : i32
    %c0_i32_0 = arith.constant 0 : i32
    %c0_i32_1 = arith.constant 0 : i32
    return %c0_i32, %c0_i32_0 : i32, i32
  }
  func.func @transform_3(%arg0: i32, %arg1: i32) -> (i32, i32) {
    %c0_i32 = arith.constant 0 : i32
    %c0_i32_0 = arith.constant 0 : i32
    %c0_i32_1 = arith.constant 0 : i32
    return %c0_i32, %c0_i32_0 : i32, i32
  }
  func.func @transform_4(%arg0: i32, %arg1: i32) -> (i32, i32) {
    %c0_i32 = arith.constant 0 : i32
    %c0_i32_0 = arith.constant 0 : i32
    %c0_i32_1 = arith.constant 0 : i32
    return %c0_i32, %c0_i32_0 : i32, i32
  }
  func.func @transform_5(%arg0: i32, %arg1: i32) -> (i32, i32, i32) {
    %c0_i32 = arith.constant 0 : i32
    %c0_i32_0 = arith.constant 0 : i32
    %c0_i32_1 = arith.constant 0 : i32
    return %arg1, %c0_i32, %c0_i32_0 : i32, i32, i32
  }
  func.func @transform_6(%arg0: i32, %arg1: i32) -> (i32, i32, i32) {
    %c0_i32 = arith.constant 0 : i32
    %c0_i32_0 = arith.constant 0 : i32
    %c0_i32_1 = arith.constant 0 : i32
    return %arg1, %c0_i32, %c0_i32_0 : i32, i32, i32
  }
  func.func @transform_7(%arg0: i32, %arg1: i32) -> (i32, i32, i32) {
    %c0_i32 = arith.constant 0 : i32
    %c0_i32_0 = arith.constant 0 : i32
    %c0_i32_1 = arith.constant 0 : i32
    return %arg1, %c0_i32, %c0_i32_0 : i32, i32, i32
  }
  func.func @transform_8(%arg0: i32, %arg1: i32) -> (i32, i32, i32) {
    %c0_i32 = arith.constant 0 : i32
    %c0_i32_0 = arith.constant 0 : i32
    %c0_i32_1 = arith.constant 0 : i32
    return %arg1, %c0_i32, %c0_i32_0 : i32, i32, i32
  }
  func.func @transform_9(%arg0: i32, %arg1: i32) -> (i32, i32, i32) {
    %c0_i32 = arith.constant 0 : i32
    %c0_i32_0 = arith.constant 0 : i32
    %c0_i32_1 = arith.constant 0 : i32
    return %arg1, %c0_i32, %c0_i32_0 : i32, i32, i32
  }
  func.func @transform_10(%arg0: i32, %arg1: i32) -> (i32, i32, i32) {
    %c0_i32 = arith.constant 0 : i32
    %c0_i32_0 = arith.constant 0 : i32
    %c0_i32_1 = arith.constant 0 : i32
    return %arg1, %c0_i32, %c0_i32_0 : i32, i32, i32
  }
  func.func @transform_11(%arg0: i32, %arg1: i32) -> (i32, i32, i32) {
    %c0_i32 = arith.constant 0 : i32
    %c0_i32_0 = arith.constant 0 : i32
    %c0_i32_1 = arith.constant 0 : i32
    return %arg1, %c0_i32, %c0_i32_0 : i32, i32, i32
  }
  func.func @transform_12(%arg0: i32, %arg1: i32) -> (i32, i32, i32) {
    %c0_i32 = arith.constant 0 : i32
    %c0_i32_0 = arith.constant 0 : i32
    %c0_i32_1 = arith.constant 0 : i32
    return %arg1, %c0_i32, %c0_i32_0 : i32, i32, i32
  }
  func.func @transform_13(%arg0: i32, %arg1: i32) -> (i32, i32, i32) {
    %c0_i32 = arith.constant 0 : i32
    %c0_i32_0 = arith.constant 0 : i32
    %c0_i32_1 = arith.constant 0 : i32
    return %arg1, %c0_i32, %c0_i32_0 : i32, i32, i32
  }
  func.func @transform_14(%arg0: i32, %arg1: i32) -> (i32, i32, i32) {
    %c0_i32 = arith.constant 0 : i32
    %c0_i32_0 = arith.constant 0 : i32
    %c0_i32_1 = arith.constant 0 : i32
    return %arg1, %c0_i32, %c0_i32_0 : i32, i32, i32
  }
  func.func @transform_15(%arg0: i32, %arg1: i32) -> (i32, i32, i32) {
    %c0_i32 = arith.constant 0 : i32
    %c0_i32_0 = arith.constant 0 : i32
    %c0_i32_1 = arith.constant 0 : i32
    return %arg1, %c0_i32, %c0_i32_0 : i32, i32, i32
  }
  func.func @transform_16(%arg0: i32, %arg1: i32) -> (i32, i32, i32) {
    %c0_i32 = arith.constant 0 : i32
    %c0_i32_0 = arith.constant 0 : i32
    %c0_i32_1 = arith.constant 0 : i32
    return %arg1, %c0_i32, %c0_i32_0 : i32, i32, i32
  }
  func.func @transform_17(%arg0: i32, %arg1: i32) -> (i32, i32) {
    %c0_i32 = arith.constant 0 : i32
    %c0_i32_0 = arith.constant 0 : i32
    %c0_i32_1 = arith.constant 0 : i32
    return %c0_i32, %c0_i32_0 : i32, i32
  }
  func.func @transform_18(%arg0: i32, %arg1: i32) -> (i32, i32) {
    %c0_i32 = arith.constant 0 : i32
    %c0_i32_0 = arith.constant 0 : i32
    %c0_i32_1 = arith.constant 0 : i32
    return %c0_i32, %c0_i32_0 : i32, i32
  }
  func.func @transform_19(%arg0: i32, %arg1: i32) -> (i32, i32, i32) {
    %c0_i32 = arith.constant 0 : i32
    %c0_i32_0 = arith.constant 0 : i32
    %c0_i32_1 = arith.constant 0 : i32
    return %arg0, %c0_i32, %c0_i32_0 : i32, i32, i32
  }
}

</mosaic_0001>

<llo_original>
// kernel: tpu_custom_call.1
$region0: #{tpu_custom_call.1}
  #allocation0 [shape = 'u32[]', space=smem, size = 0x4, offset = 0x4, fixed_abs, tag = 'smem constant byte address 0x4 - core index']
  #allocation1 [shape = 'u32[72,128]{1,0:T(1,128)}', space=vmem, size = 0x9000, scoped, tag = 'internal scratch']
  #allocation2 [shape = 'f32[16,128]{1,0:T(8,128)}', space=vmem, size = 0x2000, scoped, tag = 'scratch operand']
  %s0 = inlined_call_operand.hbm [shape: f32[2,8,64], index: 0, kind: input, shape index: {}]
  %s1 = inlined_call_operand.hbm [shape: f32[2,8,128], index: 1, kind: input, shape index: {}]
  %s2 = inlined_call_operand.hbm [shape: f32[8,128], index: 2, kind: input, shape index: {}]
  %s3 = inlined_call_operand.hbm [shape: bf16[64,128], index: 3, kind: input, shape index: {}]
  %s4 = inlined_call_operand.hbm [shape: f32[1,128], index: 4, kind: input, shape index: {}]
  %s5 = inlined_call_operand.vmem [shape: f32[2,1,128], index: 5, kind: input, shape index: {}]
  %s6 = inlined_call_operand.vmem [shape: f32[2,1,128], index: 6, kind: input, shape index: {}]
  %s7 = inlined_call_operand.hbm [shape: bf16[2,128,384], index: 7, kind: input, shape index: {}]
  %s8 = inlined_call_operand.hbm [shape: f32[2,1,384], index: 8, kind: input, shape index: {}]
  %s9 = inlined_call_operand.hbm [shape: bf16[2,128,128], index: 9, kind: input, shape index: {}]
  %s10 = inlined_call_operand.hbm [shape: f32[2,1,128], index: 10, kind: input, shape index: {}]
  %s11 = inlined_call_operand.hbm [shape: f32[2,1,128], index: 11, kind: input, shape index: {}]
  %s12 = inlined_call_operand.hbm [shape: f32[2,1,128], index: 12, kind: input, shape index: {}]
  %s13 = inlined_call_operand.hbm [shape: bf16[2,128,512], index: 13, kind: input, shape index: {}]
  %s14 = inlined_call_operand.vmem [shape: f32[2,1,512], index: 14, kind: input, shape index: {}]
  %s15 = inlined_call_operand.hbm [shape: bf16[2,512,128], index: 15, kind: input, shape index: {}]
  %s16 = inlined_call_operand.vmem [shape: f32[2,1,128], index: 16, kind: input, shape index: {}]
  %s17 = inlined_call_operand.vmem [shape: f32[1,128], index: 17, kind: input, shape index: {}]
  %s18 = inlined_call_operand.vmem [shape: f32[1,128], index: 18, kind: input, shape index: {}]
  %s19 = inlined_call_operand.hbm [shape: f32[2,8,128], index: 19, kind: output, shape index: {}]
  %s20 = sld [smem:[#allocation0]]
  $region169: #{tpu_custom_call.1} parent=0
    _
  %s22 = ssub.s32 1, %s20
  %s23 = scalar_select 0, %s22, %s20
  $region1: #{tpu_custom_call.1} parent=0
    #allocation3 [shape = 'u8[8192]{0}', space=vmem, size = 0x2000, scoped, tag = 'input window, operand 0']
    #allocation4 [shape = 's32[2]{0}', space=sflag, size = 0x8, scoped, tag = 'scoped memory for tpu_custom_call.1']
    #allocation5 [shape = 's32[2]{0}', space=sflag, size = 0x8, scoped, tag = 'scoped memory for tpu_custom_call.1']
    #allocation6 [shape = 'u8[8192]{0}', space=vmem, size = 0x2000, scoped, tag = 'input window, operand 1']
    #allocation7 [shape = 's32[2]{0}', space=sflag, size = 0x8, scoped, tag = 'scoped memory for tpu_custom_call.1']
    #allocation8 [shape = 'u8[4096]{0}', space=vmem, size = 0x1000, scoped, tag = 'input window, operand 2, single buffered']
    #allocation9 [shape = 'u8[16384]{0}', space=vmem, size = 0x4000, scoped, tag = 'input window, operand 3, single buffered']
    #allocation10 [shape = 's32[1]{0}', space=sflag, size = 0x4, scoped, tag = 'scoped memory for tpu_custom_call.1']
    #allocation11 [shape = 'u8[512]{0}', space=vmem, size = 0x400, scoped, tag = 'input window, operand 4, single buffered']
    #allocation12 [shape = 'u8[196608]{0}', space=vmem, size = 0x30000, scoped, tag = 'input window, operand 7']
    #allocation13 [shape = 's32[2]{0}', space=sflag, size = 0x8, scoped, tag = 'scoped memory for tpu_custom_call.1']
    #allocation14 [shape = 'u8[3072]{0}', space=vmem, size = 0xc00, scoped, tag = 'input window, operand 8']
    #allocation15 [shape = 'u8[65536]{0}', space=vmem, size = 0x10000, scoped, tag = 'input window, operand 9']
    #allocation16 [shape = 's32[2]{0}', space=sflag, size = 0x8, scoped, tag = 'scoped memory for tpu_custom_call.1']
    #allocation17 [shape = 'u8[1024]{0}', space=vmem, size = 0x400, scoped, tag = 'input window, operand 10']
    #allocation18 [shape = 'u8[1024]{0}', space=vmem, size = 0x400, scoped, tag = 'input window, operand 11']
    #allocation19 [shape = 's32[2]{0}', space=sflag, size = 0x8, scoped, tag = 'scoped memory for tpu_custom_call.1']
    #allocation20 [shape = 'u8[1024]{0}', space=vmem, size = 0x400, scoped, tag = 'input window, operand 12']
    #allocation21 [shape = 'u8[262144]{0}', space=vmem, size = 0x40000, scoped, tag = 'input window, operand 13']
    #allocation22 [shape = 's32[2]{0}', space=sflag, size = 0x8, scoped, tag = 'scoped memory for tpu_custom_call.1']
    #allocation23 [shape = 'u8[262144]{0}', space=vmem, size = 0x40000, scoped, tag = 'input window, operand 15']
    #allocation24 [shape = 'u8[8192]{0}', space=vmem, size = 0x2000, scoped, tag = 'output window, operand 0']
    %24 = vsyncpa [#allocation4], 0
    %s25 = scalar_lea.sflag [#allocation4], 1
    %26 = vsyncpa %s25, 0
    %27 = vsyncpa [#allocation7], 0
    %s28 = scalar_lea.sflag [#allocation7], 1
    %29 = vsyncpa %s28, 0
    %30 = vsyncpa [#allocation10], 0
    %31 = vsyncpa [#allocation13], 0
    %s32 = scalar_lea.sflag [#allocation13], 1
    %33 = vsyncpa %s32, 0
    %34 = vsyncpa [#allocation16], 0
    %s35 = scalar_lea.sflag [#allocation16], 1
    %36 = vsyncpa %s35, 0
    %37 = vsyncpa [#allocation19], 0
    %s38 = scalar_lea.sflag [#allocation19], 1
    %39 = vsyncpa %s38, 0
    %40 = vsyncpa [#allocation22], 0
    %s41 = scalar_lea.sflag [#allocation22], 1
    %42 = vsyncpa %s41, 0
    %43 = vsyncpa [#allocation5], 0
    %s44 = scalar_lea.sflag [#allocation5], 1
    %45 = vsyncpa %s44, 0
    loop: start=0, step=1, limit=6
    $region2: #{tpu_custom_call.1} parent=1 // loop_pre_header
      _
    $region3: #{tpu_custom_call.1} parent=1 // loop_header
      %s47 = sphi 0, %s51
      %p48 = scmp.ge.s32.totalorder %s47, 6
      %s54 = sphi 0, %s66
      %s55 = sphi 0, %s62
      %s56 = sphi 0, %s54
      %s57 = sphi 0, %s55
      %s58 = sphi 0, %s56
      %s59 = sphi 0, %s57
      %s69 = sphi 0, %s71
      %s72 = sphi 0, %s69
      %s73 = sphi 0, %s72
      %s89 = sphi 0, %s73
      %s95 = sphi 0, %s97
      %s98 = sphi 0, %s95
      %s99 = sphi 0, %s98
      %s115 = sphi 0, %s99
      %s119 = sphi 0, %s119
      %s121 = sphi 0, %s119
      %s122 = sphi 0, %s121
      %s136 = sphi 0, %s122
      %s140 = sphi 0, %s140
      %s142 = sphi 0, %s140
      %s143 = sphi 0, %s142
      %s157 = sphi 0, %s143
      %s161 = sphi 0, %s161
      %s163 = sphi 0, %s161
      %s164 = sphi 0, %s163
      %s178 = sphi 0, %s164
      %s184 = sphi 0, %s186
      %s187 = sphi 0, %s184
      %s188 = sphi 0, %s187
      %s204 = sphi 0, %s188
      %s210 = sphi 0, %s212
      %s213 = sphi 0, %s210
      %s214 = sphi 0, %s213
      %s230 = sphi 0, %s214
      %s236 = sphi 0, %s238
      %s239 = sphi 0, %s236
      %s240 = sphi 0, %s239
      %s256 = sphi 0, %s240
      %s262 = sphi 0, %s264
      %s265 = sphi 0, %s262
      %s266 = sphi 0, %s265
      %s282 = sphi 0, %s266
      %s288 = sphi 0, %s290
      %s291 = sphi 0, %s288
      %s292 = sphi 0, %s291
      %s308 = sphi 0, %s292
      %s314 = sphi 0, %s316
      %s317 = sphi 0, %s314
      %s318 = sphi 0, %s317
      %s334 = sphi 0, %s318
      %s340 = sphi 0, %s342
      %s343 = sphi 0, %s340
      %s344 = sphi 0, %s343
      %s360 = sphi 0, %s344
      %s366 = sphi 0, %s368
      %s369 = sphi 0, %s366
      %s370 = sphi 0, %s369
      %s386 = sphi 0, %s370
      %s392 = sphi 0, %s394
      %s395 = sphi 0, %s392
      %s396 = sphi 0, %s395
      %s412 = sphi 0, %s396
      %s418 = sphi 0, %s420
      %s421 = sphi 0, %s418
      %s422 = sphi 0, %s421
      %s438 = sphi 0, %s422
      %s444 = sphi 0, %s446
      %s447 = sphi 0, %s444
      %s448 = sphi 0, %s447
      %s464 = sphi 0, %s448
      %s470 = sphi 0, %s472
      %s473 = sphi 0, %s470
      %s474 = sphi 0, %s473
      %s490 = sphi 0, %s474
      %s494 = sphi 0, %s494
      %s496 = sphi 0, %s494
      %s497 = sphi 0, %s496
      %s511 = sphi 0, %s497
      %s515 = sphi 0, %s515
      %s517 = sphi 0, %s515
      %s518 = sphi 0, %s517
      %s532 = sphi 0, %s518
      %s538 = sphi 0, %s540
      %s541 = sphi 0, %s538
      %s542 = sphi 0, %s541
      %s558 = sphi 0, %s542
    $region4: #{tpu_custom_call.1} parent=1 // loop_header_branch
      %50 = sbr.rel (%p48) target = $region8
    $region5: #{tpu_custom_call.1} parent=1 // loop_body
      %s52 = ssub.s32 %s47, 1
      %s53 = ssub.s32 %s47, 2
      %s60 = sadd.s32 1, %s55
      %p61 = scmp.ge.s32.totalorder %s60, 2
      %s62 = scalar_select %p61, 0, %s60
      %s63 = sadd.s32 1, %s54
      %s64 = scalar_select %p61, %s63, %s54
      %p65 = scmp.ge.s32.totalorder %s64, 2
      %s66 = scalar_select %p65, 0, %s64
      %s67 = ssub.s32 %s54, %s66
      %p68 = scmp.eq.s32.totalorder %s67, 0
      %s70 = sadd.s32 %s69, 1
      %s71 = scalar_select %p68, %s69, %s70
      %p74 = pneg %p68
      %p75 = scmp.eq.s32.totalorder %s47, 3
      %p76 = por %p74, %p75
      %p77 = scmp.ne.s32.totalorder %s69, %s72
      %p78 = scmp.eq.s32.totalorder %s47, 0
      %p79 = por %p77, %p78
      %p80 = scmp.ne.s32.totalorder %s69, %s72
      %p81 = scmp.eq.s32.totalorder %s52, 3
      %p82 = por %p80, %p81
      %p83 = scmp.ne.s32.totalorder %s72, %s73
      %p84 = scmp.eq.s32.totalorder %s52, 0
      %p85 = por %p83, %p84
      %p86 = scmp.ne.s32.totalorder %s72, %s73
      %p87 = scmp.eq.s32.totalorder %s53, 3
      %p88 = por %p86, %p87
      %p90 = scmp.ne.s32.totalorder %s73, %s89
      %p91 = scmp.eq.s32.totalorder %s53, 0
      %p92 = por %p90, %p91
      %s93 = ssub.s32 %s54, %s66
      %p94 = scmp.eq.s32.totalorder %s93, 0
      %s96 = sadd.s32 %s95, 1
      %s97 = scalar_select %p94, %s95, %s96
      %p100 = pneg %p94
      %p101 = scmp.eq.s32.totalorder %s47, 3
      %p102 = por %p100, %p101
      %p103 = scmp.ne.s32.totalorder %s95, %s98
      %p104 = scmp.eq.s32.totalorder %s47, 0
      %p105 = por %p103, %p104
      %p106 = scmp.ne.s32.totalorder %s95, %s98
      %p107 = scmp.eq.s32.totalorder %s52, 3
      %p108 = por %p106, %p107
      %p109 = scmp.ne.s32.totalorder %s98, %s99
      %p110 = scmp.eq.s32.totalorder %s52, 0
      %p111 = por %p109, %p110
      %p112 = scmp.ne.s32.totalorder %s98, %s99
      %p113 = scmp.eq.s32.totalorder %s53, 3
      %p114 = por %p112, %p113
      %p116 = scmp.ne.s32.totalorder %s99, %s115
      %p117 = scmp.eq.s32.totalorder %s53, 0
      %p118 = por %p116, %p117
      %s120 = sadd.s32 %s119, 1
      %p123 = scmp.eq.s32.totalorder %s47, 3
      %p124 = scmp.ne.s32.totalorder %s119, %s121
      %p125 = scmp.eq.s32.totalorder %s47, 0
      %p126 = por %p124, %p125
      %p127 = scmp.ne.s32.totalorder %s119, %s121
      %p128 = scmp.eq.s32.totalorder %s52, 3
      %p129 = por %p127, %p128
      %p130 = scmp.ne.s32.totalorder %s121, %s122
      %p131 = scmp.eq.s32.totalorder %s52, 0
      %p132 = por %p130, %p131
      %p133 = scmp.ne.s32.totalorder %s121, %s122
      %p134 = scmp.eq.s32.totalorder %s53, 3
      %p135 = por %p133, %p134
      %p137 = scmp.ne.s32.totalorder %s122, %s136
      %p138 = scmp.eq.s32.totalorder %s53, 0
      %p139 = por %p137, %p138
      %s141 = sadd.s32 %s140, 1
      %p144 = scmp.eq.s32.totalorder %s47, 3
      %p145 = scmp.ne.s32.totalorder %s140, %s142
      %p146 = scmp.eq.s32.totalorder %s47, 0
      %p147 = por %p145, %p146
      %p148 = scmp.ne.s32.totalorder %s140, %s142
      %p149 = scmp.eq.s32.totalorder %s52, 3
      %p150 = por %p148, %p149
      %p151 = scmp.ne.s32.totalorder %s142, %s143
      %p152 = scmp.eq.s32.totalorder %s52, 0
      %p153 = por %p151, %p152
      %p154 = scmp.ne.s32.totalorder %s142, %s143
      %p155 = scmp.eq.s32.totalorder %s53, 3
      %p156 = por %p154, %p155
      %p158 = scmp.ne.s32.totalorder %s143, %s157
      %p159 = scmp.eq.s32.totalorder %s53, 0
      %p160 = por %p158, %p159
      %s162 = sadd.s32 %s161, 1
      %p165 = scmp.eq.s32.totalorder %s47, 3
      %p166 = scmp.ne.s32.totalorder %s161, %s163
      %p167 = scmp.eq.s32.totalorder %s47, 0
      %p168 = por %p166, %p167
      %p169 = scmp.ne.s32.totalorder %s161, %s163
      %p170 = scmp.eq.s32.totalorder %s52, 3
      %p171 = por %p169, %p170
      %p172 = scmp.ne.s32.totalorder %s163, %s164
      %p173 = scmp.eq.s32.totalorder %s52, 0
      %p174 = por %p172, %p173
      %p175 = scmp.ne.s32.totalorder %s163, %s164
      %p176 = scmp.eq.s32.totalorder %s53, 3
      %p177 = por %p175, %p176
      %p179 = scmp.ne.s32.totalorder %s164, %s178
      %p180 = scmp.eq.s32.totalorder %s53, 0
      %p181 = por %p179, %p180
      %s182 = ssub.s32 %s55, %s62
      %p183 = scmp.eq.s32.totalorder %s182, 0
      %s185 = sadd.s32 %s184, 1
      %s186 = scalar_select %p183, %s184, %s185
      %p189 = pneg %p183
      %p190 = scmp.eq.s32.totalorder %s47, 3
      %p191 = por %p189, %p190
      %p192 = scmp.ne.s32.totalorder %s184, %s187
      %p193 = scmp.eq.s32.totalorder %s47, 0
      %p194 = por %p192, %p193
      %p195 = scmp.ne.s32.totalorder %s184, %s187
      %p196 = scmp.eq.s32.totalorder %s52, 3
      %p197 = por %p195, %p196
      %p198 = scmp.ne.s32.totalorder %s187, %s188
      %p199 = scmp.eq.s32.totalorder %s52, 0
      %p200 = por %p198, %p199
      %p201 = scmp.ne.s32.totalorder %s187, %s188
      %p202 = scmp.eq.s32.totalorder %s53, 3
      %p203 = por %p201, %p202
      %p205 = scmp.ne.s32.totalorder %s188, %s204
      %p206 = scmp.eq.s32.totalorder %s53, 0
      %p207 = por %p205, %p206
      %s208 = ssub.s32 %s55, %s62
      %p209 = scmp.eq.s32.totalorder %s208, 0
      %s211 = sadd.s32 %s210, 1
      %s212 = scalar_select %p209, %s210, %s211
      %p215 = pneg %p209
      %p216 = scmp.eq.s32.totalorder %s47, 3
      %p217 = por %p215, %p216
      %p218 = scmp.ne.s32.totalorder %s210, %s213
      %p219 = scmp.eq.s32.totalorder %s47, 0
      %p220 = por %p218, %p219
      %p221 = scmp.ne.s32.totalorder %s210, %s213
      %p222 = scmp.eq.s32.totalorder %s52, 3
      %p223 = por %p221, %p222
      %p224 = scmp.ne.s32.totalorder %s213, %s214
      %p225 = scmp.eq.s32.totalorder %s52, 0
      %p226 = por %p224, %p225
      %p227 = scmp.ne.s32.totalorder %s213, %s214
      %p228 = scmp.eq.s32.totalorder %s53, 3
      %p229 = por %p227, %p228
      %p231 = scmp.ne.s32.totalorder %s214, %s230
      %p232 = scmp.eq.s32.totalorder %s53, 0
      %p233 = por %p231, %p232
      %s234 = ssub.s32 %s55, %s62
      %p235 = scmp.eq.s32.totalorder %s234, 0
      %s237 = sadd.s32 %s236, 1
      %s238 = scalar_select %p235, %s236, %s237
      %p241 = pneg %p235
      %p242 = scmp.eq.s32.totalorder %s47, 3
      %p243 = por %p241, %p242
      %p244 = scmp.ne.s32.totalorder %s236, %s239
      %p245 = scmp.eq.s32.totalorder %s47, 0
      %p246 = por %p244, %p245
      %p247 = scmp.ne.s32.totalorder %s236, %s239
      %p248 = scmp.eq.s32.totalorder %s52, 3
      %p249 = por %p247, %p248
      %p250 = scmp.ne.s32.totalorder %s239, %s240
      %p251 = scmp.eq.s32.totalorder %s52, 0
      %p252 = por %p250, %p251
      %p253 = scmp.ne.s32.totalorder %s239, %s240
      %p254 = scmp.eq.s32.totalorder %s53, 3
      %p255 = por %p253, %p254
      %p257 = scmp.ne.s32.totalorder %s240, %s256
      %p258 = scmp.eq.s32.totalorder %s53, 0
      %p259 = por %p257, %p258
      %s260 = ssub.s32 %s55, %s62
      %p261 = scmp.eq.s32.totalorder %s260, 0
      %s263 = sadd.s32 %s262, 1
      %s264 = scalar_select %p261, %s262, %s263
      %p267 = pneg %p261
      %p268 = scmp.eq.s32.totalorder %s47, 3
      %p269 = por %p267, %p268
      %p270 = scmp.ne.s32.totalorder %s262, %s265
      %p271 = scmp.eq.s32.totalorder %s47, 0
      %p272 = por %p270, %p271
      %p273 = scmp.ne.s32.totalorder %s262, %s265
      %p274 = scmp.eq.s32.totalorder %s52, 3
      %p275 = por %p273, %p274
      %p276 = scmp.ne.s32.totalorder %s265, %s266
      %p277 = scmp.eq.s32.totalorder %s52, 0
      %p278 = por %p276, %p277
      %p279 = scmp.ne.s32.totalorder %s265, %s266
      %p280 = scmp.eq.s32.totalorder %s53, 3
      %p281 = por %p279, %p280
      %p283 = scmp.ne.s32.totalorder %s266, %s282
      %p284 = scmp.eq.s32.totalorder %s53, 0
      %p285 = por %p283, %p284
      %s286 = ssub.s32 %s55, %s62
      %p287 = scmp.eq.s32.totalorder %s286, 0
      %s289 = sadd.s32 %s288, 1
      %s290 = scalar_select %p287, %s288, %s289
      %p293 = pneg %p287
      %p294 = scmp.eq.s32.totalorder %s47, 3
      %p295 = por %p293, %p294
      %p296 = scmp.ne.s32.totalorder %s288, %s291
      %p297 = scmp.eq.s32.totalorder %s47, 0
      %p298 = por %p296, %p297
      %p299 = scmp.ne.s32.totalorder %s288, %s291
      %p300 = scmp.eq.s32.totalorder %s52, 3
      %p301 = por %p299, %p300
      %p302 = scmp.ne.s32.totalorder %s291, %s292
      %p303 = scmp.eq.s32.totalorder %s52, 0
      %p304 = por %p302, %p303
      %p305 = scmp.ne.s32.totalorder %s291, %s292
      %p306 = scmp.eq.s32.totalorder %s53, 3
      %p307 = por %p305, %p306
      %p309 = scmp.ne.s32.totalorder %s292, %s308
      %p310 = scmp.eq.s32.totalorder %s53, 0
      %p311 = por %p309, %p310
      %s312 = ssub.s32 %s55, %s62
      %p313 = scmp.eq.s32.totalorder %s312, 0
      %s315 = sadd.s32 %s314, 1
      %s316 = scalar_select %p313, %s314, %s315
      %p319 = pneg %p313
      %p320 = scmp.eq.s32.totalorder %s47, 3
      %p321 = por %p319, %p320
      %p322 = scmp.ne.s32.totalorder %s314, %s317
      %p323 = scmp.eq.s32.totalorder %s47, 0
      %p324 = por %p322, %p323
      %p325 = scmp.ne.s32.totalorder %s314, %s317
      %p326 = scmp.eq.s32.totalorder %s52, 3
      %p327 = por %p325, %p326
      %p328 = scmp.ne.s32.totalorder %s317, %s318
      %p329 = scmp.eq.s32.totalorder %s52, 0
      %p330 = por %p328, %p329
      %p331 = scmp.ne.s32.totalorder %s317, %s318
      %p332 = scmp.eq.s32.totalorder %s53, 3
      %p333 = por %p331, %p332
      %p335 = scmp.ne.s32.totalorder %s318, %s334
      %p336 = scmp.eq.s32.totalorder %s53, 0
      %p337 = por %p335, %p336
      %s338 = ssub.s32 %s55, %s62
      %p339 = scmp.eq.s32.totalorder %s338, 0
      %s341 = sadd.s32 %s340, 1
      %s342 = scalar_select %p339, %s340, %s341
      %p345 = pneg %p339
      %p346 = scmp.eq.s32.totalorder %s47, 3
      %p347 = por %p345, %p346
      %p348 = scmp.ne.s32.totalorder %s340, %s343
      %p349 = scmp.eq.s32.totalorder %s47, 0
      %p350 = por %p348, %p349
      %p351 = scmp.ne.s32.totalorder %s340, %s343
      %p352 = scmp.eq.s32.totalorder %s52, 3
      %p353 = por %p351, %p352
      %p354 = scmp.ne.s32.totalorder %s343, %s344
      %p355 = scmp.eq.s32.totalorder %s52, 0
      %p356 = por %p354, %p355
      %p357 = scmp.ne.s32.totalorder %s343, %s344
      %p358 = scmp.eq.s32.totalorder %s53, 3
      %p359 = por %p357, %p358
      %p361 = scmp.ne.s32.totalorder %s344, %s360
      %p362 = scmp.eq.s32.totalorder %s53, 0
      %p363 = por %p361, %p362
      %s364 = ssub.s32 %s55, %s62
      %p365 = scmp.eq.s32.totalorder %s364, 0
      %s367 = sadd.s32 %s366, 1
      %s368 = scalar_select %p365, %s366, %s367
      %p371 = pneg %p365
      %p372 = scmp.eq.s32.totalorder %s47, 3
      %p373 = por %p371, %p372
      %p374 = scmp.ne.s32.totalorder %s366, %s369
      %p375 = scmp.eq.s32.totalorder %s47, 0
      %p376 = por %p374, %p375
      %p377 = scmp.ne.s32.totalorder %s366, %s369
      %p378 = scmp.eq.s32.totalorder %s52, 3
      %p379 = por %p377, %p378
      %p380 = scmp.ne.s32.totalorder %s369, %s370
      %p381 = scmp.eq.s32.totalorder %s52, 0
      %p382 = por %p380, %p381
      %p383 = scmp.ne.s32.totalorder %s369, %s370
      %p384 = scmp.eq.s32.totalorder %s53, 3
      %p385 = por %p383, %p384
      %p387 = scmp.ne.s32.totalorder %s370, %s386
      %p388 = scmp.eq.s32.totalorder %s53, 0
      %p389 = por %p387, %p388
      %s390 = ssub.s32 %s55, %s62
      %p391 = scmp.eq.s32.totalorder %s390, 0
      %s393 = sadd.s32 %s392, 1
      %s394 = scalar_select %p391, %s392, %s393
      %p397 = pneg %p391
      %p398 = scmp.eq.s32.totalorder %s47, 3
      %p399 = por %p397, %p398
      %p400 = scmp.ne.s32.totalorder %s392, %s395
      %p401 = scmp.eq.s32.totalorder %s47, 0
      %p402 = por %p400, %p401
      %p403 = scmp.ne.s32.totalorder %s392, %s395
      %p404 = scmp.eq.s32.totalorder %s52, 3
      %p405 = por %p403, %p404
      %p406 = scmp.ne.s32.totalorder %s395, %s396
      %p407 = scmp.eq.s32.totalorder %s52, 0
      %p408 = por %p406, %p407
      %p409 = scmp.ne.s32.totalorder %s395, %s396
      %p410 = scmp.eq.s32.totalorder %s53, 3
      %p411 = por %p409, %p410
      %p413 = scmp.ne.s32.totalorder %s396, %s412
      %p414 = scmp.eq.s32.totalorder %s53, 0
      %p415 = por %p413, %p414
      %s416 = ssub.s32 %s55, %s62
      %p417 = scmp.eq.s32.totalorder %s416, 0
      %s419 = sadd.s32 %s418, 1
      %s420 = scalar_select %p417, %s418, %s419
      %p423 = pneg %p417
      %p424 = scmp.eq.s32.totalorder %s47, 3
      %p425 = por %p423, %p424
      %p426 = scmp.ne.s32.totalorder %s418, %s421
      %p427 = scmp.eq.s32.totalorder %s47, 0
      %p428 = por %p426, %p427
      %p429 = scmp.ne.s32.totalorder %s418, %s421
      %p430 = scmp.eq.s32.totalorder %s52, 3
      %p431 = por %p429, %p430
      %p432 = scmp.ne.s32.totalorder %s421, %s422
      %p433 = scmp.eq.s32.totalorder %s52, 0
      %p434 = por %p432, %p433
      %p435 = scmp.ne.s32.totalorder %s421, %s422
      %p436 = scmp.eq.s32.totalorder %s53, 3
      %p437 = por %p435, %p436
      %p439 = scmp.ne.s32.totalorder %s422, %s438
      %p440 = scmp.eq.s32.totalorder %s53, 0
      %p441 = por %p439, %p440
      %s442 = ssub.s32 %s55, %s62
      %p443 = scmp.eq.s32.totalorder %s442, 0
      %s445 = sadd.s32 %s444, 1
      %s446 = scalar_select %p443, %s444, %s445
      %p449 = pneg %p443
      %p450 = scmp.eq.s32.totalorder %s47, 3
      %p451 = por %p449, %p450
      %p452 = scmp.ne.s32.totalorder %s444, %s447
      %p453 = scmp.eq.s32.totalorder %s47, 0
      %p454 = por %p452, %p453
      %p455 = scmp.ne.s32.totalorder %s444, %s447
      %p456 = scmp.eq.s32.totalorder %s52, 3
      %p457 = por %p455, %p456
      %p458 = scmp.ne.s32.totalorder %s447, %s448
      %p459 = scmp.eq.s32.totalorder %s52, 0
      %p460 = por %p458, %p459
      %p461 = scmp.ne.s32.totalorder %s447, %s448
      %p462 = scmp.eq.s32.totalorder %s53, 3
      %p463 = por %p461, %p462
      %p465 = scmp.ne.s32.totalorder %s448, %s464
      %p466 = scmp.eq.s32.totalorder %s53, 0
      %p467 = por %p465, %p466
      %s468 = ssub.s32 %s55, %s62
      %p469 = scmp.eq.s32.totalorder %s468, 0
      %s471 = sadd.s32 %s470, 1
      %s472 = scalar_select %p469, %s470, %s471
      %p475 = pneg %p469
      %p476 = scmp.eq.s32.totalorder %s47, 3
      %p477 = por %p475, %p476
      %p478 = scmp.ne.s32.totalorder %s470, %s473
      %p479 = scmp.eq.s32.totalorder %s47, 0
      %p480 = por %p478, %p479
      %p481 = scmp.ne.s32.totalorder %s470, %s473
      %p482 = scmp.eq.s32.totalorder %s52, 3
      %p483 = por %p481, %p482
      %p484 = scmp.ne.s32.totalorder %s473, %s474
      %p485 = scmp.eq.s32.totalorder %s52, 0
      %p486 = por %p484, %p485
      %p487 = scmp.ne.s32.totalorder %s473, %s474
      %p488 = scmp.eq.s32.totalorder %s53, 3
      %p489 = por %p487, %p488
      %p491 = scmp.ne.s32.totalorder %s474, %s490
      %p492 = scmp.eq.s32.totalorder %s53, 0
      %p493 = por %p491, %p492
      %s495 = sadd.s32 %s494, 1
      %p498 = scmp.eq.s32.totalorder %s47, 3
      %p499 = scmp.ne.s32.totalorder %s494, %s496
      %p500 = scmp.eq.s32.totalorder %s47, 0
      %p501 = por %p499, %p500
      %p502 = scmp.ne.s32.totalorder %s494, %s496
      %p503 = scmp.eq.s32.totalorder %s52, 3
      %p504 = por %p502, %p503
      %p505 = scmp.ne.s32.totalorder %s496, %s497
      %p506 = scmp.eq.s32.totalorder %s52, 0
      %p507 = por %p505, %p506
      %p508 = scmp.ne.s32.totalorder %s496, %s497
      %p509 = scmp.eq.s32.totalorder %s53, 3
      %p510 = por %p508, %p509
      %p512 = scmp.ne.s32.totalorder %s497, %s511
      %p513 = scmp.eq.s32.totalorder %s53, 0
      %p514 = por %p512, %p513
      %s516 = sadd.s32 %s515, 1
      %p519 = scmp.eq.s32.totalorder %s47, 3
      %p520 = scmp.ne.s32.totalorder %s515, %s517
      %p521 = scmp.eq.s32.totalorder %s47, 0
      %p522 = por %p520, %p521
      %p523 = scmp.ne.s32.totalorder %s515, %s517
      %p524 = scmp.eq.s32.totalorder %s52, 3
      %p525 = por %p523, %p524
      %p526 = scmp.ne.s32.totalorder %s517, %s518
      %p527 = scmp.eq.s32.totalorder %s52, 0
      %p528 = por %p526, %p527
      %p529 = scmp.ne.s32.totalorder %s517, %s518
      %p530 = scmp.eq.s32.totalorder %s53, 3
      %p531 = por %p529, %p530
      %p533 = scmp.ne.s32.totalorder %s518, %s532
      %p534 = scmp.eq.s32.totalorder %s53, 0
      %p535 = por %p533, %p534
      %s536 = ssub.s32 %s54, %s66
      %p537 = scmp.eq.s32.totalorder %s536, 0
      %s539 = sadd.s32 %s538, 1
      %s540 = scalar_select %p537, %s538, %s539
      %p543 = pneg %p537
      %p544 = scmp.eq.s32.totalorder %s47, 3
      %p545 = por %p543, %p544
      %p546 = scmp.ne.s32.totalorder %s538, %s541
      %p547 = scmp.eq.s32.totalorder %s47, 0
      %p548 = por %p546, %p547
      %p549 = scmp.ne.s32.totalorder %s538, %s541
      %p550 = scmp.eq.s32.totalorder %s52, 3
      %p551 = por %p549, %p550
      %p552 = scmp.ne.s32.totalorder %s541, %s542
      %p553 = scmp.eq.s32.totalorder %s52, 0
      %p554 = por %p552, %p553
      %p555 = scmp.ne.s32.totalorder %s541, %s542
      %p556 = scmp.eq.s32.totalorder %s53, 3
      %p557 = por %p555, %p556
      %p559 = scmp.ne.s32.totalorder %s542, %s558
      %p560 = scmp.eq.s32.totalorder %s53, 0
      %p561 = por %p559, %p560
      %p562 = scmp.le.s32.totalorder 1, %s47
      %p563 = scmp.lt.s32.totalorder %s47, 5
      %p564 = pnand %p562, %p563
      %p565 = pneg %p564
      // Predicated region
      $region9: #{tpu_custom_call.1} parent=5 // pred_check
        _
      $region10: #{tpu_custom_call.1} parent=5 // pred_check_branch
        %567 = sbr.rel (%p564) target = $region12
      $region11: #{tpu_custom_call.1} parent=5 // pred_region
        %s568 = ssub.s32 %s47, 1
        // Predicated region
        $region13: #{tpu_custom_call.1} parent=11 // pred_check
          %p569 = pneg %p132
        $region14: #{tpu_custom_call.1} parent=11 // pred_check_branch
          %571 = sbr.rel (%p569) target = $region16
        $region15: #{tpu_custom_call.1} parent=11 // pred_region
          %573 = vsyncadd [#allocation7], 0
          %s575 = sshll.u32 %s2, 4
          %s576 = int_to_ptr.hbm [resolvable:$true] %s575
          %s577 = sshll.u32 [#allocation8], 4
          %s578 = int_to_ptr.vmem [resolvable:$true] %s577
          %580 = dma.hbm_to_vmem [thread:$0]  %s576, 128, %s578, [#allocation7]
        $region16: #{tpu_custom_call.1} parent=11 // pred_fallthru
          _
        // Predicated region
        $region17: #{tpu_custom_call.1} parent=11 // pred_check
          %p581 = pneg %p153
        $region18: #{tpu_custom_call.1} parent=11 // pred_check_branch
          %583 = sbr.rel (%p581) target = $region20
        $region19: #{tpu_custom_call.1} parent=11 // pred_region
          %585 = vsyncadd [#allocation10], 0
          %s586 = sshll.u32 %s3, 4
          %s587 = int_to_ptr.hbm [resolvable:$true] %s586
          %s588 = sshll.u32 [#allocation9], 4
          %s589 = int_to_ptr.vmem [resolvable:$true] %s588
          %594 = dma.hbm_to_vmem [thread:$0]  %s587, 512, %s589, [#allocation10], 64, 64, 4
        $region20: #{tpu_custom_call.1} parent=11 // pred_fallthru
          _
        // Predicated region
        $region21: #{tpu_custom_call.1} parent=11 // pred_check
          %p595 = pneg %p174
        $region22: #{tpu_custom_call.1} parent=11 // pred_check_branch
          %597 = sbr.rel (%p595) target = $region24
        $region23: #{tpu_custom_call.1} parent=11 // pred_region
          %599 = vsyncadd [#allocation10], 0
          %s601 = sshll.u32 %s4, 4
          %s602 = int_to_ptr.hbm [resolvable:$true] %s601
          %s603 = sshll.u32 [#allocation11], 4
          %s604 = int_to_ptr.vmem [resolvable:$true] %s603
          %606 = dma.hbm_to_vmem [thread:$0]  %s602, 16, %s604, [#allocation10]
        $region24: #{tpu_custom_call.1} parent=11 // pred_fallthru
          _
        // Predicated region
        $region25: #{tpu_custom_call.1} parent=11 // pred_check
          %p607 = pneg %p507
        $region26: #{tpu_custom_call.1} parent=11 // pred_check_branch
          %609 = sbr.rel (%p607) target = $region28
        $region27: #{tpu_custom_call.1} parent=11 // pred_region
          _
        $region28: #{tpu_custom_call.1} parent=11 // pred_fallthru
          _
        // Predicated region
        $region29: #{tpu_custom_call.1} parent=11 // pred_check
          %p610 = pneg %p528
        $region30: #{tpu_custom_call.1} parent=11 // pred_check_branch
          %612 = sbr.rel (%p610) target = $region32
        $region31: #{tpu_custom_call.1} parent=11 // pred_region
          _
        $region32: #{tpu_custom_call.1} parent=11 // pred_fallthru
          _
      $region12: #{tpu_custom_call.1} parent=5 // pred_fallthru
        _
      %p613 = scmp.lt.s32.totalorder %s47, 4
      // Predicated region
      $region33: #{tpu_custom_call.1} parent=5 // pred_check
        %p614 = pneg %p613
      $region34: #{tpu_custom_call.1} parent=5 // pred_check_branch
        %616 = sbr.rel (%p614) target = $region36
      $region35: #{tpu_custom_call.1} parent=5 // pred_region
        // Predicated region
        $region37: #{tpu_custom_call.1} parent=35 // pred_check
          %p617 = pneg %p79
        $region38: #{tpu_custom_call.1} parent=35 // pred_check_branch
          %619 = sbr.rel (%p617) target = $region40
        $region39: #{tpu_custom_call.1} parent=35 // pred_region
          %s620 = sand.u32 %s69, 1
          %s621 = scalar_lea.sflag [#allocation4], %s620
          %s622 = sand.u32 %s69, 1
          %s623 = smul.addr %s622, 8
          %s624 = scalar_lea.vmem [#allocation3], %s623
          %626 = vsyncadd %s621, 0
          %s627 = smul.addr %s54, 8
          %s628 = scalar_lea.hbm %s0, %s627
          %s630 = sshll.u32 %s628, 4
          %s631 = int_to_ptr.hbm [resolvable:$true] %s630
          %s632 = sshll.u32 %s624, 4
          %s633 = int_to_ptr.vmem [resolvable:$true] %s632
          %635 = dma.hbm_to_vmem [thread:$0]  %s631, 128, %s633, %s621
        $region40: #{tpu_custom_call.1} parent=35 // pred_fallthru
          _
        // Predicated region
        $region41: #{tpu_custom_call.1} parent=35 // pred_check
          %p636 = pneg %p105
        $region42: #{tpu_custom_call.1} parent=35 // pred_check_branch
          %638 = sbr.rel (%p636) target = $region44
        $region43: #{tpu_custom_call.1} parent=35 // pred_region
          %s639 = sand.u32 %s47, 1
          %s640 = scalar_lea.sflag [#allocation7], %s639
          %s641 = sand.u32 %s95, 1
          %s642 = smul.addr %s641, 8
          %s643 = scalar_lea.vmem [#allocation6], %s642
          %645 = vsyncadd %s640, 0
          %s646 = smul.addr %s54, 8
          %s647 = scalar_lea.hbm %s1, %s646
          %s649 = sshll.u32 %s647, 4
          %s650 = int_to_ptr.hbm [resolvable:$true] %s649
          %s651 = sshll.u32 %s643, 4
          %s652 = int_to_ptr.vmem [resolvable:$true] %s651
          %654 = dma.hbm_to_vmem [thread:$0]  %s650, 128, %s652, %s640
        $region44: #{tpu_custom_call.1} parent=35 // pred_fallthru
          _
        // Predicated region
        $region45: #{tpu_custom_call.1} parent=35 // pred_check
          %p655 = pneg %p194
        $region46: #{tpu_custom_call.1} parent=35 // pred_check_branch
          %657 = sbr.rel (%p655) target = $region48
        $region47: #{tpu_custom_call.1} parent=35 // pred_region
          %p658 = scmp.lt.s32.totalorder %s55, 1
          %s659 = scalar_select %p658, %s55, 1
          %s660 = scalar_lea.vmem %s5, %s659
        $region48: #{tpu_custom_call.1} parent=35 // pred_fallthru
          _
        // Predicated region
        $region49: #{tpu_custom_call.1} parent=35 // pred_check
          %p661 = pneg %p220
        $region50: #{tpu_custom_call.1} parent=35 // pred_check_branch
          %663 = sbr.rel (%p661) target = $region52
        $region51: #{tpu_custom_call.1} parent=35 // pred_region
          %p664 = scmp.lt.s32.totalorder %s55, 1
          %s665 = scalar_select %p664, %s55, 1
          %s666 = scalar_lea.vmem %s6, %s665
        $region52: #{tpu_custom_call.1} parent=35 // pred_fallthru
          _
        // Predicated region
        $region53: #{tpu_custom_call.1} parent=35 // pred_check
          %p667 = pneg %p246
        $region54: #{tpu_custom_call.1} parent=35 // pred_check_branch
          %669 = sbr.rel (%p667) target = $region56
        $region55: #{tpu_custom_call.1} parent=35 // pred_region
          %s670 = sand.u32 %s47, 1
          %s671 = scalar_lea.sflag [#allocation13], %s670
          %s672 = sand.u32 %s236, 1
          %s673 = smul.addr %s672, 192
          %s674 = scalar_lea.vmem [#allocation12], %s673
          %676 = vsyncadd %s671, 0
          %s677 = smul.addr %s55, 48
          %s678 = smul.addr %s677, 4
          %s679 = scalar_lea.hbm %s7, %s678
          %s680 = sshll.u32 %s679, 4
          %s681 = int_to_ptr.hbm [resolvable:$true] %s680
          %s682 = sshll.u32 %s674, 4
          %s683 = int_to_ptr.vmem [resolvable:$true] %s682
          %688 = dma.hbm_to_vmem [thread:$0]  %s681, 3072, %s683, %s671, 192, 192, 12
        $region56: #{tpu_custom_call.1} parent=35 // pred_fallthru
          _
        // Predicated region
        $region57: #{tpu_custom_call.1} parent=35 // pred_check
          %p689 = pneg %p272
        $region58: #{tpu_custom_call.1} parent=35 // pred_check_branch
          %691 = sbr.rel (%p689) target = $region60
        $region59: #{tpu_custom_call.1} parent=35 // pred_region
          %s692 = sand.u32 %s47, 1
          %s693 = scalar_lea.sflag [#allocation13], %s692
          %s694 = sand.u32 %s262, 1
          %s695 = smul.addr %s694, 3
          %s696 = scalar_lea.vmem [#allocation14], %s695
          %698 = vsyncadd %s693, 0
          %s699 = smul.addr %s55, 3
          %s700 = scalar_lea.hbm %s8, %s699
          %s702 = sshll.u32 %s700, 4
          %s703 = int_to_ptr.hbm [resolvable:$true] %s702
          %s704 = sshll.u32 %s696, 4
          %s705 = int_to_ptr.vmem [resolvable:$true] %s704
          %707 = dma.hbm_to_vmem [thread:$0]  %s703, 48, %s705, %s693
        $region60: #{tpu_custom_call.1} parent=35 // pred_fallthru
          _
        // Predicated region
        $region61: #{tpu_custom_call.1} parent=35 // pred_check
          %p708 = pneg %p298
        $region62: #{tpu_custom_call.1} parent=35 // pred_check_branch
          %710 = sbr.rel (%p708) target = $region64
        $region63: #{tpu_custom_call.1} parent=35 // pred_region
          %s711 = sand.u32 %s47, 1
          %s712 = scalar_lea.sflag [#allocation16], %s711
          %s713 = sand.u32 %s288, 1
          %s714 = smul.addr %s713, 64
          %s715 = scalar_lea.vmem [#allocation15], %s714
          %717 = vsyncadd %s712, 0
          %s718 = smul.addr %s55, 16
          %s719 = smul.addr %s718, 4
          %s720 = scalar_lea.hbm %s9, %s719
          %s721 = sshll.u32 %s720, 4
          %s722 = int_to_ptr.hbm [resolvable:$true] %s721
          %s723 = sshll.u32 %s715, 4
          %s724 = int_to_ptr.vmem [resolvable:$true] %s723
          %729 = dma.hbm_to_vmem [thread:$0]  %s722, 1024, %s724, %s712, 64, 64, 4
        $region64: #{tpu_custom_call.1} parent=35 // pred_fallthru
          _
        // Predicated region
        $region65: #{tpu_custom_call.1} parent=35 // pred_check
          %p730 = pneg %p324
        $region66: #{tpu_custom_call.1} parent=35 // pred_check_branch
          %732 = sbr.rel (%p730) target = $region68
        $region67: #{tpu_custom_call.1} parent=35 // pred_region
          %s733 = sand.u32 %s47, 1
          %s734 = scalar_lea.sflag [#allocation16], %s733
          %s735 = sand.u32 %s314, 1
          %s736 = scalar_lea.vmem [#allocation17], %s735
          %738 = vsyncadd %s734, 0
          %s739 = scalar_lea.hbm %s10, %s55
          %s741 = sshll.u32 %s739, 4
          %s742 = int_to_ptr.hbm [resolvable:$true] %s741
          %s743 = sshll.u32 %s736, 4
          %s744 = int_to_ptr.vmem [resolvable:$true] %s743
          %746 = dma.hbm_to_vmem [thread:$0]  %s742, 16, %s744, %s734
        $region68: #{tpu_custom_call.1} parent=35 // pred_fallthru
          _
        // Predicated region
        $region69: #{tpu_custom_call.1} parent=35 // pred_check
          %p747 = pneg %p350
        $region70: #{tpu_custom_call.1} parent=35 // pred_check_branch
          %749 = sbr.rel (%p747) target = $region72
        $region71: #{tpu_custom_call.1} parent=35 // pred_region
          %s750 = sand.u32 %s47, 1
          %s751 = scalar_lea.sflag [#allocation19], %s750
          %s752 = sand.u32 %s340, 1
          %s753 = scalar_lea.vmem [#allocation18], %s752
          %755 = vsyncadd %s751, 0
          %s756 = scalar_lea.hbm %s11, %s55
          %s758 = sshll.u32 %s756, 4
          %s759 = int_to_ptr.hbm [resolvable:$true] %s758
          %s760 = sshll.u32 %s753, 4
          %s761 = int_to_ptr.vmem [resolvable:$true] %s760
          %763 = dma.hbm_to_vmem [thread:$0]  %s759, 16, %s761, %s751
        $region72: #{tpu_custom_call.1} parent=35 // pred_fallthru
          _
        // Predicated region
        $region73: #{tpu_custom_call.1} parent=35 // pred_check
          %p764 = pneg %p376
        $region74: #{tpu_custom_call.1} parent=35 // pred_check_branch
          %766 = sbr.rel (%p764) target = $region76
        $region75: #{tpu_custom_call.1} parent=35 // pred_region
          %s767 = sand.u32 %s47, 1
          %s768 = scalar_lea.sflag [#allocation19], %s767
          %s769 = sand.u32 %s366, 1
          %s770 = scalar_lea.vmem [#allocation20], %s769
          %772 = vsyncadd %s768, 0
          %s773 = scalar_lea.hbm %s12, %s55
          %s775 = sshll.u32 %s773, 4
          %s776 = int_to_ptr.hbm [resolvable:$true] %s775
          %s777 = sshll.u32 %s770, 4
          %s778 = int_to_ptr.vmem [resolvable:$true] %s777
          %780 = dma.hbm_to_vmem [thread:$0]  %s776, 16, %s778, %s768
        $region76: #{tpu_custom_call.1} parent=35 // pred_fallthru
          _
        // Predicated region
        $region77: #{tpu_custom_call.1} parent=35 // pred_check
          %p781 = pneg %p402
        $region78: #{tpu_custom_call.1} parent=35 // pred_check_branch
          %783 = sbr.rel (%p781) target = $region80
        $region79: #{tpu_custom_call.1} parent=35 // pred_region
          %s784 = sand.u32 %s47, 1
          %s785 = scalar_lea.sflag [#allocation22], %s784
          %s786 = sand.u32 %s392, 1
          %s787 = smul.addr %s786, 256
          %s788 = scalar_lea.vmem [#allocation21], %s787
          %790 = vsyncadd %s785, 0
          %s791 = smul.addr %s55, 64
          %s792 = smul.addr %s791, 4
          %s793 = scalar_lea.hbm %s13, %s792
          %s794 = sshll.u32 %s793, 4
          %s795 = int_to_ptr.hbm [resolvable:$true] %s794
          %s796 = sshll.u32 %s788, 4
          %s797 = int_to_ptr.vmem [resolvable:$true] %s796
          %802 = dma.hbm_to_vmem [thread:$0]  %s795, 4096, %s797, %s785, 256, 256, 16
        $region80: #{tpu_custom_call.1} parent=35 // pred_fallthru
          _
        // Predicated region
        $region81: #{tpu_custom_call.1} parent=35 // pred_check
          %p803 = pneg %p428
        $region82: #{tpu_custom_call.1} parent=35 // pred_check_branch
          %805 = sbr.rel (%p803) target = $region84
        $region83: #{tpu_custom_call.1} parent=35 // pred_region
          %p806 = scmp.lt.s32.totalorder %s55, 1
          %s807 = scalar_select %p806, %s55, 1
          %s808 = smul.addr %s807, 4
          %s809 = scalar_lea.vmem %s14, %s808
        $region84: #{tpu_custom_call.1} parent=35 // pred_fallthru
          _
        // Predicated region
        $region85: #{tpu_custom_call.1} parent=35 // pred_check
          %p810 = pneg %p454
        $region86: #{tpu_custom_call.1} parent=35 // pred_check_branch
          %812 = sbr.rel (%p810) target = $region88
        $region87: #{tpu_custom_call.1} parent=35 // pred_region
          %s813 = sand.u32 %s47, 1
          %s814 = scalar_lea.sflag [#allocation22], %s813
          %s815 = sand.u32 %s444, 1
          %s816 = smul.addr %s815, 256
          %s817 = scalar_lea.vmem [#allocation23], %s816
          %819 = vsyncadd %s814, 0
          %s820 = smul.addr %s55, 64
          %s821 = smul.addr %s820, 4
          %s822 = scalar_lea.hbm %s15, %s821
          %s823 = sshll.u32 %s822, 4
          %s824 = int_to_ptr.hbm [resolvable:$true] %s823
          %s825 = sshll.u32 %s817, 4
          %s826 = int_to_ptr.vmem [resolvable:$true] %s825
          %831 = dma.hbm_to_vmem [thread:$0]  %s824, 4096, %s826, %s814, 64, 64, 4
        $region88: #{tpu_custom_call.1} parent=35 // pred_fallthru
          _
        // Predicated region
        $region89: #{tpu_custom_call.1} parent=35 // pred_check
          %p832 = pneg %p480
        $region90: #{tpu_custom_call.1} parent=35 // pred_check_branch
          %834 = sbr.rel (%p832) target = $region92
        $region91: #{tpu_custom_call.1} parent=35 // pred_region
          %p835 = scmp.lt.s32.totalorder %s55, 1
          %s836 = scalar_select %p835, %s55, 1
          %s837 = scalar_lea.vmem %s16, %s836
        $region92: #{tpu_custom_call.1} parent=35 // pred_fallthru
          _
      $region36: #{tpu_custom_call.1} parent=5 // pred_fallthru
        _
      %p838 = scmp.le.s32.totalorder 1, %s47
      %p839 = scmp.lt.s32.totalorder %s47, 5
      %p840 = pnand %p838, %p839
      %p841 = pneg %p840
      // Predicated region
      $region93: #{tpu_custom_call.1} parent=5 // pred_check
        _
      $region94: #{tpu_custom_call.1} parent=5 // pred_check_branch
        %843 = sbr.rel (%p840) target = $region96
      $region95: #{tpu_custom_call.1} parent=5 // pred_region
        %s844 = ssub.s32 %s47, 1
        %s845 = sand.u32 %s72, 1
        %s846 = scalar_lea.sflag [#allocation4], %s845
        %s847 = sand.u32 %s72, 1
        %s848 = smul.addr %s847, 8
        %s849 = scalar_lea.vmem [#allocation3], %s848
        // Predicated region
        $region97: #{tpu_custom_call.1} parent=95 // pred_check
          %p850 = pneg %p85
        $region98: #{tpu_custom_call.1} parent=95 // pred_check_branch
          %852 = sbr.rel (%p850) target = $region100
        $region99: #{tpu_custom_call.1} parent=95 // pred_region
          %854 = dma.done %s846, 128
        $region100: #{tpu_custom_call.1} parent=95 // pred_fallthru
          _
        %s855 = sand.u32 %s52, 1
        %s856 = scalar_lea.sflag [#allocation7], %s855
        %s857 = sand.u32 %s98, 1
        %s858 = smul.addr %s857, 8
        %s859 = scalar_lea.vmem [#allocation6], %s858
        // Predicated region
        $region101: #{tpu_custom_call.1} parent=95 // pred_check
          %p860 = pneg %p111
        $region102: #{tpu_custom_call.1} parent=95 // pred_check_branch
          %862 = sbr.rel (%p860) target = $region104
        $region103: #{tpu_custom_call.1} parent=95 // pred_region
          %864 = dma.done %s856, 128
        $region104: #{tpu_custom_call.1} parent=95 // pred_fallthru
          _
        // Predicated region
        $region105: #{tpu_custom_call.1} parent=95 // pred_check
          %p865 = pneg %p132
        $region106: #{tpu_custom_call.1} parent=95 // pred_check_branch
          %867 = sbr.rel (%p865) target = $region108
        $region107: #{tpu_custom_call.1} parent=95 // pred_region
          %869 = dma.done [#allocation7], 128
        $region108: #{tpu_custom_call.1} parent=95 // pred_fallthru
          _
        // Predicated region
        $region109: #{tpu_custom_call.1} parent=95 // pred_check
          %p870 = pneg %p153
        $region110: #{tpu_custom_call.1} parent=95 // pred_check_branch
          %872 = sbr.rel (%p870) target = $region112
        $region111: #{tpu_custom_call.1} parent=95 // pred_region
          %874 = dma.done [#allocation10], 512
        $region112: #{tpu_custom_call.1} parent=95 // pred_fallthru
          _
        // Predicated region
        $region113: #{tpu_custom_call.1} parent=95 // pred_check
          %p875 = pneg %p174
        $region114: #{tpu_custom_call.1} parent=95 // pred_check_branch
          %877 = sbr.rel (%p875) target = $region116
        $region115: #{tpu_custom_call.1} parent=95 // pred_region
          %879 = dma.done [#allocation10], 16
        $region116: #{tpu_custom_call.1} parent=95 // pred_fallthru
          _
        %s880 = sand.u32 %s52, 1
        %s881 = scalar_lea.sflag [#allocation13], %s880
        %s882 = sand.u32 %s239, 1
        %s883 = smul.addr %s882, 192
        %s884 = scalar_lea.vmem [#allocation12], %s883
        // Predicated region
        $region117: #{tpu_custom_call.1} parent=95 // pred_check
          %p885 = pneg %p252
        $region118: #{tpu_custom_call.1} parent=95 // pred_check_branch
          %887 = sbr.rel (%p885) target = $region120
        $region119: #{tpu_custom_call.1} parent=95 // pred_region
          %889 = dma.done %s881, 3072
        $region120: #{tpu_custom_call.1} parent=95 // pred_fallthru
          _
        %s890 = sand.u32 %s52, 1
        %s891 = scalar_lea.sflag [#allocation13], %s890
        %s892 = sand.u32 %s265, 1
        %s893 = smul.addr %s892, 3
        %s894 = scalar_lea.vmem [#allocation14], %s893
        // Predicated region
        $region121: #{tpu_custom_call.1} parent=95 // pred_check
          %p895 = pneg %p278
        $region122: #{tpu_custom_call.1} parent=95 // pred_check_branch
          %897 = sbr.rel (%p895) target = $region124
        $region123: #{tpu_custom_call.1} parent=95 // pred_region
          %899 = dma.done %s891, 48
        $region124: #{tpu_custom_call.1} parent=95 // pred_fallthru
          _
        %s900 = sand.u32 %s52, 1
        %s901 = scalar_lea.sflag [#allocation16], %s900
        %s902 = sand.u32 %s291, 1
        %s903 = smul.addr %s902, 64
        %s904 = scalar_lea.vmem [#allocation15], %s903
        // Predicated region
        $region125: #{tpu_custom_call.1} parent=95 // pred_check
          %p905 = pneg %p304
        $region126: #{tpu_custom_call.1} parent=95 // pred_check_branch
          %907 = sbr.rel (%p905) target = $region128
        $region127: #{tpu_custom_call.1} parent=95 // pred_region
          %909 = dma.done %s901, 1024
        $region128: #{tpu_custom_call.1} parent=95 // pred_fallthru
          _
        %s910 = sand.u32 %s52, 1
        %s911 = scalar_lea.sflag [#allocation16], %s910
        %s912 = sand.u32 %s317, 1
        %s913 = scalar_lea.vmem [#allocation17], %s912
        // Predicated region
        $region129: #{tpu_custom_call.1} parent=95 // pred_check
          %p914 = pneg %p330
        $region130: #{tpu_custom_call.1} parent=95 // pred_check_branch
          %916 = sbr.rel (%p914) target = $region132
        $region131: #{tpu_custom_call.1} parent=95 // pred_region
          %918 = dma.done %s911, 16
        $region132: #{tpu_custom_call.1} parent=95 // pred_fallthru
          _
        %s919 = sand.u32 %s52, 1
        %s920 = scalar_lea.sflag [#allocation19], %s919
        %s921 = sand.u32 %s343, 1
        %s922 = scalar_lea.vmem [#allocation18], %s921
        // Predicated region
        $region133: #{tpu_custom_call.1} parent=95 // pred_check
          %p923 = pneg %p356
        $region134: #{tpu_custom_call.1} parent=95 // pred_check_branch
          %925 = sbr.rel (%p923) target = $region136
        $region135: #{tpu_custom_call.1} parent=95 // pred_region
          %927 = dma.done %s920, 16
        $region136: #{tpu_custom_call.1} parent=95 // pred_fallthru
          _
        %s928 = sand.u32 %s52, 1
        %s929 = scalar_lea.sflag [#allocation19], %s928
        %s930 = sand.u32 %s369, 1
        %s931 = scalar_lea.vmem [#allocation20], %s930
        // Predicated region
        $region137: #{tpu_custom_call.1} parent=95 // pred_check
          %p932 = pneg %p382
        $region138: #{tpu_custom_call.1} parent=95 // pred_check_branch
          %934 = sbr.rel (%p932) target = $region140
        $region139: #{tpu_custom_call.1} parent=95 // pred_region
          %936 = dma.done %s929, 16
        $region140: #{tpu_custom_call.1} parent=95 // pred_fallthru
          _
        %s937 = sand.u32 %s52, 1
        %s938 = scalar_lea.sflag [#allocation22], %s937
        %s939 = sand.u32 %s395, 1
        %s940 = smul.addr %s939, 256
        %s941 = scalar_lea.vmem [#allocation21], %s940
        // Predicated region
        $region141: #{tpu_custom_call.1} parent=95 // pred_check
          %p942 = pneg %p408
        $region142: #{tpu_custom_call.1} parent=95 // pred_check_branch
          %944 = sbr.rel (%p942) target = $region144
        $region143: #{tpu_custom_call.1} parent=95 // pred_region
          %946 = dma.done %s938, 4096
        $region144: #{tpu_custom_call.1} parent=95 // pred_fallthru
          _
        %s947 = sand.u32 %s52, 1
        %s948 = scalar_lea.sflag [#allocation22], %s947
        %s949 = sand.u32 %s447, 1
        %s950 = smul.addr %s949, 256
        %s951 = scalar_lea.vmem [#allocation23], %s950
        // Predicated region
        $region145: #{tpu_custom_call.1} parent=95 // pred_check
          %p952 = pneg %p460
        $region146: #{tpu_custom_call.1} parent=95 // pred_check_branch
          %954 = sbr.rel (%p952) target = $region148
        $region147: #{tpu_custom_call.1} parent=95 // pred_region
          %956 = dma.done %s948, 4096
        $region148: #{tpu_custom_call.1} parent=95 // pred_fallthru
          _
        %s957 = sand.u32 %s72, 1
        %s958 = scalar_lea.sflag [#allocation4], %s957
        %s959 = sand.u32 %s72, 1
        %s960 = smul.addr %s959, 8
        %s961 = scalar_lea.vmem [#allocation3], %s960
        %p962 = pneg %p85
        %p963 = pneg %p82
        %s964 = sand.u32 %s52, 1
        %s965 = scalar_lea.sflag [#allocation7], %s964
        %s966 = sand.u32 %s98, 1
        %s967 = smul.addr %s966, 8
        %s968 = scalar_lea.vmem [#allocation6], %s967
        %p969 = pneg %p111
        %p970 = pneg %p108
        %p971 = pneg %p132
        %p972 = pneg %p129
        %p973 = pneg %p153
        %p974 = pneg %p150
        %p975 = pneg %p174
        %p976 = pneg %p171
        %p977 = scmp.lt.s32.totalorder %s57, 1
        %s978 = scalar_select %p977, %s57, 1
        %s979 = scalar_lea.vmem %s5, %s978
        %p980 = pneg %p200
        %p981 = pneg %p197
        %p982 = scmp.lt.s32.totalorder %s57, 1
        %s983 = scalar_select %p982, %s57, 1
        %s984 = scalar_lea.vmem %s6, %s983
        %p985 = pneg %p226
        %p986 = pneg %p223
        %s987 = sand.u32 %s52, 1
        %s988 = scalar_lea.sflag [#allocation13], %s987
        %s989 = sand.u32 %s239, 1
        %s990 = smul.addr %s989, 192
        %s991 = scalar_lea.vmem [#allocation12], %s990
        %p992 = pneg %p252
        %p993 = pneg %p249
        %s994 = sand.u32 %s52, 1
        %s995 = scalar_lea.sflag [#allocation13], %s994
        %s996 = sand.u32 %s265, 1
        %s997 = smul.addr %s996, 3
        %s998 = scalar_lea.vmem [#allocation14], %s997
        %p999 = pneg %p278
        %p1000 = pneg %p275
        %s1001 = sand.u32 %s52, 1
        %s1002 = scalar_lea.sflag [#allocation16], %s1001
        %s1003 = sand.u32 %s291, 1
        %s1004 = smul.addr %s1003, 64
        %s1005 = scalar_lea.vmem [#allocation15], %s1004
        %p1006 = pneg %p304
        %p1007 = pneg %p301
        %s1008 = sand.u32 %s52, 1
        %s1009 = scalar_lea.sflag [#allocation16], %s1008
        %s1010 = sand.u32 %s317, 1
        %s1011 = scalar_lea.vmem [#allocation17], %s1010
        %p1012 = pneg %p330
        %p1013 = pneg %p327
        %s1014 = sand.u32 %s52, 1
        %s1015 = scalar_lea.sflag [#allocation19], %s1014
        %s1016 = sand.u32 %s343, 1
        %s1017 = scalar_lea.vmem [#allocation18], %s1016
        %p1018 = pneg %p356
        %p1019 = pneg %p353
        %s1020 = sand.u32 %s52, 1
        %s1021 = scalar_lea.sflag [#allocation19], %s1020
        %s1022 = sand.u32 %s369, 1
        %s1023 = scalar_lea.vmem [#allocation20], %s1022
        %p1024 = pneg %p382
        %p1025 = pneg %p379
        %s1026 = sand.u32 %s52, 1
        %s1027 = scalar_lea.sflag [#allocation22], %s1026
        %s1028 = sand.u32 %s395, 1
        %s1029 = smul.addr %s1028, 256
        %s1030 = scalar_lea.vmem [#allocation21], %s1029
        %p1031 = pneg %p408
        %p1032 = pneg %p405
        %p1033 = scmp.lt.s32.totalorder %s57, 1
        %s1034 = scalar_select %p1033, %s57, 1
        %s1035 = smul.addr %s1034, 4
        %s1036 = scalar_lea.vmem %s14, %s1035
        %p1037 = pneg %p434
        %p1038 = pneg %p431
        %s1039 = sand.u32 %s52, 1
        %s1040 = scalar_lea.sflag [#allocation22], %s1039
        %s1041 = sand.u32 %s447, 1
        %s1042 = smul.addr %s1041, 256
        %s1043 = scalar_lea.vmem [#allocation23], %s1042
        %p1044 = pneg %p460
        %p1045 = pneg %p457
        %p1046 = scmp.lt.s32.totalorder %s57, 1
        %s1047 = scalar_select %p1046, %s57, 1
        %s1048 = scalar_lea.vmem %s16, %s1047
        %p1049 = pneg %p486
        %p1050 = pneg %p483
        %p1051 = pneg %p507
        %p1052 = pneg %p504
        %p1053 = pneg %p528
        %p1054 = pneg %p525
        %p1055 = pneg %p554
        %p1056 = pneg %p551
        %s1057 = sand.u32 %s541, 1
        %s1058 = scalar_lea.sflag [#allocation5], %s1057
        %s1059 = sand.u32 %s541, 1
        %s1060 = smul.addr %s1059, 8
        %s1061 = scalar_lea.vmem [#allocation24], %s1060
        %p1062 = scmp.lt.s32.totalorder %s57, 1
        %s1063 = scalar_select %p1062, %s57, 1
        %s1064 = scalar_lea.vmem %s5, %s1063
        %p1065 = scmp.lt.s32.totalorder %s57, 1
        %s1066 = scalar_select %p1065, %s57, 1
        %s1067 = scalar_lea.vmem %s6, %s1066
        %p1068 = scmp.lt.s32.totalorder %s57, 1
        %s1069 = scalar_select %p1068, %s57, 1
        %s1070 = smul.addr %s1069, 4
        %s1071 = scalar_lea.vmem %s14, %s1070
        %p1072 = scmp.lt.s32.totalorder %s57, 1
        %s1073 = scalar_select %p1072, %s57, 1
        %s1074 = scalar_lea.vmem %s16, %s1073
        %p1076 = scmp.eq.s32.totalorder %s57, 0
        // Predicated region
        $region149: #{tpu_custom_call.1} parent=95 // pred_check
          %p1077 = pneg %p1076
        $region150: #{tpu_custom_call.1} parent=95 // pred_check_branch
          %1079 = sbr.rel (%p1077) target = $region152
        $region151: #{tpu_custom_call.1} parent=95 // pred_region
          %v1080 = vld [vmem:[%s849] sm:$0xff]
          %v1081 = vpack.c.bf16 %v1080, %v1080
          %v1082 = vld [vmem:[#allocation9] sm:$0xf]
          %v1083 = vld [vmem:[#allocation9 + $0x4] sm:$0xf]
          %v1084 = vld [vmem:[#allocation9 + $0x8] sm:$0xf]
          %v1085 = vld [vmem:[#allocation9 + $0xc] sm:$0xf]
          %v1086 = vld [vmem:[#allocation9 + $0x10] sm:$0xf]
          %v1087 = vld [vmem:[#allocation9 + $0x14] sm:$0xf]
          %v1088 = vld [vmem:[#allocation9 + $0x18] sm:$0xf]
          %v1089 = vld [vmem:[#allocation9 + $0x1c] sm:$0xf]
          %v1090 = vld [vmem:[#allocation11] sm:$0x1]
          %v1092 = vperm.slane %v1090, 0
          %v1102 = vunpack.c.l.b16 %v1082
          %v1103 = vunpack.c.l.b16 %v1083
          %v1104 = vunpack.c.l.b16 %v1084
          %v1105 = vunpack.c.l.b16 %v1085
          %v1106 = vunpack.c.l.b16 %v1086
          %v1107 = vunpack.c.l.b16 %v1087
          %v1108 = vunpack.c.l.b16 %v1088
          %v1109 = vunpack.c.l.b16 %v1089
          %v1110 = vpack.c.b16 %v1103, %v1102
          %v1111 = vpack.c.b16 %v1105, %v1104
          %v1112 = vpack.c.b16 %v1107, %v1106
          %v1113 = vpack.c.b16 %v1109, %v1108
          %vm1118 = vcmask 523264
          %v1120 = vsel %vm1118, %v1081, 0
          %1122 = vmatpush.bf16.msra.mxu0 0
          %1123 = vmatpush.bf16.msra.mxu0 0
          %1124 = vmatpush.bf16.msra.mxu0 0
          %1125 = vmatpush.bf16.msra.mxu0 0
          %1126 = vmatpush.bf16.msra.mxu0 %v1113
          %1127 = vmatpush.bf16.msra.mxu0 %v1112
          %1128 = vmatpush.bf16.msra.mxu0 %v1111
          %1129 = vmatpush.bf16.msra.mxu0 %v1110
          %1130 = vmatmul.bf16.gmra.mxu0 %v1120
          %v1131 = vpop.f32.mrf.mxu0
          %v1132 = vadd.f32 %v1092, %v1131
          %v1133 = vpop.f32.mrf.mxu0
          %1134 = vdwg.mxu0
          %v1135 = vld [vmem:[%s859] sm:$0xff]
          %v1136 = vadd.f32 %v1132, %v1135
          %1137 = vst [vmem:[#allocation2] sm:$0xff] %v1136
          %v1138 = vld [vmem:[#allocation8] sm:$0xff]
          %1139 = vst [vmem:[#allocation2 + $0x8] sm:$0xff] %v1138
        $region152: #{tpu_custom_call.1} parent=95 // pred_fallthru
          _
        %v1140 = vld [vmem:[#allocation2] sm:$0xff]
        %v1141 = vld [vmem:[#allocation2 + $0x8] sm:$0xff]
        %v1142 = vld [vmem:[%s1064] sm:$0x1]
        %v1143 = vld [vmem:[%s1067] sm:$0x1]
        %1144 = vadd.xlane.f32.xlu0 %v1140
        %v1145 = vpop.xlane.xlu0 %1144
        %1146 = vadd.xlane.f32.xlu0 %v1141
        %v1147 = vpop.xlane.xlu0 %1146
        %v1148 = vrcp.pop 128.0
        %v1149 = vmul.f32 128.0, %v1148
        %v1150 = vsub.f32 1.0, %v1149
        %v1151 = vmul.f32 %v1148, %v1150
        %v1152 = vadd.f32 %v1148, %v1151
        %vm1153 = vweird.f32 %v1148
        %v1154 = vsel %vm1153, %v1148, %v1152
        %v1155 = vmul.f32 %v1145, %v1154
        %v1156 = vmul.f32 %v1147, %v1154
        %v1157 = vsub.f32 %v1140, %v1155
        %v1158 = vsub.f32 %v1141, %v1156
        %v1159 = vmul.f32 %v1157, %v1157
        %v1160 = vmul.f32 %v1158, %v1158
        %1161 = vadd.xlane.f32.xlu0 %v1159
        %v1162 = vpop.xlane.xlu0 %1161
        %1163 = vadd.xlane.f32.xlu0 %v1160
        %v1164 = vpop.xlane.xlu0 %1163
        %v1165 = vmul.f32 %v1162, %v1154
        %v1166 = vmul.f32 %v1164, %v1154
        %v1167 = vadd.f32 %v1165, 1e-06
        %v1168 = vadd.f32 %v1166, 1e-06
        %v1169 = vrsqrt.pop %v1167
        %v1170 = vmul.f32 %v1169, %v1167
        %v1171 = vmul.f32 %v1170, %v1169
        %v1172 = vmul.f32 0.5, %v1171
        %v1173 = vsub.f32 1.5, %v1172
        %v1174 = vmul.f32 %v1169, %v1173
        %vm1175 = vweird.f32 %v1167
        %vm1176 = vweird.f32 %v1169
        %vm1177 = vmor %vm1175, %vm1176
        %v1178 = vsel %vm1177, %v1169, %v1174
        %v1179 = vrsqrt.pop %v1168
        %v1180 = vmul.f32 %v1179, %v1168
        %v1181 = vmul.f32 %v1180, %v1179
        %v1182 = vmul.f32 0.5, %v1181
        %v1183 = vsub.f32 1.5, %v1182
        %v1184 = vmul.f32 %v1179, %v1183
        %vm1185 = vweird.f32 %v1168
        %vm1186 = vweird.f32 %v1179
        %vm1187 = vmor %vm1185, %vm1186
        %v1188 = vsel %vm1187, %v1179, %v1184
        %v1189 = vmul.f32 %v1157, %v1178
        %v1190 = vmul.f32 %v1158, %v1188
        %v1192 = vperm.slane %v1142, 0
        %v1194 = vmul.f32 %v1189, %v1192
        %v1195 = vmul.f32 %v1190, %v1192
        %v1197 = vperm.slane %v1143, 0
        %v1199 = vadd.f32 %v1194, %v1197
        %v1200 = vadd.f32 %v1195, %v1197
        %v1201 = vpack.c.bf16 %v1200, %v1199
        %v1202 = vld [vmem:[%s884] sm:$0xff]
        %v1203 = vld [vmem:[%s884 + $0x8] sm:$0xf]
        %v1204 = vld [vmem:[%s884 + $0xc] sm:$0xff]
        %v1205 = vld [vmem:[%s884 + $0x14] sm:$0xf]
        %v1206 = vld [vmem:[%s884 + $0x18] sm:$0xff]
        %v1207 = vld [vmem:[%s884 + $0x20] sm:$0xf]
        %v1208 = vld [vmem:[%s884 + $0x24] sm:$0xff]
        %v1209 = vld [vmem:[%s884 + $0x2c] sm:$0xf]
        %v1210 = vld [vmem:[%s884 + $0x30] sm:$0xff]
        %v1211 = vld [vmem:[%s884 + $0x38] sm:$0xf]
        %v1212 = vld [vmem:[%s884 + $0x3c] sm:$0xff]
        %v1213 = vld [vmem:[%s884 + $0x44] sm:$0xf]
        %v1214 = vld [vmem:[%s884 + $0x48] sm:$0xff]
        %v1215 = vld [vmem:[%s884 + $0x50] sm:$0xf]
        %v1216 = vld [vmem:[%s884 + $0x54] sm:$0xff]
        %v1217 = vld [vmem:[%s884 + $0x5c] sm:$0xf]
        %v1218 = vld [vmem:[%s884 + $0x60] sm:$0xff]
        %v1219 = vld [vmem:[%s884 + $0x68] sm:$0xf]
        %v1220 = vld [vmem:[%s884 + $0x6c] sm:$0xff]
        %v1221 = vld [vmem:[%s884 + $0x74] sm:$0xf]
        %v1222 = vld [vmem:[%s884 + $0x78] sm:$0xff]
        %v1223 = vld [vmem:[%s884 + $0x80] sm:$0xf]
        %v1224 = vld [vmem:[%s884 + $0x84] sm:$0xff]
        %v1225 = vld [vmem:[%s884 + $0x8c] sm:$0xf]
        %v1226 = vld [vmem:[%s884 + $0x90] sm:$0xff]
        %v1227 = vld [vmem:[%s884 + $0x98] sm:$0xf]
        %v1228 = vld [vmem:[%s884 + $0x9c] sm:$0xff]
        %v1229 = vld [vmem:[%s884 + $0xa4] sm:$0xf]
        %v1230 = vld [vmem:[%s884 + $0xa8] sm:$0xff]
        %v1231 = vld [vmem:[%s884 + $0xb0] sm:$0xf]
        %v1232 = vld [vmem:[%s884 + $0xb4] sm:$0xff]
        %v1233 = vld [vmem:[%s884 + $0xbc] sm:$0xf]
        %v1234 = vld [vmem:[%s894] sm:$0x7]
        %v1236 = vperm.slane %v1234, 0
        %v1237 = vperm.slane %v1234, 1
        %v1238 = vperm.slane %v1234, 2
        %v1274 = vunpack.c.l.b16 %v1202
        %v1275 = vunpack.c.h.b16 %v1202
        %v1276 = vunpack.c.l.b16 %v1203
        %v1277 = vunpack.c.l.b16 %v1204
        %v1278 = vunpack.c.h.b16 %v1204
        %v1279 = vunpack.c.l.b16 %v1205
        %v1280 = vunpack.c.l.b16 %v1206
        %v1281 = vunpack.c.h.b16 %v1206
        %v1282 = vunpack.c.l.b16 %v1207
        %v1283 = vunpack.c.l.b16 %v1208
        %v1284 = vunpack.c.h.b16 %v1208
        %v1285 = vunpack.c.l.b16 %v1209
        %v1286 = vunpack.c.l.b16 %v1210
        %v1287 = vunpack.c.h.b16 %v1210
        %v1288 = vunpack.c.l.b16 %v1211
        %v1289 = vunpack.c.l.b16 %v1212
        %v1290 = vunpack.c.h.b16 %v1212
        %v1291 = vunpack.c.l.b16 %v1213
        %v1292 = vunpack.c.l.b16 %v1214
        %v1293 = vunpack.c.h.b16 %v1214
        %v1294 = vunpack.c.l.b16 %v1215
        %v1295 = vunpack.c.l.b16 %v1216
        %v1296 = vunpack.c.h.b16 %v1216
        %v1297 = vunpack.c.l.b16 %v1217
        %v1298 = vunpack.c.l.b16 %v1218
        %v1299 = vunpack.c.h.b16 %v1218
        %v1300 = vunpack.c.l.b16 %v1219
        %v1301 = vunpack.c.l.b16 %v1220
        %v1302 = vunpack.c.h.b16 %v1220
        %v1303 = vunpack.c.l.b16 %v1221
        %v1304 = vunpack.c.l.b16 %v1222
        %v1305 = vunpack.c.h.b16 %v1222
        %v1306 = vunpack.c.l.b16 %v1223
        %v1307 = vunpack.c.l.b16 %v1224
        %v1308 = vunpack.c.h.b16 %v1224
        %v1309 = vunpack.c.l.b16 %v1225
        %v1310 = vunpack.c.l.b16 %v1226
        %v1311 = vunpack.c.h.b16 %v1226
        %v1312 = vunpack.c.l.b16 %v1227
        %v1313 = vunpack.c.l.b16 %v1228
        %v1314 = vunpack.c.h.b16 %v1228
        %v1315 = vunpack.c.l.b16 %v1229
        %v1316 = vunpack.c.l.b16 %v1230
        %v1317 = vunpack.c.h.b16 %v1230
        %v1318 = vunpack.c.l.b16 %v1231
        %v1319 = vunpack.c.l.b16 %v1232
        %v1320 = vunpack.c.h.b16 %v1232
        %v1321 = vunpack.c.l.b16 %v1233
        %v1322 = vpack.c.b16 %v1277, %v1274
        %v1323 = vpack.c.b16 %v1278, %v1275
        %v1324 = vpack.c.b16 %v1279, %v1276
        %v1325 = vpack.c.b16 %v1283, %v1280
        %v1326 = vpack.c.b16 %v1284, %v1281
        %v1327 = vpack.c.b16 %v1285, %v1282
        %v1328 = vpack.c.b16 %v1289, %v1286
        %v1329 = vpack.c.b16 %v1290, %v1287
        %v1330 = vpack.c.b16 %v1291, %v1288
        %v1331 = vpack.c.b16 %v1295, %v1292
        %v1332 = vpack.c.b16 %v1296, %v1293
        %v1333 = vpack.c.b16 %v1297, %v1294
        %v1334 = vpack.c.b16 %v1301, %v1298
        %v1335 = vpack.c.b16 %v1302, %v1299
        %v1336 = vpack.c.b16 %v1303, %v1300
        %v1337 = vpack.c.b16 %v1307, %v1304
        %v1338 = vpack.c.b16 %v1308, %v1305
        %v1339 = vpack.c.b16 %v1309, %v1306
        %v1340 = vpack.c.b16 %v1313, %v1310
        %v1341 = vpack.c.b16 %v1314, %v1311
        %v1342 = vpack.c.b16 %v1315, %v1312
        %v1343 = vpack.c.b16 %v1319, %v1316
        %v1344 = vpack.c.b16 %v1320, %v1317
        %v1345 = vpack.c.b16 %v1321, %v1318
        %1370 = vmatpush.bf16.msra.mxu0 %v1343
        %1371 = vmatpush.bf16.msra.mxu0 %v1340
        %1372 = vmatpush.bf16.msra.mxu0 %v1337
        %1373 = vmatpush.bf16.msra.mxu0 %v1334
        %1374 = vmatpush.bf16.msra.mxu0 %v1331
        %1375 = vmatpush.bf16.msra.mxu0 %v1328
        %1376 = vmatpush.bf16.msra.mxu0 %v1325
        %1377 = vmatpush.bf16.msra.mxu0 %v1322
        %1378 = vmatmul.bf16.gmra.mxu0 %v1201
        %v1379 = vpop.f32.mrf.mxu0
        %v1380 = vadd.f32 %v1236, %v1379
        %v1381 = vpop.f32.mrf.mxu0
        %v1382 = vadd.f32 %v1236, %v1381
        %1383 = vdwg.mxu0
        %1384 = vmatpush.bf16.msra.mxu0 %v1344
        %1385 = vmatpush.bf16.msra.mxu0 %v1341
        %1386 = vmatpush.bf16.msra.mxu0 %v1338
        %1387 = vmatpush.bf16.msra.mxu0 %v1335
        %1388 = vmatpush.bf16.msra.mxu0 %v1332
        %1389 = vmatpush.bf16.msra.mxu0 %v1329
        %1390 = vmatpush.bf16.msra.mxu0 %v1326
        %1391 = vmatpush.bf16.msra.mxu0 %v1323
        %1392 = vmatmul.bf16.gmra.mxu0 %v1201
        %v1393 = vpop.f32.mrf.mxu0
        %v1394 = vadd.f32 %v1237, %v1393
        %v1395 = vpop.f32.mrf.mxu0
        %v1396 = vadd.f32 %v1237, %v1395
        %1397 = vdwg.mxu0
        %1398 = vmatpush.bf16.msra.mxu0 %v1345
        %1399 = vmatpush.bf16.msra.mxu0 %v1342
        %1400 = vmatpush.bf16.msra.mxu0 %v1339
        %1401 = vmatpush.bf16.msra.mxu0 %v1336
        %1402 = vmatpush.bf16.msra.mxu0 %v1333
        %1403 = vmatpush.bf16.msra.mxu0 %v1330
        %1404 = vmatpush.bf16.msra.mxu0 %v1327
        %1405 = vmatpush.bf16.msra.mxu0 %v1324
        %1406 = vmatmul.bf16.gmra.mxu0 %v1201
        %v1407 = vpop.f32.mrf.mxu0
        %v1408 = vadd.f32 %v1238, %v1407
        %v1409 = vpop.f32.mrf.mxu0
        %v1410 = vadd.f32 %v1238, %v1409
        %1411 = vdwg.mxu0
        %v1412 = vld [vmem:[%s904] sm:$0xf]
        %v1413 = vld [vmem:[%s904 + $0x4] sm:$0xf]
        %v1414 = vld [vmem:[%s904 + $0x8] sm:$0xf]
        %v1415 = vld [vmem:[%s904 + $0xc] sm:$0xf]
        %v1416 = vld [vmem:[%s904 + $0x10] sm:$0xf]
        %v1417 = vld [vmem:[%s904 + $0x14] sm:$0xf]
        %v1418 = vld [vmem:[%s904 + $0x18] sm:$0xf]
        %v1419 = vld [vmem:[%s904 + $0x1c] sm:$0xf]
        %v1420 = vld [vmem:[%s904 + $0x20] sm:$0xf]
        %v1421 = vld [vmem:[%s904 + $0x24] sm:$0xf]
        %v1422 = vld [vmem:[%s904 + $0x28] sm:$0xf]
        %v1423 = vld [vmem:[%s904 + $0x2c] sm:$0xf]
        %v1424 = vld [vmem:[%s904 + $0x30] sm:$0xf]
        %v1425 = vld [vmem:[%s904 + $0x34] sm:$0xf]
        %v1426 = vld [vmem:[%s904 + $0x38] sm:$0xf]
        %v1427 = vld [vmem:[%s904 + $0x3c] sm:$0xf]
        %v1428 = vmul.f32 %v1380, 0.17677669
        %v1429 = vmul.f32 %v1382, 0.17677669
        %vm1430 = vcmask 261120
        %v1432 = vsel %vm1430, %v1428, 0
        %v1435 = vsel %vm1430, %v1429, 0
        %v1438 = vsel %vm1430, %v1394, 0
        %v1441 = vsel %vm1430, %v1396, 0
        %1443 = vmatpush.xpose.msra.mxu0 0.0
        %1444 = vmatpush.xpose.msra.mxu0 0.0
        %1445 = vmatpush.xpose.msra.mxu0 0.0
        %1446 = vmatpush.xpose.msra.mxu0 0.0
        %1447 = vmatpush.xpose.msra.mxu0 0.0
        %1448 = vmatpush.xpose.msra.mxu0 0.0
        %1449 = vmatpush.xpose.msra.mxu0 0.0
        %1450 = vmatpush.xpose.msra.mxu0 0.0
        %1451 = vmatpush.xpose.msra.mxu0 0.0
        %1452 = vmatpush.xpose.msra.mxu0 0.0
        %1453 = vmatpush.xpose.msra.mxu0 0.0
        %1454 = vmatpush.xpose.msra.mxu0 0.0
        %1455 = vmatpush.xpose.msra.mxu0 0.0
        %1456 = vmatpush.xpose.msra.mxu0 0.0
        %1457 = vmatpush.xpose.msra.mxu0 %v1441
        %1458 = vmatpush.xpose.msra.mxu0 %v1438
        %1459 = vmatmul.f32.gmra.mxu0 %v1432
        %v1460 = vpop.f32.mrf.mxu0
        %v1461 = vadd.f32 0.0, %v1460
        %1462 = vmatmul.f32.gmra.mxu0 %v1435
        %v1463 = vpop.f32.mrf.mxu0
        %v1464 = vadd.f32 0.0, %v1463
        %1465 = vdwg.mxu0
        %vm1466 = vcmask 130048
        %v1467 = vsel %vm1466, %v1461, -inf
        %1468 = vmax.xlane.f32.xlu0 %v1467
        %v1469 = vpop.xlane.xlu0 %1468
        %v1470 = vsel %vm1466, %v1464, -inf
        %1471 = vmax.xlane.f32.xlu0 %v1470
        %v1472 = vpop.xlane.xlu0 %1471
        %v1473 = vsub.f32 %v1461, %v1469
        %v1474 = vsub.f32 %v1464, %v1472
        %v1475 = vmul.f32 %v1473, 1.442695
        %v1476 = vpow.pop %v1475
        %v1477 = vmul.f32 %v1474, 1.442695
        %v1478 = vpow.pop %v1477
        %v1479 = vsel %vm1466, %v1476, 0.0
        %1480 = vadd.xlane.f32.xlu0 %v1479
        %v1481 = vpop.xlane.xlu0 %1480
        %v1482 = vsel %vm1466, %v1478, 0.0
        %1483 = vadd.xlane.f32.xlu0 %v1482
        %v1484 = vpop.xlane.xlu0 %1483
        %v1485 = vrcp.pop %v1481
        %v1486 = vrcp.pop %v1484
        %v1487 = vmul.f32 %v1476, %v1485
        %v1488 = vmul.f32 %v1478, %v1486
        %v1489 = vpack.c.bf16 %v1488, %v1487
        %v1490 = vpack.c.bf16 %v1410, %v1408
        %v1492 = vsel %vm1466, %v1489, 0
        %1494 = vmatpush.bf16.msra.mxu0 0
        %1495 = vmatpush.bf16.msra.mxu0 0
        %1496 = vmatpush.bf16.msra.mxu0 0
        %1497 = vmatpush.bf16.msra.mxu0 0
        %1498 = vmatpush.bf16.msra.mxu0 0
        %1499 = vmatpush.bf16.msra.mxu0 0
        %1500 = vmatpush.bf16.msra.mxu0 0
        %1501 = vmatpush.bf16.msra.mxu0 %v1490
        %1502 = vmatmul.bf16.gmra.mxu0 %v1492
        %v1503 = vpop.f32.mrf.mxu0
        %v1504 = vadd.f32 0.0, %v1503
        %v1505 = vpop.f32.mrf.mxu0
        %v1506 = vadd.f32 0.0, %v1505
        %1507 = vdwg.mxu0
        %v1508 = vpack.c.bf16 %v1506, %v1504
        %1509 = vrot.lane.b32.xlu0 %v1428, 96
        %v1510 = vpop.permute.xlu0 %1509
        %1511 = vrot.lane.b32.xlu0 %v1429, 96
        %v1512 = vpop.permute.xlu0 %1511
        %1513 = vrot.lane.b32.xlu0 %v1394, 96
        %v1514 = vpop.permute.xlu0 %1513
        %1515 = vrot.lane.b32.xlu0 %v1396, 96
        %v1516 = vpop.permute.xlu0 %1515
        %v1517 = vsel %vm1430, %v1510, 0
        %v1519 = vsel %vm1430, %v1512, 0
        %v1521 = vsel %vm1430, %v1514, 0
        %v1523 = vsel %vm1430, %v1516, 0
        %1525 = vmatpush.xpose.msra.mxu0 0.0
        %1526 = vmatpush.xpose.msra.mxu0 0.0
        %1527 = vmatpush.xpose.msra.mxu0 0.0
        %1528 = vmatpush.xpose.msra.mxu0 0.0
        %1529 = vmatpush.xpose.msra.mxu0 0.0
        %1530 = vmatpush.xpose.msra.mxu0 0.0
        %1531 = vmatpush.xpose.msra.mxu0 0.0
        %1532 = vmatpush.xpose.msra.mxu0 0.0
        %1533 = vmatpush.xpose.msra.mxu0 0.0
        %1534 = vmatpush.xpose.msra.mxu0 0.0
        %1535 = vmatpush.xpose.msra.mxu0 0.0
        %1536 = vmatpush.xpose.msra.mxu0 0.0
        %1537 = vmatpush.xpose.msra.mxu0 0.0
        %1538 = vmatpush.xpose.msra.mxu0 0.0
        %1539 = vmatpush.xpose.msra.mxu0 %v1523
        %1540 = vmatpush.xpose.msra.mxu0 %v1521
        %1541 = vmatmul.f32.gmra.mxu0 %v1517
        %v1542 = vpop.f32.mrf.mxu0
        %v1543 = vadd.f32 0.0, %v1542
        %1544 = vmatmul.f32.gmra.mxu0 %v1519
        %v1545 = vpop.f32.mrf.mxu0
        %v1546 = vadd.f32 0.0, %v1545
        %1547 = vdwg.mxu0
        %v1548 = vsel %vm1466, %v1543, -inf
        %1549 = vmax.xlane.f32.xlu0 %v1548
        %v1550 = vpop.xlane.xlu0 %1549
        %v1551 = vsel %vm1466, %v1546, -inf
        %1552 = vmax.xlane.f32.xlu0 %v1551
        %v1553 = vpop.xlane.xlu0 %1552
        %v1554 = vsub.f32 %v1543, %v1550
        %v1555 = vsub.f32 %v1546, %v1553
        %v1556 = vmul.f32 %v1554, 1.442695
        %v1557 = vpow.pop %v1556
        %v1558 = vmul.f32 %v1555, 1.442695
        %v1559 = vpow.pop %v1558
        %v1560 = vsel %vm1466, %v1557, 0.0
        %1561 = vadd.xlane.f32.xlu0 %v1560
        %v1562 = vpop.xlane.xlu0 %1561
        %v1563 = vsel %vm1466, %v1559, 0.0
        %1564 = vadd.xlane.f32.xlu0 %v1563
        %v1565 = vpop.xlane.xlu0 %1564
        %v1566 = vrcp.pop %v1562
        %v1567 = vrcp.pop %v1565
        %v1568 = vmul.f32 %v1557, %v1566
        %v1569 = vmul.f32 %v1559, %v1567
        %v1570 = vpack.c.bf16 %v1569, %v1568
        %1572 = vrot.lane.b32.xlu0 %v1490, 96
        %v1573 = vpop.permute.xlu0 %1572
        %v1576 = vsel %vm1466, %v1570, 0
        %1578 = vmatpush.bf16.msra.mxu0 0
        %1579 = vmatpush.bf16.msra.mxu0 0
        %1580 = vmatpush.bf16.msra.mxu0 0
        %1581 = vmatpush.bf16.msra.mxu0 0
        %1582 = vmatpush.bf16.msra.mxu0 0
        %1583 = vmatpush.bf16.msra.mxu0 0
        %1584 = vmatpush.bf16.msra.mxu0 0
        %1585 = vmatpush.bf16.msra.mxu0 %v1573
        %1586 = vmatmul.bf16.gmra.mxu0 %v1576
        %v1587 = vpop.f32.mrf.mxu0
        %v1588 = vadd.f32 0.0, %v1587
        %v1589 = vpop.f32.mrf.mxu0
        %v1590 = vadd.f32 0.0, %v1589
        %1591 = vdwg.mxu0
        %v1592 = vpack.c.bf16 %v1590, %v1588
        %v1597 = vunpack.c.l.b16 %v1416
        %v1598 = vunpack.c.l.b16 %v1417
        %v1599 = vunpack.c.l.b16 %v1418
        %v1600 = vunpack.c.l.b16 %v1419
        %v1601 = vpack.c.b16 %v1598, %v1597
        %v1602 = vpack.c.b16 %v1600, %v1599
        %v1606 = vsel %vm1430, %v1592, 0
        %1608 = vmatpush.bf16.msra.mxu0 0
        %1609 = vmatpush.bf16.msra.mxu0 0
        %1610 = vmatpush.bf16.msra.mxu0 0
        %1611 = vmatpush.bf16.msra.mxu0 0
        %1612 = vmatpush.bf16.msra.mxu0 0
        %1613 = vmatpush.bf16.msra.mxu0 0
        %1614 = vmatpush.bf16.msra.mxu0 %v1602
        %1615 = vmatpush.bf16.msra.mxu0 %v1601
        %1616 = vmatmul.bf16.gmra.mxu0 %v1606
        %v1617 = vpop.f32.mrf.mxu0
        %v1618 = vadd.f32 0.0, %v1617
        %v1619 = vpop.f32.mrf.mxu0
        %v1620 = vadd.f32 0.0, %v1619
        %1621 = vdwg.mxu0
        %v1626 = vunpack.c.l.b16 %v1412
        %v1627 = vunpack.c.l.b16 %v1413
        %v1628 = vunpack.c.l.b16 %v1414
        %v1629 = vunpack.c.l.b16 %v1415
        %v1630 = vpack.c.b16 %v1627, %v1626
        %v1631 = vpack.c.b16 %v1629, %v1628
        %v1635 = vsel %vm1430, %v1508, 0
        %1637 = vmatpush.bf16.msra.mxu0 0
        %1638 = vmatpush.bf16.msra.mxu0 0
        %1639 = vmatpush.bf16.msra.mxu0 0
        %1640 = vmatpush.bf16.msra.mxu0 0
        %1641 = vmatpush.bf16.msra.mxu0 0
        %1642 = vmatpush.bf16.msra.mxu0 0
        %1643 = vmatpush.bf16.msra.mxu0 %v1631
        %1644 = vmatpush.bf16.msra.mxu0 %v1630
        %1645 = vmatmul.bf16.gmra.mxu0 %v1635
        %v1646 = vpop.f32.mrf.mxu0
        %v1647 = vadd.f32 %v1618, %v1646
        %v1648 = vpop.f32.mrf.mxu0
        %v1649 = vadd.f32 %v1620, %v1648
        %1650 = vdwg.mxu0
        %1651 = vrot.lane.b32.xlu0 %v1428, 64
        %v1652 = vpop.permute.xlu0 %1651
        %1653 = vrot.lane.b32.xlu0 %v1429, 64
        %v1654 = vpop.permute.xlu0 %1653
        %1655 = vrot.lane.b32.xlu0 %v1394, 64
        %v1656 = vpop.permute.xlu0 %1655
        %1657 = vrot.lane.b32.xlu0 %v1396, 64
        %v1658 = vpop.permute.xlu0 %1657
        %v1659 = vsel %vm1430, %v1652, 0
        %v1661 = vsel %vm1430, %v1654, 0
        %v1663 = vsel %vm1430, %v1656, 0
        %v1665 = vsel %vm1430, %v1658, 0
        %1667 = vmatpush.xpose.msra.mxu0 0.0
        %1668 = vmatpush.xpose.msra.mxu0 0.0
        %1669 = vmatpush.xpose.msra.mxu0 0.0
        %1670 = vmatpush.xpose.msra.mxu0 0.0
        %1671 = vmatpush.xpose.msra.mxu0 0.0
        %1672 = vmatpush.xpose.msra.mxu0 0.0
        %1673 = vmatpush.xpose.msra.mxu0 0.0
        %1674 = vmatpush.xpose.msra.mxu0 0.0
        %1675 = vmatpush.xpose.msra.mxu0 0.0
        %1676 = vmatpush.xpose.msra.mxu0 0.0
        %1677 = vmatpush.xpose.msra.mxu0 0.0
        %1678 = vmatpush.xpose.msra.mxu0 0.0
        %1679 = vmatpush.xpose.msra.mxu0 0.0
        %1680 = vmatpush.xpose.msra.mxu0 0.0
        %1681 = vmatpush.xpose.msra.mxu0 %v1665
        %1682 = vmatpush.xpose.msra.mxu0 %v1663
        %1683 = vmatmul.f32.gmra.mxu0 %v1659
        %v1684 = vpop.f32.mrf.mxu0
        %v1685 = vadd.f32 0.0, %v1684
        %1686 = vmatmul.f32.gmra.mxu0 %v1661
        %v1687 = vpop.f32.mrf.mxu0
        %v1688 = vadd.f32 0.0, %v1687
        %1689 = vdwg.mxu0
        %v1690 = vsel %vm1466, %v1685, -inf
        %1691 = vmax.xlane.f32.xlu0 %v1690
        %v1692 = vpop.xlane.xlu0 %1691
        %v1693 = vsel %vm1466, %v1688, -inf
        %1694 = vmax.xlane.f32.xlu0 %v1693
        %v1695 = vpop.xlane.xlu0 %1694
        %v1696 = vsub.f32 %v1685, %v1692
        %v1697 = vsub.f32 %v1688, %v1695
        %v1698 = vmul.f32 %v1696, 1.442695
        %v1699 = vpow.pop %v1698
        %v1700 = vmul.f32 %v1697, 1.442695
        %v1701 = vpow.pop %v1700
        %v1702 = vsel %vm1466, %v1699, 0.0
        %1703 = vadd.xlane.f32.xlu0 %v1702
        %v1704 = vpop.xlane.xlu0 %1703
        %v1705 = vsel %vm1466, %v1701, 0.0
        %1706 = vadd.xlane.f32.xlu0 %v1705
        %v1707 = vpop.xlane.xlu0 %1706
        %v1708 = vrcp.pop %v1704
        %v1709 = vrcp.pop %v1707
        %v1710 = vmul.f32 %v1699, %v1708
        %v1711 = vmul.f32 %v1701, %v1709
        %v1712 = vpack.c.bf16 %v1711, %v1710
        %1713 = vrot.lane.b32.xlu0 %v1490, 64
        %v1714 = vpop.permute.xlu0 %1713
        %v1717 = vsel %vm1466, %v1712, 0
        %1719 = vmatpush.bf16.msra.mxu0 0
        %1720 = vmatpush.bf16.msra.mxu0 0
        %1721 = vmatpush.bf16.msra.mxu0 0
        %1722 = vmatpush.bf16.msra.mxu0 0
        %1723 = vmatpush.bf16.msra.mxu0 0
        %1724 = vmatpush.bf16.msra.mxu0 0
        %1725 = vmatpush.bf16.msra.mxu0 0
        %1726 = vmatpush.bf16.msra.mxu0 %v1714
        %1727 = vmatmul.bf16.gmra.mxu0 %v1717
        %v1728 = vpop.f32.mrf.mxu0
        %v1729 = vadd.f32 0.0, %v1728
        %v1730 = vpop.f32.mrf.mxu0
        %v1731 = vadd.f32 0.0, %v1730
        %1732 = vdwg.mxu0
        %v1733 = vpack.c.bf16 %v1731, %v1729
        %v1738 = vunpack.c.l.b16 %v1420
        %v1739 = vunpack.c.l.b16 %v1421
        %v1740 = vunpack.c.l.b16 %v1422
        %v1741 = vunpack.c.l.b16 %v1423
        %v1742 = vpack.c.b16 %v1739, %v1738
        %v1743 = vpack.c.b16 %v1741, %v1740
        %v1747 = vsel %vm1430, %v1733, 0
        %1749 = vmatpush.bf16.msra.mxu0 0
        %1750 = vmatpush.bf16.msra.mxu0 0
        %1751 = vmatpush.bf16.msra.mxu0 0
        %1752 = vmatpush.bf16.msra.mxu0 0
        %1753 = vmatpush.bf16.msra.mxu0 0
        %1754 = vmatpush.bf16.msra.mxu0 0
        %1755 = vmatpush.bf16.msra.mxu0 %v1743
        %1756 = vmatpush.bf16.msra.mxu0 %v1742
        %1757 = vmatmul.bf16.gmra.mxu0 %v1747
        %v1758 = vpop.f32.mrf.mxu0
        %v1759 = vadd.f32 0.0, %v1758
        %v1760 = vpop.f32.mrf.mxu0
        %v1761 = vadd.f32 0.0, %v1760
        %1762 = vdwg.mxu0
        %v1763 = vadd.f32 %v1647, %v1759
        %v1764 = vadd.f32 %v1649, %v1761
        %1765 = vrot.lane.b32.xlu0 %v1428, 32
        %v1766 = vpop.permute.xlu0 %1765
        %1767 = vrot.lane.b32.xlu0 %v1429, 32
        %v1768 = vpop.permute.xlu0 %1767
        %1769 = vrot.lane.b32.xlu0 %v1394, 32
        %v1770 = vpop.permute.xlu0 %1769
        %1771 = vrot.lane.b32.xlu0 %v1396, 32
        %v1772 = vpop.permute.xlu0 %1771
        %v1773 = vsel %vm1430, %v1766, 0
        %v1775 = vsel %vm1430, %v1768, 0
        %v1777 = vsel %vm1430, %v1770, 0
        %v1779 = vsel %vm1430, %v1772, 0
        %1781 = vmatpush.xpose.msra.mxu0 0.0
        %1782 = vmatpush.xpose.msra.mxu0 0.0
        %1783 = vmatpush.xpose.msra.mxu0 0.0
        %1784 = vmatpush.xpose.msra.mxu0 0.0
        %1785 = vmatpush.xpose.msra.mxu0 0.0
        %1786 = vmatpush.xpose.msra.mxu0 0.0
        %1787 = vmatpush.xpose.msra.mxu0 0.0
        %1788 = vmatpush.xpose.msra.mxu0 0.0
        %1789 = vmatpush.xpose.msra.mxu0 0.0
        %1790 = vmatpush.xpose.msra.mxu0 0.0
        %1791 = vmatpush.xpose.msra.mxu0 0.0
        %1792 = vmatpush.xpose.msra.mxu0 0.0
        %1793 = vmatpush.xpose.msra.mxu0 0.0
        %1794 = vmatpush.xpose.msra.mxu0 0.0
        %1795 = vmatpush.xpose.msra.mxu0 %v1779
        %1796 = vmatpush.xpose.msra.mxu0 %v1777
        %1797 = vmatmul.f32.gmra.mxu0 %v1773
        %v1798 = vpop.f32.mrf.mxu0
        %v1799 = vadd.f32 0.0, %v1798
        %1800 = vmatmul.f32.gmra.mxu0 %v1775
        %v1801 = vpop.f32.mrf.mxu0
        %v1802 = vadd.f32 0.0, %v1801
        %1803 = vdwg.mxu0
        %v1804 = vsel %vm1466, %v1799, -inf
        %1805 = vmax.xlane.f32.xlu0 %v1804
        %v1806 = vpop.xlane.xlu0 %1805
        %v1807 = vsel %vm1466, %v1802, -inf
        %1808 = vmax.xlane.f32.xlu0 %v1807
        %v1809 = vpop.xlane.xlu0 %1808
        %v1810 = vsub.f32 %v1799, %v1806
        %v1811 = vsub.f32 %v1802, %v1809
        %v1812 = vmul.f32 %v1810, 1.442695
        %v1813 = vpow.pop %v1812
        %v1814 = vmul.f32 %v1811, 1.442695
        %v1815 = vpow.pop %v1814
        %v1816 = vsel %vm1466, %v1813, 0.0
        %1817 = vadd.xlane.f32.xlu0 %v1816
        %v1818 = vpop.xlane.xlu0 %1817
        %v1819 = vsel %vm1466, %v1815, 0.0
        %1820 = vadd.xlane.f32.xlu0 %v1819
        %v1821 = vpop.xlane.xlu0 %1820
        %v1822 = vrcp.pop %v1818
        %v1823 = vrcp.pop %v1821
        %v1824 = vmul.f32 %v1813, %v1822
        %v1825 = vmul.f32 %v1815, %v1823
        %v1826 = vpack.c.bf16 %v1825, %v1824
        %1827 = vrot.lane.b32.xlu0 %v1490, 32
        %v1828 = vpop.permute.xlu0 %1827
        %v1831 = vsel %vm1466, %v1826, 0
        %1833 = vmatpush.bf16.msra.mxu0 0
        %1834 = vmatpush.bf16.msra.mxu0 0
        %1835 = vmatpush.bf16.msra.mxu0 0
        %1836 = vmatpush.bf16.msra.mxu0 0
        %1837 = vmatpush.bf16.msra.mxu0 0
        %1838 = vmatpush.bf16.msra.mxu0 0
        %1839 = vmatpush.bf16.msra.mxu0 0
        %1840 = vmatpush.bf16.msra.mxu0 %v1828
        %1841 = vmatmul.bf16.gmra.mxu0 %v1831
        %v1842 = vpop.f32.mrf.mxu0
        %v1843 = vadd.f32 0.0, %v1842
        %v1844 = vpop.f32.mrf.mxu0
        %v1845 = vadd.f32 0.0, %v1844
        %1846 = vdwg.mxu0
        %v1847 = vpack.c.bf16 %v1845, %v1843
        %v1852 = vunpack.c.l.b16 %v1424
        %v1853 = vunpack.c.l.b16 %v1425
        %v1854 = vunpack.c.l.b16 %v1426
        %v1855 = vunpack.c.l.b16 %v1427
        %v1856 = vpack.c.b16 %v1853, %v1852
        %v1857 = vpack.c.b16 %v1855, %v1854
        %v1861 = vsel %vm1430, %v1847, 0
        %1863 = vmatpush.bf16.msra.mxu0 0
        %1864 = vmatpush.bf16.msra.mxu0 0
        %1865 = vmatpush.bf16.msra.mxu0 0
        %1866 = vmatpush.bf16.msra.mxu0 0
        %1867 = vmatpush.bf16.msra.mxu0 0
        %1868 = vmatpush.bf16.msra.mxu0 0
        %1869 = vmatpush.bf16.msra.mxu0 %v1857
        %1870 = vmatpush.bf16.msra.mxu0 %v1856
        %1871 = vmatmul.bf16.gmra.mxu0 %v1861
        %v1872 = vpop.f32.mrf.mxu0
        %v1873 = vadd.f32 0.0, %v1872
        %v1874 = vpop.f32.mrf.mxu0
        %v1875 = vadd.f32 0.0, %v1874
        %1876 = vdwg.mxu0
        %v1877 = vadd.f32 %v1763, %v1873
        %v1878 = vadd.f32 %v1764, %v1875
        %v1879 = vadd.f32 %v1140, %v1877
        %v1880 = vadd.f32 %v1141, %v1878
        %v1881 = vld [vmem:[%s913] sm:$0x1]
        %v1883 = vperm.slane %v1881, 0
        %v1885 = vadd.f32 %v1879, %v1883
        %v1886 = vadd.f32 %v1880, %v1883
        %v1887 = vld [vmem:[%s922] sm:$0x1]
        %v1888 = vld [vmem:[%s931] sm:$0x1]
        %1889 = vadd.xlane.f32.xlu0 %v1885
        %v1890 = vpop.xlane.xlu0 %1889
        %1891 = vadd.xlane.f32.xlu0 %v1886
        %v1892 = vpop.xlane.xlu0 %1891
        %v1893 = vmul.f32 %v1890, %v1154
        %v1894 = vmul.f32 %v1892, %v1154
        %v1895 = vsub.f32 %v1885, %v1893
        %v1896 = vsub.f32 %v1886, %v1894
        %v1897 = vmul.f32 %v1895, %v1895
        %v1898 = vmul.f32 %v1896, %v1896
        %1899 = vadd.xlane.f32.xlu0 %v1897
        %v1900 = vpop.xlane.xlu0 %1899
        %1901 = vadd.xlane.f32.xlu0 %v1898
        %v1902 = vpop.xlane.xlu0 %1901
        %v1903 = vmul.f32 %v1900, %v1154
        %v1904 = vmul.f32 %v1902, %v1154
        %v1905 = vadd.f32 %v1903, 1e-06
        %v1906 = vadd.f32 %v1904, 1e-06
        %v1907 = vrsqrt.pop %v1905
        %v1908 = vmul.f32 %v1907, %v1905
        %v1909 = vmul.f32 %v1908, %v1907
        %v1910 = vmul.f32 0.5, %v1909
        %v1911 = vsub.f32 1.5, %v1910
        %v1912 = vmul.f32 %v1907, %v1911
        %vm1913 = vweird.f32 %v1905
        %vm1914 = vweird.f32 %v1907
        %vm1915 = vmor %vm1913, %vm1914
        %v1916 = vsel %vm1915, %v1907, %v1912
        %v1917 = vrsqrt.pop %v1906
        %v1918 = vmul.f32 %v1917, %v1906
        %v1919 = vmul.f32 %v1918, %v1917
        %v1920 = vmul.f32 0.5, %v1919
        %v1921 = vsub.f32 1.5, %v1920
        %v1922 = vmul.f32 %v1917, %v1921
        %vm1923 = vweird.f32 %v1906
        %vm1924 = vweird.f32 %v1917
        %vm1925 = vmor %vm1923, %vm1924
        %v1926 = vsel %vm1925, %v1917, %v1922
        %v1927 = vmul.f32 %v1895, %v1916
        %v1928 = vmul.f32 %v1896, %v1926
        %v1930 = vperm.slane %v1887, 0
        %v1932 = vmul.f32 %v1927, %v1930
        %v1933 = vmul.f32 %v1928, %v1930
        %v1935 = vperm.slane %v1888, 0
        %v1937 = vadd.f32 %v1932, %v1935
        %v1938 = vadd.f32 %v1933, %v1935
        %v1939 = vpack.c.bf16 %v1938, %v1937
        %v1940 = vld [vmem:[%s941] sm:$0xff]
        %v1941 = vld [vmem:[%s941 + $0x8] sm:$0xff]
        %v1942 = vld [vmem:[%s941 + $0x10] sm:$0xff]
        %v1943 = vld [vmem:[%s941 + $0x18] sm:$0xff]
        %v1944 = vld [vmem:[%s941 + $0x20] sm:$0xff]
        %v1945 = vld [vmem:[%s941 + $0x28] sm:$0xff]
        %v1946 = vld [vmem:[%s941 + $0x30] sm:$0xff]
        %v1947 = vld [vmem:[%s941 + $0x38] sm:$0xff]
        %v1948 = vld [vmem:[%s941 + $0x40] sm:$0xff]
        %v1949 = vld [vmem:[%s941 + $0x48] sm:$0xff]
        %v1950 = vld [vmem:[%s941 + $0x50] sm:$0xff]
        %v1951 = vld [vmem:[%s941 + $0x58] sm:$0xff]
        %v1952 = vld [vmem:[%s941 + $0x60] sm:$0xff]
        %v1953 = vld [vmem:[%s941 + $0x68] sm:$0xff]
        %v1954 = vld [vmem:[%s941 + $0x70] sm:$0xff]
        %v1955 = vld [vmem:[%s941 + $0x78] sm:$0xff]
        %v1956 = vld [vmem:[%s941 + $0x80] sm:$0xff]
        %v1957 = vld [vmem:[%s941 + $0x88] sm:$0xff]
        %v1958 = vld [vmem:[%s941 + $0x90] sm:$0xff]
        %v1959 = vld [vmem:[%s941 + $0x98] sm:$0xff]
        %v1960 = vld [vmem:[%s941 + $0xa0] sm:$0xff]
        %v1961 = vld [vmem:[%s941 + $0xa8] sm:$0xff]
        %v1962 = vld [vmem:[%s941 + $0xb0] sm:$0xff]
        %v1963 = vld [vmem:[%s941 + $0xb8] sm:$0xff]
        %v1964 = vld [vmem:[%s941 + $0xc0] sm:$0xff]
        %v1965 = vld [vmem:[%s941 + $0xc8] sm:$0xff]
        %v1966 = vld [vmem:[%s941 + $0xd0] sm:$0xff]
        %v1967 = vld [vmem:[%s941 + $0xd8] sm:$0xff]
        %v1968 = vld [vmem:[%s941 + $0xe0] sm:$0xff]
        %v1969 = vld [vmem:[%s941 + $0xe8] sm:$0xff]
        %v1970 = vld [vmem:[%s941 + $0xf0] sm:$0xff]
        %v1971 = vld [vmem:[%s941 + $0xf8] sm:$0xff]
        %v1972 = vld [vmem:[%s1071] sm:$0xf]
        %v1974 = vperm.slane %v1972, 0
        %v1975 = vperm.slane %v1972, 1
        %v1976 = vperm.slane %v1972, 2
        %v1977 = vperm.slane %v1972, 3
        %v2014 = vunpack.c.l.b16 %v1940
        %v2015 = vunpack.c.h.b16 %v1940
        %v2016 = vunpack.c.l.b16 %v1941
        %v2017 = vunpack.c.h.b16 %v1941
        %v2018 = vunpack.c.l.b16 %v1942
        %v2019 = vunpack.c.h.b16 %v1942
        %v2020 = vunpack.c.l.b16 %v1943
        %v2021 = vunpack.c.h.b16 %v1943
        %v2022 = vunpack.c.l.b16 %v1944
        %v2023 = vunpack.c.h.b16 %v1944
        %v2024 = vunpack.c.l.b16 %v1945
        %v2025 = vunpack.c.h.b16 %v1945
        %v2026 = vunpack.c.l.b16 %v1946
        %v2027 = vunpack.c.h.b16 %v1946
        %v2028 = vunpack.c.l.b16 %v1947
        %v2029 = vunpack.c.h.b16 %v1947
        %v2030 = vunpack.c.l.b16 %v1948
        %v2031 = vunpack.c.h.b16 %v1948
        %v2032 = vunpack.c.l.b16 %v1949
        %v2033 = vunpack.c.h.b16 %v1949
        %v2034 = vunpack.c.l.b16 %v1950
        %v2035 = vunpack.c.h.b16 %v1950
        %v2036 = vunpack.c.l.b16 %v1951
        %v2037 = vunpack.c.h.b16 %v1951
        %v2038 = vunpack.c.l.b16 %v1952
        %v2039 = vunpack.c.h.b16 %v1952
        %v2040 = vunpack.c.l.b16 %v1953
        %v2041 = vunpack.c.h.b16 %v1953
        %v2042 = vunpack.c.l.b16 %v1954
        %v2043 = vunpack.c.h.b16 %v1954
        %v2044 = vunpack.c.l.b16 %v1955
        %v2045 = vunpack.c.h.b16 %v1955
        %v2046 = vunpack.c.l.b16 %v1956
        %v2047 = vunpack.c.h.b16 %v1956
        %v2048 = vunpack.c.l.b16 %v1957
        %v2049 = vunpack.c.h.b16 %v1957
        %v2050 = vunpack.c.l.b16 %v1958
        %v2051 = vunpack.c.h.b16 %v1958
        %v2052 = vunpack.c.l.b16 %v1959
        %v2053 = vunpack.c.h.b16 %v1959
        %v2054 = vunpack.c.l.b16 %v1960
        %v2055 = vunpack.c.h.b16 %v1960
        %v2056 = vunpack.c.l.b16 %v1961
        %v2057 = vunpack.c.h.b16 %v1961
        %v2058 = vunpack.c.l.b16 %v1962
        %v2059 = vunpack.c.h.b16 %v1962
        %v2060 = vunpack.c.l.b16 %v1963
        %v2061 = vunpack.c.h.b16 %v1963
        %v2062 = vunpack.c.l.b16 %v1964
        %v2063 = vunpack.c.h.b16 %v1964
        %v2064 = vunpack.c.l.b16 %v1965
        %v2065 = vunpack.c.h.b16 %v1965
        %v2066 = vunpack.c.l.b16 %v1966
        %v2067 = vunpack.c.h.b16 %v1966
        %v2068 = vunpack.c.l.b16 %v1967
        %v2069 = vunpack.c.h.b16 %v1967
        %v2070 = vunpack.c.l.b16 %v1968
        %v2071 = vunpack.c.h.b16 %v1968
        %v2072 = vunpack.c.l.b16 %v1969
        %v2073 = vunpack.c.h.b16 %v1969
        %v2074 = vunpack.c.l.b16 %v1970
        %v2075 = vunpack.c.h.b16 %v1970
        %v2076 = vunpack.c.l.b16 %v1971
        %v2077 = vunpack.c.h.b16 %v1971
        %v2078 = vpack.c.b16 %v2018, %v2014
        %v2079 = vpack.c.b16 %v2019, %v2015
        %v2080 = vpack.c.b16 %v2020, %v2016
        %v2081 = vpack.c.b16 %v2021, %v2017
        %v2082 = vpack.c.b16 %v2026, %v2022
        %v2083 = vpack.c.b16 %v2027, %v2023
        %v2084 = vpack.c.b16 %v2028, %v2024
        %v2085 = vpack.c.b16 %v2029, %v2025
        %v2086 = vpack.c.b16 %v2034, %v2030
        %v2087 = vpack.c.b16 %v2035, %v2031
        %v2088 = vpack.c.b16 %v2036, %v2032
        %v2089 = vpack.c.b16 %v2037, %v2033
        %v2090 = vpack.c.b16 %v2042, %v2038
        %v2091 = vpack.c.b16 %v2043, %v2039
        %v2092 = vpack.c.b16 %v2044, %v2040
        %v2093 = vpack.c.b16 %v2045, %v2041
        %v2094 = vpack.c.b16 %v2050, %v2046
        %v2095 = vpack.c.b16 %v2051, %v2047
        %v2096 = vpack.c.b16 %v2052, %v2048
        %v2097 = vpack.c.b16 %v2053, %v2049
        %v2098 = vpack.c.b16 %v2058, %v2054
        %v2099 = vpack.c.b16 %v2059, %v2055
        %v2100 = vpack.c.b16 %v2060, %v2056
        %v2101 = vpack.c.b16 %v2061, %v2057
        %v2102 = vpack.c.b16 %v2066, %v2062
        %v2103 = vpack.c.b16 %v2067, %v2063
        %v2104 = vpack.c.b16 %v2068, %v2064
        %v2105 = vpack.c.b16 %v2069, %v2065
        %v2106 = vpack.c.b16 %v2074, %v2070
        %v2107 = vpack.c.b16 %v2075, %v2071
        %v2108 = vpack.c.b16 %v2076, %v2072
        %v2109 = vpack.c.b16 %v2077, %v2073
        %2142 = vmatpush.bf16.msra.mxu0 %v2106
        %2143 = vmatpush.bf16.msra.mxu0 %v2102
        %2144 = vmatpush.bf16.msra.mxu0 %v2098
        %2145 = vmatpush.bf16.msra.mxu0 %v2094
        %2146 = vmatpush.bf16.msra.mxu0 %v2090
        %2147 = vmatpush.bf16.msra.mxu0 %v2086
        %2148 = vmatpush.bf16.msra.mxu0 %v2082
        %2149 = vmatpush.bf16.msra.mxu0 %v2078
        %2150 = vmatmul.bf16.gmra.mxu0 %v1939
        %v2151 = vpop.f32.mrf.mxu0
        %v2152 = vadd.f32 %v1974, %v2151
        %v2153 = vpop.f32.mrf.mxu0
        %v2154 = vadd.f32 %v1974, %v2153
        %2155 = vdwg.mxu0
        %2156 = vmatpush.bf16.msra.mxu0 %v2107
        %2157 = vmatpush.bf16.msra.mxu0 %v2103
        %2158 = vmatpush.bf16.msra.mxu0 %v2099
        %2159 = vmatpush.bf16.msra.mxu0 %v2095
        %2160 = vmatpush.bf16.msra.mxu0 %v2091
        %2161 = vmatpush.bf16.msra.mxu0 %v2087
        %2162 = vmatpush.bf16.msra.mxu0 %v2083
        %2163 = vmatpush.bf16.msra.mxu0 %v2079
        %2164 = vmatmul.bf16.gmra.mxu0 %v1939
        %v2165 = vpop.f32.mrf.mxu0
        %v2166 = vadd.f32 %v1975, %v2165
        %v2167 = vpop.f32.mrf.mxu0
        %v2168 = vadd.f32 %v1975, %v2167
        %2169 = vdwg.mxu0
        %2170 = vmatpush.bf16.msra.mxu0 %v2108
        %2171 = vmatpush.bf16.msra.mxu0 %v2104
        %2172 = vmatpush.bf16.msra.mxu0 %v2100
        %2173 = vmatpush.bf16.msra.mxu0 %v2096
        %2174 = vmatpush.bf16.msra.mxu0 %v2092
        %2175 = vmatpush.bf16.msra.mxu0 %v2088
        %2176 = vmatpush.bf16.msra.mxu0 %v2084
        %2177 = vmatpush.bf16.msra.mxu0 %v2080
        %2178 = vmatmul.bf16.gmra.mxu0 %v1939
        %v2179 = vpop.f32.mrf.mxu0
        %v2180 = vadd.f32 %v1976, %v2179
        %v2181 = vpop.f32.mrf.mxu0
        %v2182 = vadd.f32 %v1976, %v2181
        %2183 = vdwg.mxu0
        %2184 = vmatpush.bf16.msra.mxu0 %v2109
        %2185 = vmatpush.bf16.msra.mxu0 %v2105
        %2186 = vmatpush.bf16.msra.mxu0 %v2101
        %2187 = vmatpush.bf16.msra.mxu0 %v2097
        %2188 = vmatpush.bf16.msra.mxu0 %v2093
        %2189 = vmatpush.bf16.msra.mxu0 %v2089
        %2190 = vmatpush.bf16.msra.mxu0 %v2085
        %2191 = vmatpush.bf16.msra.mxu0 %v2081
        %2192 = vmatmul.bf16.gmra.mxu0 %v1939
        %v2193 = vpop.f32.mrf.mxu0
        %v2194 = vadd.f32 %v1977, %v2193
        %v2195 = vpop.f32.mrf.mxu0
        %v2196 = vadd.f32 %v1977, %v2195
        %2197 = vdwg.mxu0
        %v2198 = vmul.f32 %v2152, 0.5
        %v2199 = vmul.f32 %v2166, 0.5
        %v2200 = vmul.f32 %v2180, 0.5
        %v2201 = vmul.f32 %v2194, 0.5
        %v2202 = vmul.f32 %v2154, 0.5
        %v2203 = vmul.f32 %v2168, 0.5
        %v2204 = vmul.f32 %v2182, 0.5
        %v2205 = vmul.f32 %v2196, 0.5
        %v2206 = vmul.f32 %v2152, 0.044715
        %v2207 = vmul.f32 %v2166, 0.044715
        %v2208 = vmul.f32 %v2180, 0.044715
        %v2209 = vmul.f32 %v2194, 0.044715
        %v2210 = vmul.f32 %v2154, 0.044715
        %v2211 = vmul.f32 %v2168, 0.044715
        %v2212 = vmul.f32 %v2182, 0.044715
        %v2213 = vmul.f32 %v2196, 0.044715
        %v2214 = vmul.f32 %v2206, %v2152
        %v2215 = vmul.f32 %v2207, %v2166
        %v2216 = vmul.f32 %v2208, %v2180
        %v2217 = vmul.f32 %v2209, %v2194
        %v2218 = vmul.f32 %v2210, %v2154
        %v2219 = vmul.f32 %v2211, %v2168
        %v2220 = vmul.f32 %v2212, %v2182
        %v2221 = vmul.f32 %v2213, %v2196
        %v2222 = vmul.f32 %v2214, %v2152
        %v2223 = vmul.f32 %v2215, %v2166
        %v2224 = vmul.f32 %v2216, %v2180
        %v2225 = vmul.f32 %v2217, %v2194
        %v2226 = vmul.f32 %v2218, %v2154
        %v2227 = vmul.f32 %v2219, %v2168
        %v2228 = vmul.f32 %v2220, %v2182
        %v2229 = vmul.f32 %v2221, %v2196
        %v2230 = vadd.f32 %v2152, %v2222
        %v2231 = vadd.f32 %v2166, %v2223
        %v2232 = vadd.f32 %v2180, %v2224
        %v2233 = vadd.f32 %v2194, %v2225
        %v2234 = vadd.f32 %v2154, %v2226
        %v2235 = vadd.f32 %v2168, %v2227
        %v2236 = vadd.f32 %v2182, %v2228
        %v2237 = vadd.f32 %v2196, %v2229
        %v2238 = vmul.f32 %v2230, 0.7978846
        %v2239 = vmul.f32 %v2231, 0.7978846
        %v2240 = vmul.f32 %v2232, 0.7978846
        %v2241 = vmul.f32 %v2233, 0.7978846
        %v2242 = vmul.f32 %v2234, 0.7978846
        %v2243 = vmul.f32 %v2235, 0.7978846
        %v2244 = vmul.f32 %v2236, 0.7978846
        %v2245 = vmul.f32 %v2237, 0.7978846
        %v2246 = vtanh.pop %v2238
        %v2247 = vtanh.pop %v2239
        %v2248 = vtanh.pop %v2240
        %v2249 = vtanh.pop %v2241
        %v2250 = vtanh.pop %v2242
        %v2251 = vtanh.pop %v2243
        %v2252 = vtanh.pop %v2244
        %v2253 = vtanh.pop %v2245
        %v2254 = vadd.f32 %v2246, 1.0
        %v2255 = vadd.f32 %v2247, 1.0
        %v2256 = vadd.f32 %v2248, 1.0
        %v2257 = vadd.f32 %v2249, 1.0
        %v2258 = vadd.f32 %v2250, 1.0
        %v2259 = vadd.f32 %v2251, 1.0
        %v2260 = vadd.f32 %v2252, 1.0
        %v2261 = vadd.f32 %v2253, 1.0
        %v2262 = vmul.f32 %v2198, %v2254
        %v2263 = vmul.f32 %v2199, %v2255
        %v2264 = vmul.f32 %v2200, %v2256
        %v2265 = vmul.f32 %v2201, %v2257
        %v2266 = vmul.f32 %v2202, %v2258
        %v2267 = vmul.f32 %v2203, %v2259
        %v2268 = vmul.f32 %v2204, %v2260
        %v2269 = vmul.f32 %v2205, %v2261
        %v2270 = vpack.c.bf16 %v2266, %v2262
        %v2271 = vpack.c.bf16 %v2267, %v2263
        %v2272 = vpack.c.bf16 %v2268, %v2264
        %v2273 = vpack.c.bf16 %v2269, %v2265
        %v2274 = vld [vmem:[%s951] sm:$0xf]
        %v2275 = vld [vmem:[%s951 + $0x4] sm:$0xf]
        %v2276 = vld [vmem:[%s951 + $0x8] sm:$0xf]
        %v2277 = vld [vmem:[%s951 + $0xc] sm:$0xf]
        %v2278 = vld [vmem:[%s951 + $0x10] sm:$0xf]
        %v2279 = vld [vmem:[%s951 + $0x14] sm:$0xf]
        %v2280 = vld [vmem:[%s951 + $0x18] sm:$0xf]
        %v2281 = vld [vmem:[%s951 + $0x1c] sm:$0xf]
        %v2282 = vld [vmem:[%s951 + $0x20] sm:$0xf]
        %v2283 = vld [vmem:[%s951 + $0x24] sm:$0xf]
        %v2284 = vld [vmem:[%s951 + $0x28] sm:$0xf]
        %v2285 = vld [vmem:[%s951 + $0x2c] sm:$0xf]
        %v2286 = vld [vmem:[%s951 + $0x30] sm:$0xf]
        %v2287 = vld [vmem:[%s951 + $0x34] sm:$0xf]
        %v2288 = vld [vmem:[%s951 + $0x38] sm:$0xf]
        %v2289 = vld [vmem:[%s951 + $0x3c] sm:$0xf]
        %v2290 = vld [vmem:[%s951 + $0x40] sm:$0xf]
        %v2291 = vld [vmem:[%s951 + $0x44] sm:$0xf]
        %v2292 = vld [vmem:[%s951 + $0x48] sm:$0xf]
        %v2293 = vld [vmem:[%s951 + $0x4c] sm:$0xf]
        %v2294 = vld [vmem:[%s951 + $0x50] sm:$0xf]
        %v2295 = vld [vmem:[%s951 + $0x54] sm:$0xf]
        %v2296 = vld [vmem:[%s951 + $0x58] sm:$0xf]
        %v2297 = vld [vmem:[%s951 + $0x5c] sm:$0xf]
        %v2298 = vld [vmem:[%s951 + $0x60] sm:$0xf]
        %v2299 = vld [vmem:[%s951 + $0x64] sm:$0xf]
        %v2300 = vld [vmem:[%s951 + $0x68] sm:$0xf]
        %v2301 = vld [vmem:[%s951 + $0x6c] sm:$0xf]
        %v2302 = vld [vmem:[%s951 + $0x70] sm:$0xf]
        %v2303 = vld [vmem:[%s951 + $0x74] sm:$0xf]
        %v2304 = vld [vmem:[%s951 + $0x78] sm:$0xf]
        %v2305 = vld [vmem:[%s951 + $0x7c] sm:$0xf]
        %v2306 = vld [vmem:[%s951 + $0x80] sm:$0xf]
        %v2307 = vld [vmem:[%s951 + $0x84] sm:$0xf]
        %v2308 = vld [vmem:[%s951 + $0x88] sm:$0xf]
        %v2309 = vld [vmem:[%s951 + $0x8c] sm:$0xf]
        %v2310 = vld [vmem:[%s951 + $0x90] sm:$0xf]
        %v2311 = vld [vmem:[%s951 + $0x94] sm:$0xf]
        %v2312 = vld [vmem:[%s951 + $0x98] sm:$0xf]
        %v2313 = vld [vmem:[%s951 + $0x9c] sm:$0xf]
        %v2314 = vld [vmem:[%s951 + $0xa0] sm:$0xf]
        %v2315 = vld [vmem:[%s951 + $0xa4] sm:$0xf]
        %v2316 = vld [vmem:[%s951 + $0xa8] sm:$0xf]
        %v2317 = vld [vmem:[%s951 + $0xac] sm:$0xf]
        %v2318 = vld [vmem:[%s951 + $0xb0] sm:$0xf]
        %v2319 = vld [vmem:[%s951 + $0xb4] sm:$0xf]
        %v2320 = vld [vmem:[%s951 + $0xb8] sm:$0xf]
        %v2321 = vld [vmem:[%s951 + $0xbc] sm:$0xf]
        %v2322 = vld [vmem:[%s951 + $0xc0] sm:$0xf]
        %v2323 = vld [vmem:[%s951 + $0xc4] sm:$0xf]
        %v2324 = vld [vmem:[%s951 + $0xc8] sm:$0xf]
        %v2325 = vld [vmem:[%s951 + $0xcc] sm:$0xf]
        %v2326 = vld [vmem:[%s951 + $0xd0] sm:$0xf]
        %v2327 = vld [vmem:[%s951 + $0xd4] sm:$0xf]
        %v2328 = vld [vmem:[%s951 + $0xd8] sm:$0xf]
        %v2329 = vld [vmem:[%s951 + $0xdc] sm:$0xf]
        %v2330 = vld [vmem:[%s951 + $0xe0] sm:$0xf]
        %v2331 = vld [vmem:[%s951 + $0xe4] sm:$0xf]
        %v2332 = vld [vmem:[%s951 + $0xe8] sm:$0xf]
        %v2333 = vld [vmem:[%s951 + $0xec] sm:$0xf]
        %v2334 = vld [vmem:[%s951 + $0xf0] sm:$0xf]
        %v2335 = vld [vmem:[%s951 + $0xf4] sm:$0xf]
        %v2336 = vld [vmem:[%s951 + $0xf8] sm:$0xf]
        %v2337 = vld [vmem:[%s951 + $0xfc] sm:$0xf]
        %v2338 = vld [vmem:[%s1074] sm:$0x1]
        %v2340 = vperm.slane %v2338, 0
        %v2406 = vunpack.c.l.b16 %v2274
        %v2407 = vunpack.c.l.b16 %v2275
        %v2408 = vunpack.c.l.b16 %v2276
        %v2409 = vunpack.c.l.b16 %v2277
        %v2410 = vunpack.c.l.b16 %v2278
        %v2411 = vunpack.c.l.b16 %v2279
        %v2412 = vunpack.c.l.b16 %v2280
        %v2413 = vunpack.c.l.b16 %v2281
        %v2414 = vunpack.c.l.b16 %v2282
        %v2415 = vunpack.c.l.b16 %v2283
        %v2416 = vunpack.c.l.b16 %v2284
        %v2417 = vunpack.c.l.b16 %v2285
        %v2418 = vunpack.c.l.b16 %v2286
        %v2419 = vunpack.c.l.b16 %v2287
        %v2420 = vunpack.c.l.b16 %v2288
        %v2421 = vunpack.c.l.b16 %v2289
        %v2422 = vunpack.c.l.b16 %v2290
        %v2423 = vunpack.c.l.b16 %v2291
        %v2424 = vunpack.c.l.b16 %v2292
        %v2425 = vunpack.c.l.b16 %v2293
        %v2426 = vunpack.c.l.b16 %v2294
        %v2427 = vunpack.c.l.b16 %v2295
        %v2428 = vunpack.c.l.b16 %v2296
        %v2429 = vunpack.c.l.b16 %v2297
        %v2430 = vunpack.c.l.b16 %v2298
        %v2431 = vunpack.c.l.b16 %v2299
        %v2432 = vunpack.c.l.b16 %v2300
        %v2433 = vunpack.c.l.b16 %v2301
        %v2434 = vunpack.c.l.b16 %v2302
        %v2435 = vunpack.c.l.b16 %v2303
        %v2436 = vunpack.c.l.b16 %v2304
        %v2437 = vunpack.c.l.b16 %v2305
        %v2438 = vunpack.c.l.b16 %v2306
        %v2439 = vunpack.c.l.b16 %v2307
        %v2440 = vunpack.c.l.b16 %v2308
        %v2441 = vunpack.c.l.b16 %v2309
        %v2442 = vunpack.c.l.b16 %v2310
        %v2443 = vunpack.c.l.b16 %v2311
        %v2444 = vunpack.c.l.b16 %v2312
        %v2445 = vunpack.c.l.b16 %v2313
        %v2446 = vunpack.c.l.b16 %v2314
        %v2447 = vunpack.c.l.b16 %v2315
        %v2448 = vunpack.c.l.b16 %v2316
        %v2449 = vunpack.c.l.b16 %v2317
        %v2450 = vunpack.c.l.b16 %v2318
        %v2451 = vunpack.c.l.b16 %v2319
        %v2452 = vunpack.c.l.b16 %v2320
        %v2453 = vunpack.c.l.b16 %v2321
        %v2454 = vunpack.c.l.b16 %v2322
        %v2455 = vunpack.c.l.b16 %v2323
        %v2456 = vunpack.c.l.b16 %v2324
        %v2457 = vunpack.c.l.b16 %v2325
        %v2458 = vunpack.c.l.b16 %v2326
        %v2459 = vunpack.c.l.b16 %v2327
        %v2460 = vunpack.c.l.b16 %v2328
        %v2461 = vunpack.c.l.b16 %v2329
        %v2462 = vunpack.c.l.b16 %v2330
        %v2463 = vunpack.c.l.b16 %v2331
        %v2464 = vunpack.c.l.b16 %v2332
        %v2465 = vunpack.c.l.b16 %v2333
        %v2466 = vunpack.c.l.b16 %v2334
        %v2467 = vunpack.c.l.b16 %v2335
        %v2468 = vunpack.c.l.b16 %v2336
        %v2469 = vunpack.c.l.b16 %v2337
        %v2470 = vpack.c.b16 %v2407, %v2406
        %v2471 = vpack.c.b16 %v2409, %v2408
        %v2472 = vpack.c.b16 %v2411, %v2410
        %v2473 = vpack.c.b16 %v2413, %v2412
        %v2474 = vpack.c.b16 %v2415, %v2414
        %v2475 = vpack.c.b16 %v2417, %v2416
        %v2476 = vpack.c.b16 %v2419, %v2418
        %v2477 = vpack.c.b16 %v2421, %v2420
        %v2478 = vpack.c.b16 %v2423, %v2422
        %v2479 = vpack.c.b16 %v2425, %v2424
        %v2480 = vpack.c.b16 %v2427, %v2426
        %v2481 = vpack.c.b16 %v2429, %v2428
        %v2482 = vpack.c.b16 %v2431, %v2430
        %v2483 = vpack.c.b16 %v2433, %v2432
        %v2484 = vpack.c.b16 %v2435, %v2434
        %v2485 = vpack.c.b16 %v2437, %v2436
        %v2486 = vpack.c.b16 %v2439, %v2438
        %v2487 = vpack.c.b16 %v2441, %v2440
        %v2488 = vpack.c.b16 %v2443, %v2442
        %v2489 = vpack.c.b16 %v2445, %v2444
        %v2490 = vpack.c.b16 %v2447, %v2446
        %v2491 = vpack.c.b16 %v2449, %v2448
        %v2492 = vpack.c.b16 %v2451, %v2450
        %v2493 = vpack.c.b16 %v2453, %v2452
        %v2494 = vpack.c.b16 %v2455, %v2454
        %v2495 = vpack.c.b16 %v2457, %v2456
        %v2496 = vpack.c.b16 %v2459, %v2458
        %v2497 = vpack.c.b16 %v2461, %v2460
        %v2498 = vpack.c.b16 %v2463, %v2462
        %v2499 = vpack.c.b16 %v2465, %v2464
        %v2500 = vpack.c.b16 %v2467, %v2466
        %v2501 = vpack.c.b16 %v2469, %v2468
        %2534 = vmatpush.bf16.msra.mxu0 %v2477
        %2535 = vmatpush.bf16.msra.mxu0 %v2476
        %2536 = vmatpush.bf16.msra.mxu0 %v2475
        %2537 = vmatpush.bf16.msra.mxu0 %v2474
        %2538 = vmatpush.bf16.msra.mxu0 %v2473
        %2539 = vmatpush.bf16.msra.mxu0 %v2472
        %2540 = vmatpush.bf16.msra.mxu0 %v2471
        %2541 = vmatpush.bf16.msra.mxu0 %v2470
        %2542 = vmatmul.bf16.gmra.mxu0 %v2270
        %v2543 = vpop.f32.mrf.mxu0
        %v2544 = vadd.f32 %v2340, %v2543
        %v2545 = vpop.f32.mrf.mxu0
        %v2546 = vadd.f32 %v2340, %v2545
        %2547 = vdwg.mxu0
        %2548 = vmatpush.bf16.msra.mxu0 %v2485
        %2549 = vmatpush.bf16.msra.mxu0 %v2484
        %2550 = vmatpush.bf16.msra.mxu0 %v2483
        %2551 = vmatpush.bf16.msra.mxu0 %v2482
        %2552 = vmatpush.bf16.msra.mxu0 %v2481
        %2553 = vmatpush.bf16.msra.mxu0 %v2480
        %2554 = vmatpush.bf16.msra.mxu0 %v2479
        %2555 = vmatpush.bf16.msra.mxu0 %v2478
        %2556 = vmatmul.bf16.gmra.mxu0 %v2271
        %v2557 = vpop.f32.mrf.mxu0
        %v2558 = vadd.f32 %v2544, %v2557
        %v2559 = vpop.f32.mrf.mxu0
        %v2560 = vadd.f32 %v2546, %v2559
        %2561 = vdwg.mxu0
        %2562 = vmatpush.bf16.msra.mxu0 %v2493
        %2563 = vmatpush.bf16.msra.mxu0 %v2492
        %2564 = vmatpush.bf16.msra.mxu0 %v2491
        %2565 = vmatpush.bf16.msra.mxu0 %v2490
        %2566 = vmatpush.bf16.msra.mxu0 %v2489
        %2567 = vmatpush.bf16.msra.mxu0 %v2488
        %2568 = vmatpush.bf16.msra.mxu0 %v2487
        %2569 = vmatpush.bf16.msra.mxu0 %v2486
        %2570 = vmatmul.bf16.gmra.mxu0 %v2272
        %v2571 = vpop.f32.mrf.mxu0
        %v2572 = vadd.f32 %v2558, %v2571
        %v2573 = vpop.f32.mrf.mxu0
        %v2574 = vadd.f32 %v2560, %v2573
        %2575 = vdwg.mxu0
        %2576 = vmatpush.bf16.msra.mxu0 %v2501
        %2577 = vmatpush.bf16.msra.mxu0 %v2500
        %2578 = vmatpush.bf16.msra.mxu0 %v2499
        %2579 = vmatpush.bf16.msra.mxu0 %v2498
        %2580 = vmatpush.bf16.msra.mxu0 %v2497
        %2581 = vmatpush.bf16.msra.mxu0 %v2496
        %2582 = vmatpush.bf16.msra.mxu0 %v2495
        %2583 = vmatpush.bf16.msra.mxu0 %v2494
        %2584 = vmatmul.bf16.gmra.mxu0 %v2273
        %v2585 = vpop.f32.mrf.mxu0
        %v2586 = vadd.f32 %v2572, %v2585
        %v2587 = vpop.f32.mrf.mxu0
        %v2588 = vadd.f32 %v2574, %v2587
        %2589 = vdwg.mxu0
        %v2590 = vadd.f32 %v1885, %v2586
        %v2591 = vadd.f32 %v1886, %v2588
        %2592 = vst [vmem:[#allocation2] sm:$0xff] %v2590
        %2593 = vst [vmem:[#allocation2 + $0x8] sm:$0xff] %v2591
        %p2594 = scmp.eq.s32.totalorder %s57, 1
        // Predicated region
        $region153: #{tpu_custom_call.1} parent=95 // pred_check
          %p2595 = pneg %p2594
        $region154: #{tpu_custom_call.1} parent=95 // pred_check_branch
          %2597 = sbr.rel (%p2595) target = $region156
        $region155: #{tpu_custom_call.1} parent=95 // pred_region
          %v2598 = vld [vmem:[%s17] sm:$0x1]
          %v2599 = vld [vmem:[%s18] sm:$0x1]
          %2600 = vadd.xlane.f32.xlu0 %v2590
          %v2601 = vpop.xlane.xlu0 %2600
          %v2602 = vmul.f32 %v2601, %v1154
          %v2603 = vsub.f32 %v2590, %v2602
          %v2604 = vmul.f32 %v2603, %v2603
          %2605 = vadd.xlane.f32.xlu0 %v2604
          %v2606 = vpop.xlane.xlu0 %2605
          %v2607 = vmul.f32 %v2606, %v1154
          %v2608 = vadd.f32 %v2607, 1e-06
          %v2609 = vrsqrt.pop %v2608
          %v2610 = vmul.f32 %v2609, %v2608
          %v2611 = vmul.f32 %v2610, %v2609
          %v2612 = vmul.f32 0.5, %v2611
          %v2613 = vsub.f32 1.5, %v2612
          %v2614 = vmul.f32 %v2609, %v2613
          %vm2615 = vweird.f32 %v2608
          %vm2616 = vweird.f32 %v2609
          %vm2617 = vmor %vm2615, %vm2616
          %v2618 = vsel %vm2617, %v2609, %v2614
          %v2619 = vmul.f32 %v2603, %v2618
          %v2621 = vperm.slane %v2598, 0
          %v2623 = vmul.f32 %v2619, %v2621
          %v2625 = vperm.slane %v2599, 0
          %v2627 = vadd.f32 %v2623, %v2625
          %2628 = vst [vmem:[%s1061] sm:$0xff] %v2627
        $region156: #{tpu_custom_call.1} parent=95 // pred_fallthru
          _
        %s2629 = sand.u32 %s541, 1
        %s2630 = scalar_lea.sflag [#allocation5], %s2629
        %s2631 = sand.u32 %s541, 1
        %s2632 = smul.addr %s2631, 8
        %s2633 = scalar_lea.vmem [#allocation24], %s2632
        // Predicated region
        $region157: #{tpu_custom_call.1} parent=95 // pred_check
          %p2634 = pneg %p551
        $region158: #{tpu_custom_call.1} parent=95 // pred_check_branch
          %2636 = sbr.rel (%p2634) target = $region160
        $region159: #{tpu_custom_call.1} parent=95 // pred_region
          %2638 = vsyncadd %s2630, 0
          %s2639 = smul.addr %s56, 8
          %s2640 = scalar_lea.hbm %s19, %s2639
          %s2642 = sshll.u32 %s2633, 4
          %s2643 = int_to_ptr.vmem [resolvable:$true] %s2642
          %s2644 = sshll.u32 %s2640, 4
          %s2645 = int_to_ptr.hbm [resolvable:$true] %s2644
          %2647 = dma.vmem_to_hbm [thread:$0]  %s2643, 128, %s2645, %s2630
        $region160: #{tpu_custom_call.1} parent=95 // pred_fallthru
          _
      $region96: #{tpu_custom_call.1} parent=5 // pred_fallthru
        _
      %p2648 = scmp.le.s32.totalorder 2, %s47
      // Predicated region
      $region161: #{tpu_custom_call.1} parent=5 // pred_check
        %p2649 = pneg %p2648
      $region162: #{tpu_custom_call.1} parent=5 // pred_check_branch
        %2651 = sbr.rel (%p2649) target = $region164
      $region163: #{tpu_custom_call.1} parent=5 // pred_region
        %s2652 = ssub.s32 %s47, 2
        // Predicated region
        $region165: #{tpu_custom_call.1} parent=163 // pred_check
          %p2653 = pneg %p557
        $region166: #{tpu_custom_call.1} parent=163 // pred_check_branch
          %2655 = sbr.rel (%p2653) target = $region168
        $region167: #{tpu_custom_call.1} parent=163 // pred_region
          %s2656 = sand.u32 %s542, 1
          %s2657 = scalar_lea.sflag [#allocation5], %s2656
          %s2658 = sand.u32 %s542, 1
          %s2659 = smul.addr %s2658, 8
          %s2660 = scalar_lea.vmem [#allocation24], %s2659
          %2662 = dma.done %s2657, 128
        $region168: #{tpu_custom_call.1} parent=163 // pred_fallthru
          _
      $region164: #{tpu_custom_call.1} parent=5 // pred_fallthru
        _
    $region6: #{tpu_custom_call.1} parent=1 // loop_footer
      %s51 = sadd.s32 1, %s47
    $region7: #{tpu_custom_call.1} parent=1 // loop_footer_branch
      %46 = sbr.rel target = $region3
    $region8: #{tpu_custom_call.1} parent=1 // loop_exit
      _
    %2663 = vsyncpa [#allocation4], 1
    %s2664 = scalar_lea.sflag [#allocation4], 1
    %2665 = vsyncpa %s2664, 1
    %2666 = vsyncpa [#allocation7], 1
    %s2667 = scalar_lea.sflag [#allocation7], 1
    %2668 = vsyncpa %s2667, 1
    %2669 = vsyncpa [#allocation10], 1
    %2670 = vsyncpa [#allocation13], 1
    %s2671 = scalar_lea.sflag [#allocation13], 1
    %2672 = vsyncpa %s2671, 1
    %2673 = vsyncpa [#allocation16], 1
    %s2674 = scalar_lea.sflag [#allocation16], 1
    %2675 = vsyncpa %s2674, 1
    %2676 = vsyncpa [#allocation19], 1
    %s2677 = scalar_lea.sflag [#allocation19], 1
    %2678 = vsyncpa %s2677, 1
    %2679 = vsyncpa [#allocation22], 1
    %s2680 = scalar_lea.sflag [#allocation22], 1
    %2681 = vsyncpa %s2680, 1
    %2682 = vsyncpa [#allocation5], 1
    %s2683 = scalar_lea.sflag [#allocation5], 1
    %2684 = vsyncpa %s2683, 1

</llo_original>
